<compile_context>
chip_gen: v7x
topology: tpu7x:2x2x1
jax: 0.10.0
libtpu: 0.0.40
codegen_flags: <defaults>
</compile_context>

<pallas_src>
import functools
import math

import jax
import jax.numpy as jnp
from jax.experimental import pallas as pl
from jax.experimental.pallas import tpu as pltpu


# ------------------------------ small helpers -------------------------------

def _leaky_relu(x, slope=0.01):
    # torch.nn.LeakyReLU default negative_slope = 0.01
    return jnp.where(x >= 0, x, slope * x)


# --------------------------------- kernel -----------------------------------

def fused_double_critic_kernel(x_ref, wa_ref, w0_ref, b0_ref, w1_ref, b1_ref,
                               fc1w_ref, fc1b_ref, fc2w_ref, fc2b_ref,
                               fc3w_ref, fc3b_ref, fc4w_ref, fc4b_ref,
                               fc5w_ref, fc5b_ref,
                               out_ref, gi0_scr, *, S, Bp, H, F):
    """Both critics in one body; hidden state packed as [c0 | c1] along lanes."""
    f32 = jnp.float32
    H2, H4, H6, H8 = 2 * H, 4 * H, 6 * H, 8 * H

    # Hoisted layer-0 input projection for BOTH critics & all timesteps:
    # one (S*Bp, F) x (F, 6H) matmul.  Column layout: [r | z | n], each block
    # being [critic0(H) | critic1(H)].  b0 row0 already folds b_ih0 (all gates)
    # plus b_hh0 for r/z; stage the result in VMEM scratch (not vregs).
    gi0_scr[...] = (jnp.dot(x_ref[...], w0_ref[0:F, :],
                            preferred_element_type=f32) + b0_ref[0:1, :])

    h0 = jnp.zeros((Bp, H2), f32)        # [h0_c0 | h0_c1]
    h1 = jnp.zeros((Bp, H2), f32)        # [h1_c0 | h1_c1]

    # Fully unrolled recurrence (S static): all slices are compile-time static
    # and sublane-aligned (Bp = 8).  2 MXU pushes per step for both critics.
    for t in range(S):
        lo = t * Bp
        gi = gi0_scr[lo:lo + Bp, :]                       # (Bp, 6H)

        # ---- layer 0: one block-diagonal hidden matmul (all gates, both critics)
        gh = (jnp.dot(h0, w0_ref[F:F + H2, :], preferred_element_type=f32)
              + b0_ref[1:2, :])                            # + b_hh0_n (zeros in r/z)
        s = gi + gh
        r = jax.nn.sigmoid(s[:, 0:H2])
        z = jax.nn.sigmoid(s[:, H2:H4])
        n = jnp.tanh(gi[:, H4:H6] + r * gh[:, H4:H6])
        h0 = (1.0 - z) * n + z * h0

        # ---- layer 1: ONE fused matmul over [h0_new | h1] (K = 4H = 128)
        #      output columns: [r | z | i_n | h_n], each 2H wide
        a = (jnp.dot(jnp.concatenate([h0, h1], axis=-1), w1_ref[...],
                     preferred_element_type=f32) + b1_ref[...])   # (Bp, 8H)
        r1 = jax.nn.sigmoid(a[:, 0:H2])
        z1 = jax.nn.sigmoid(a[:, H2:H4])
        n1 = jnp.tanh(a[:, H4:H6] + r1 * a[:, H6:H8])
        h1 = (1.0 - z1) * n1 + z1 * h1

    # ---- head: both critics block-packed along output lanes --------------
    # fc1 input layout: [lrelu(h1_c0) | lrelu(h1_c1) | w | action]  (Bp, 4H)
    y = jnp.concatenate([_leaky_relu(h1), wa_ref[...]], axis=-1)
    y = _leaky_relu(jnp.dot(y, fc1w_ref[...], preferred_element_type=f32) + fc1b_ref[...])
    y = _leaky_relu(jnp.dot(y, fc2w_ref[...], preferred_element_type=f32) + fc2b_ref[...])
    y = _leaky_relu(jnp.dot(y, fc3w_ref[...], preferred_element_type=f32) + fc3b_ref[...])
    y = _leaky_relu(jnp.dot(y, fc4w_ref[...], preferred_element_type=f32) + fc4b_ref[...])

    # fc5 (16 -> 1) per critic: VPU multiply + XLU lane reduction, no MXU push.
    n4 = fc5w_ref.shape[-1] // 2                          # = 16
    yw = y * fc5w_ref[...]                                # (Bp, 2*n4)
    q0 = jnp.sum(yw[:, 0:n4], axis=-1, keepdims=True)
    q1 = jnp.sum(yw[:, n4:2 * n4], axis=-1, keepdims=True)
    out_ref[...] = jnp.concatenate([q0, q1], axis=-1) + fc5b_ref[...]


# ------------------------- parameter layout packing --------------------------

def pack_double_critic_params(p_q1, p_q2, H, F):
    """PyTorch-layout params of both critics -> fused block-diagonal slabs."""
    (wih0_1, whh0_1, bih0_1, bhh0_1, wih1_1, whh1_1, bih1_1, bhh1_1,
     fc1w_1, fc1b_1, fc2w_1, fc2b_1, fc3w_1, fc3b_1, fc4w_1, fc4b_1,
     fc5w_1, fc5b_1) = p_q1
    (wih0_2, whh0_2, bih0_2, bhh0_2, wih1_2, whh1_2, bih1_2, bhh1_2,
     fc1w_2, fc1b_2, fc2w_2, fc2b_2, fc3w_2, fc3b_2, fc4w_2, fc4b_2,
     fc5w_2, fc5b_2) = p_q2

    f32 = jnp.float32

    def g(w, i):                       # gate block i of (3H, fan) -> (fan, H)
        return w[i * H:(i + 1) * H, :].T.astype(f32)

    def gb(b, i):                      # gate block i of (3H,) -> (H,)
        return b[i * H:(i + 1) * H].astype(f32)

    def blkdiag(a, b):                 # (m1,n1),(m2,n2) -> (m1+m2, n1+n2)
        m1, n1 = a.shape
        m2, n2 = b.shape
        top = jnp.concatenate([a, jnp.zeros((m1, n2), f32)], axis=1)
        bot = jnp.concatenate([jnp.zeros((m2, n1), f32), b], axis=1)
        return jnp.concatenate([top, bot], axis=0)

    # ---- layer 0 ----
    # shared-input projection, columns [r_c0 r_c1 | z_c0 z_c1 | n_c0 n_c1]
    wih0 = jnp.concatenate([g(wih0_1, 0), g(wih0_2, 0),
                            g(wih0_1, 1), g(wih0_2, 1),
                            g(wih0_1, 2), g(wih0_2, 2)], axis=1)      # (F, 6H)
    # hidden projection: per-gate block-diagonal, rows = [h_c0 | h_c1]
    whh0 = jnp.concatenate([blkdiag(g(whh0_1, 0), g(whh0_2, 0)),
                            blkdiag(g(whh0_1, 1), g(whh0_2, 1)),
                            blkdiag(g(whh0_1, 2), g(whh0_2, 2))], axis=1)  # (2H, 6H)
    w0 = jnp.concatenate([wih0, whh0], axis=0)                        # (F+2H, 6H)

    bi0 = jnp.concatenate([gb(bih0_1, 0) + gb(bhh0_1, 0), gb(bih0_2, 0) + gb(bhh0_2, 0),
                           gb(bih0_1, 1) + gb(bhh0_1, 1), gb(bih0_2, 1) + gb(bhh0_2, 1),
                           gb(bih0_1, 2), gb(bih0_2, 2)])             # (6H,)
    bh0n = jnp.concatenate([jnp.zeros((4 * H,), f32),
                            gb(bhh0_1, 2), gb(bhh0_2, 2)])            # (6H,)
    b0 = jnp.stack([bi0, bh0n])                                       # (2, 6H)

    # ---- layer 1 (fused input+hidden), columns [r | z | i_n | h_n] (2H each)
    z2h = jnp.zeros((2 * H, 2 * H), f32)
    r_cols = jnp.concatenate([blkdiag(g(wih1_1, 0), g(wih1_2, 0)),
                              blkdiag(g(whh1_1, 0), g(whh1_2, 0))], axis=0)
    z_cols = jnp.concatenate([blkdiag(g(wih1_1, 1), g(wih1_2, 1)),
                              blkdiag(g(whh1_1, 1), g(whh1_2, 1))], axis=0)
    in_cols = jnp.concatenate([blkdiag(g(wih1_1, 2), g(wih1_2, 2)), z2h], axis=0)
    hn_cols = jnp.concatenate([z2h, blkdiag(g(whh1_1, 2), g(whh1_2, 2))], axis=0)
    w1 = jnp.concatenate([r_cols, z_cols, in_cols, hn_cols], axis=1)  # (4H, 8H)

    b1 = jnp.concatenate([gb(bih1_1, 0) + gb(bhh1_1, 0), gb(bih1_2, 0) + gb(bhh1_2, 0),
                          gb(bih1_1, 1) + gb(bhh1_1, 1), gb(bih1_2, 1) + gb(bhh1_2, 1),
                          gb(bih1_1, 2), gb(bih1_2, 2),
                          gb(bhh1_1, 2), gb(bhh1_2, 2)])[None, :]     # (1, 8H)

    # ---- head: fc1 input layout [h1_c0 | h1_c1 | w | action], output [c0 | c1]
    z128 = jnp.zeros((H, fc1w_1.shape[0]), f32)
    fc1 = jnp.concatenate([
        jnp.concatenate([fc1w_1[:, 0:H].T.astype(f32), z128], axis=1),
        jnp.concatenate([z128, fc1w_2[:, 0:H].T.astype(f32)], axis=1),
        jnp.concatenate([fc1w_1[:, H:2 * H].T.astype(f32),
                         fc1w_2[:, H:2 * H].T.astype(f32)], axis=1),
        jnp.concatenate([fc1w_1[:, 2 * H:3 * H].T.astype(f32),
                         fc1w_2[:, 2 * H:3 * H].T.astype(f32)], axis=1),
    ], axis=0)                                                        # (4H, 256)
    fc1b = jnp.concatenate([fc1b_1, fc1b_2]).astype(f32)[None, :]     # (1, 256)

    fc2 = blkdiag(fc2w_1.T.astype(f32), fc2w_2.T.astype(f32))         # (256, 128)
    fc2b = jnp.concatenate([fc2b_1, fc2b_2]).astype(f32)[None, :]
    fc3 = blkdiag(fc3w_1.T.astype(f32), fc3w_2.T.astype(f32))         # (128, 64)
    fc3b = jnp.concatenate([fc3b_1, fc3b_2]).astype(f32)[None, :]
    fc4 = blkdiag(fc4w_1.T.astype(f32), fc4w_2.T.astype(f32))         # (64, 32)
    fc4b = jnp.concatenate([fc4b_1, fc4b_2]).astype(f32)[None, :]

    fc5w = jnp.concatenate([fc5w_1.reshape(-1), fc5w_2.reshape(-1)]).astype(f32)[None, :]  # (1, 32)
    fc5b = jnp.concatenate([fc5b_1, fc5b_2]).astype(f32)[None, :]     # (1, 2)

    return (w0, b0, w1, b1, fc1, fc1b, fc2, fc2b, fc3, fc3b, fc4, fc4b, fc5w, fc5b)


# ------------------------------ python wrapper -------------------------------

@functools.partial(jax.jit, static_argnums=(5,))
def double_gru_critic_forward(x, w, action, torch_params_q1, torch_params_q2,
                              hidden_size):
    """DoubleGRUCritic forward.  x: (B,S,d1,d2) or (S,d1,d2).  Returns (q1, q2)."""
    if x.ndim == 3:                      # mirrors the x[None, ...] branch
        x = x[None]
        w = w[None]
        action = action[None]
    B, S = x.shape[0], x.shape[1]
    F = x.shape[2] * x.shape[3]
    H = hidden_size
    Bp = max(8, ((B + 7) // 8) * 8)      # pad batch to a full sublane tile

    # Time-major (S*Bp, F): each timestep's Bp rows are sublane-tile aligned.
    x_tm = jnp.transpose(x.reshape(B, S, F).astype(jnp.float32), (1, 0, 2))
    x_tm = jnp.pad(x_tm, ((0, 0), (0, Bp - B), (0, 0))).reshape(S * Bp, F)
    wa = jnp.pad(jnp.concatenate([w, action], axis=-1).astype(jnp.float32),
                 ((0, Bp - B), (0, 0)))                              # (Bp, 2H)

    packed = pack_double_critic_params(torch_params_q1, torch_params_q2, H, F)
    inputs = (x_tm, wa) + packed

    vmem = pl.BlockSpec(memory_space=pltpu.MemorySpace.VMEM)   # whole array in VMEM
    kernel = functools.partial(fused_double_critic_kernel, S=S, Bp=Bp, H=H, F=F)
    # NOTE: v7x could alternatively split the critics across its 2 TensorCores;
    # for this latency-bound few-us kernel the fused single-TC variant is used.
    out = pl.pallas_call(
        kernel,
        out_shape=jax.ShapeDtypeStruct((Bp, 2), jnp.float32),
        in_specs=[vmem] * len(inputs),
        out_specs=vmem,
        scratch_shapes=[pltpu.VMEM((S * Bp, 6 * H), jnp.float32)],
    )(*inputs)

    return out[:B, 0:1], out[:B, 1:2]


# ----------------------- PyTorch-layout parameter init -----------------------

def init_torch_gru_critic_params(key, input_size, hidden_size):
    """Synthetic params in PyTorch layout with PyTorch-default-like uniform init."""
    H = hidden_size
    ks = jax.random.split(key, 18)

    def u(k, shape, bound):
        return jax.random.uniform(k, shape, jnp.float32, -bound, bound)

    gb = 1.0 / math.sqrt(H)
    wih0 = u(ks[0], (3 * H, input_size), gb)
    whh0 = u(ks[1], (3 * H, H), gb)
    bih0 = u(ks[2], (3 * H,), gb)
    bhh0 = u(ks[3], (3 * H,), gb)
    wih1 = u(ks[4], (3 * H, H), gb)
    whh1 = u(ks[5], (3 * H, H), gb)
    bih1 = u(ks[6], (3 * H,), gb)
    bhh1 = u(ks[7], (3 * H,), gb)

    def lin(kw, kb, fan_in, fan_out):
        b = 1.0 / math.sqrt(fan_in)
        return u(kw, (fan_out, fan_in), b), u(kb, (fan_out,), b)

    fc1w, fc1b = lin(ks[8], ks[9], 3 * H, 128)
    fc2w, fc2b = lin(ks[10], ks[11], 128, 64)
    fc3w, fc3b = lin(ks[12], ks[13], 64, 32)
    fc4w, fc4b = lin(ks[14], ks[15], 32, 16)
    fc5w, fc5b = lin(ks[16], ks[17], 16, 1)

    return (wih0, whh0, bih0, bhh0, wih1, whh1, bih1, bhh1,
            fc1w, fc1b, fc2w, fc2b, fc3w, fc3b, fc4w, fc4b, fc5w, fc5b)


# ------------------------------ pure-JAX reference ----------------------------

def _gru_critic_ref(x, w, action, torch_params, H):
    (wih0, whh0, bih0, bhh0, wih1, whh1, bih1, bhh1,
     fc1w, fc1b, fc2w, fc2b, fc3w, fc3b, fc4w, fc4b, fc5w, fc5b) = torch_params
    B, S = x.shape[0], x.shape[1]
    xf = x.reshape(B, S, -1)

    def cell(x_t, h, w_ih, w_hh, b_ih, b_hh):
        gi = x_t @ w_ih.T + b_ih
        gh = h @ w_hh.T + b_hh
        i_r, i_z, i_n = gi[:, :H], gi[:, H:2 * H], gi[:, 2 * H:]
        h_r, h_z, h_n = gh[:, :H], gh[:, H:2 * H], gh[:, 2 * H:]
        r = jax.nn.sigmoid(i_r + h_r)
        z = jax.nn.sigmoid(i_z + h_z)
        n = jnp.tanh(i_n + r * h_n)
        return (1.0 - z) * n + z * h

    h0 = jnp.zeros((B, H), jnp.float32)
    h1 = jnp.zeros((B, H), jnp.float32)
    for t in range(S):
        h0 = cell(xf[:, t], h0, wih0, whh0, bih0, bhh0)
        h1 = cell(h0, h1, wih1, whh1, bih1, bhh1)

    y = jnp.concatenate([_leaky_relu(h1), w, action], axis=-1)
    y = _leaky_relu(y @ fc1w.T + fc1b)
    y = _leaky_relu(y @ fc2w.T + fc2b)
    y = _leaky_relu(y @ fc3w.T + fc3b)
    y = _leaky_relu(y @ fc4w.T + fc4b)
    return y @ fc5w.T + fc5b


# ----------------------------------- main ------------------------------------

if __name__ == "__main__":
    B, S, D1, D2 = 2, 8, 4, 4          # input_size = D1*D2 = 16
    INPUT_SIZE = D1 * D2
    HIDDEN = 32                         # GRU output_size (= w / action size)

    root = jax.random.PRNGKey(0)
    kx, kw, ka, kq1, kq2 = jax.random.split(root, 5)

    x = jax.random.normal(kx, (B, S, D1, D2), jnp.float32)
    w = jax.random.normal(kw, (B, HIDDEN), jnp.float32)
    action = jax.random.normal(ka, (B, HIDDEN), jnp.float32)

    params_q1 = init_torch_gru_critic_params(kq1, INPUT_SIZE, HIDDEN)
    params_q2 = init_torch_gru_critic_params(kq2, INPUT_SIZE, HIDDEN)

    q1, q2 = double_gru_critic_forward(x, w, action, params_q1, params_q2, HIDDEN)
    jax.block_until_ready((q1, q2))

    # correctness check against a pure-JAX reference with PyTorch GRU semantics
    q1_ref = _gru_critic_ref(x, w, action, params_q1, HIDDEN)
    q2_ref = _gru_critic_ref(x, w, action, params_q2, HIDDEN)
    assert q1.shape == (B, 1) and q2.shape == (B, 1)
    assert jnp.allclose(q1, q1_ref, rtol=1e-4, atol=1e-4)
    assert jnp.allclose(q2, q2_ref, rtol=1e-4, atol=1e-4)

    print("KERNEL_OK")
</pallas_src>

<mosaic_0001>
module attributes {stable_mosaic.version = 11 : i64} {
  func.func @fused_double_critic_kernel(%arg0: memref<64x16xf32, #tpu.memory_space<vmem>>, %arg1: memref<8x64xf32, #tpu.memory_space<vmem>>, %arg2: memref<80x192xf32, #tpu.memory_space<vmem>>, %arg3: memref<2x192xf32, #tpu.memory_space<vmem>>, %arg4: memref<128x256xf32, #tpu.memory_space<vmem>>, %arg5: memref<1x256xf32, #tpu.memory_space<vmem>>, %arg6: memref<128x256xf32, #tpu.memory_space<vmem>>, %arg7: memref<1x256xf32, #tpu.memory_space<vmem>>, %arg8: memref<256x128xf32, #tpu.memory_space<vmem>>, %arg9: memref<1x128xf32, #tpu.memory_space<vmem>>, %arg10: memref<128x64xf32, #tpu.memory_space<vmem>>, %arg11: memref<1x64xf32, #tpu.memory_space<vmem>>, %arg12: memref<64x32xf32, #tpu.memory_space<vmem>>, %arg13: memref<1x32xf32, #tpu.memory_space<vmem>>, %arg14: memref<1x32xf32, #tpu.memory_space<vmem>>, %arg15: memref<1x2xf32, #tpu.memory_space<vmem>>, %arg16: memref<8x2xf32, #tpu.memory_space<vmem>>, %arg17: memref<64x192xf32, #tpu.memory_space<vmem>>) attributes {dimension_semantics = [], scalar_prefetch = 0 : i64, scratch_operands = 1 : i64, tpu.core_type = #tpu.core_type<tc>} {
    %c0 = arith.constant 0 : index
    %c0_0 = arith.constant 0 : index
    %0 = vector.load %arg0[%c0, %c0_0] : memref<64x16xf32, #tpu.memory_space<vmem>>, vector<64x16xf32>
    %c0_1 = arith.constant 0 : index
    %c0_2 = arith.constant 0 : index
    %1 = vector.load %arg2[%c0_1, %c0_2] : memref<80x192xf32, #tpu.memory_space<vmem>>, vector<16x192xf32>
    %cst = arith.constant dense<0.000000e+00> : vector<64x192xf32>
    %2 = tpu.matmul %0, %1, %cst {dimension_numbers = #tpu.dot_dimension_numbers<[1], [0], [0], [1], [0, 0, 1, 1], [], []>} : vector<64x16xf32>, vector<16x192xf32>, vector<64x192xf32> -> vector<64x192xf32>
    %c0_3 = arith.constant 0 : index
    %c0_4 = arith.constant 0 : index
    %3 = vector.load %arg3[%c0_3, %c0_4] : memref<2x192xf32, #tpu.memory_space<vmem>>, vector<1x192xf32>
    %4 = vector.broadcast %3 : vector<1x192xf32> to vector<64x192xf32>
    %5 = arith.addf %2, %4 : vector<64x192xf32>
    %c0_5 = arith.constant 0 : index
    %c0_6 = arith.constant 0 : index
    %6 = vector.load %arg17[%c0_5, %c0_6] : memref<64x192xf32, #tpu.memory_space<vmem>>, vector<64x192xf32>
    tpu.vector_store %arg17[%c0_5, %c0_6], %5 {strides = array<i32>} : memref<64x192xf32, #tpu.memory_space<vmem>>, vector<64x192xf32>,
    %cst_7 = arith.constant 0.000000e+00 : f32
    %7 = vector.broadcast %cst_7 : f32 to vector<8x64xf32>
    %cst_8 = arith.constant 0.000000e+00 : f32
    %8 = vector.broadcast %cst_8 : f32 to vector<8x64xf32>
    %c0_9 = arith.constant 0 : index
    %c0_10 = arith.constant 0 : index
    %9 = vector.load %arg17[%c0_9, %c0_10] : memref<64x192xf32, #tpu.memory_space<vmem>>, vector<8x192xf32>
    %c16 = arith.constant 16 : index
    %c0_11 = arith.constant 0 : index
    %10 = vector.load %arg2[%c16, %c0_11] : memref<80x192xf32, #tpu.memory_space<vmem>>, vector<64x192xf32>
    %cst_12 = arith.constant dense<0.000000e+00> : vector<8x192xf32>
    %11 = tpu.matmul %7, %10, %cst_12 {dimension_numbers = #tpu.dot_dimension_numbers<[1], [0], [0], [1], [0, 0, 1, 1], [], []>} : vector<8x64xf32>, vector<64x192xf32>, vector<8x192xf32> -> vector<8x192xf32>
    %c1 = arith.constant 1 : index
    %c0_13 = arith.constant 0 : index
    %12 = vector.load %arg3[%c1, %c0_13] : memref<2x192xf32, #tpu.memory_space<vmem>>, vector<1x192xf32>
    %13 = vector.broadcast %12 : vector<1x192xf32> to vector<8x192xf32>
    %14 = arith.addf %11, %13 : vector<8x192xf32>
    %15 = arith.addf %9, %14 : vector<8x192xf32>
    %16 = vector.extract_strided_slice %15 {offsets = [0, 0], sizes = [8, 64], strides = [1, 1]} : vector<8x192xf32> to vector<8x64xf32>
    %17 = arith.negf %16 : vector<8x64xf32>
    %18 = math.exp %17 : vector<8x64xf32>
    %cst_14 = arith.constant 1.000000e+00 : f32
    %19 = vector.broadcast %cst_14 : f32 to vector<8x64xf32>
    %20 = arith.addf %19, %18 : vector<8x64xf32>
    %21 = arith.divf %19, %20 : vector<8x64xf32>
    %22 = vector.extract_strided_slice %15 {offsets = [0, 64], sizes = [8, 64], strides = [1, 1]} : vector<8x192xf32> to vector<8x64xf32>
    %23 = arith.negf %22 : vector<8x64xf32>
    %24 = math.exp %23 : vector<8x64xf32>
    %cst_15 = arith.constant 1.000000e+00 : f32
    %25 = vector.broadcast %cst_15 : f32 to vector<8x64xf32>
    %26 = arith.addf %25, %24 : vector<8x64xf32>
    %27 = arith.divf %25, %26 : vector<8x64xf32>
    %28 = vector.extract_strided_slice %9 {offsets = [0, 128], sizes = [8, 64], strides = [1, 1]} : vector<8x192xf32> to vector<8x64xf32>
    %29 = vector.extract_strided_slice %14 {offsets = [0, 128], sizes = [8, 64], strides = [1, 1]} : vector<8x192xf32> to vector<8x64xf32>
    %30 = arith.mulf %21, %29 : vector<8x64xf32>
    %31 = arith.addf %28, %30 : vector<8x64xf32>
    %32 = math.tanh %31 : vector<8x64xf32>
    %cst_16 = arith.constant 1.000000e+00 : f32
    %33 = vector.broadcast %cst_16 : f32 to vector<8x64xf32>
    %34 = arith.subf %33, %27 : vector<8x64xf32>
    %35 = arith.mulf %34, %32 : vector<8x64xf32>
    %36 = arith.mulf %27, %7 : vector<8x64xf32>
    %37 = arith.addf %35, %36 : vector<8x64xf32>
    %38 = tpu.concatenate %37, %8 in 1 : vector<8x64xf32>, vector<8x64xf32> -> vector<8x128xf32>
    %c0_17 = arith.constant 0 : index
    %c0_18 = arith.constant 0 : index
    %39 = vector.load %arg4[%c0_17, %c0_18] : memref<128x256xf32, #tpu.memory_space<vmem>>, vector<128x256xf32>
    %cst_19 = arith.constant dense<0.000000e+00> : vector<8x256xf32>
    %40 = tpu.matmul %38, %39, %cst_19 {dimension_numbers = #tpu.dot_dimension_numbers<[1], [0], [0], [1], [0, 0, 1, 1], [], []>} : vector<8x128xf32>, vector<128x256xf32>, vector<8x256xf32> -> vector<8x256xf32>
    %c0_20 = arith.constant 0 : index
    %c0_21 = arith.constant 0 : index
    %41 = vector.load %arg5[%c0_20, %c0_21] : memref<1x256xf32, #tpu.memory_space<vmem>>, vector<1x256xf32>
    %42 = vector.broadcast %41 : vector<1x256xf32> to vector<8x256xf32>
    %43 = arith.addf %40, %42 : vector<8x256xf32>
    %44 = vector.extract_strided_slice %43 {offsets = [0, 0], sizes = [8, 64], strides = [1, 1]} : vector<8x256xf32> to vector<8x64xf32>
    %45 = arith.negf %44 : vector<8x64xf32>
    %46 = math.exp %45 : vector<8x64xf32>
    %cst_22 = arith.constant 1.000000e+00 : f32
    %47 = vector.broadcast %cst_22 : f32 to vector<8x64xf32>
    %48 = arith.addf %47, %46 : vector<8x64xf32>
    %49 = arith.divf %47, %48 : vector<8x64xf32>
    %50 = vector.extract_strided_slice %43 {offsets = [0, 64], sizes = [8, 64], strides = [1, 1]} : vector<8x256xf32> to vector<8x64xf32>
    %51 = arith.negf %50 : vector<8x64xf32>
    %52 = math.exp %51 : vector<8x64xf32>
    %cst_23 = arith.constant 1.000000e+00 : f32
    %53 = vector.broadcast %cst_23 : f32 to vector<8x64xf32>
    %54 = arith.addf %53, %52 : vector<8x64xf32>
    %55 = arith.divf %53, %54 : vector<8x64xf32>
    %56 = vector.extract_strided_slice %43 {offsets = [0, 128], sizes = [8, 64], strides = [1, 1]} : vector<8x256xf32> to vector<8x64xf32>
    %57 = vector.extract_strided_slice %43 {offsets = [0, 192], sizes = [8, 64], strides = [1, 1]} : vector<8x256xf32> to vector<8x64xf32>
    %58 = arith.mulf %49, %57 : vector<8x64xf32>
    %59 = arith.addf %56, %58 : vector<8x64xf32>
    %60 = math.tanh %59 : vector<8x64xf32>
    %cst_24 = arith.constant 1.000000e+00 : f32
    %61 = vector.broadcast %cst_24 : f32 to vector<8x64xf32>
    %62 = arith.subf %61, %55 : vector<8x64xf32>
    %63 = arith.mulf %62, %60 : vector<8x64xf32>
    %64 = arith.mulf %55, %8 : vector<8x64xf32>
    %65 = arith.addf %63, %64 : vector<8x64xf32>
    %c8 = arith.constant 8 : index
    %c0_25 = arith.constant 0 : index
    %66 = vector.load %arg17[%c8, %c0_25] : memref<64x192xf32, #tpu.memory_space<vmem>>, vector<8x192xf32>
    %c16_26 = arith.constant 16 : index
    %c0_27 = arith.constant 0 : index
    %67 = vector.load %arg2[%c16_26, %c0_27] : memref<80x192xf32, #tpu.memory_space<vmem>>, vector<64x192xf32>
    %cst_28 = arith.constant dense<0.000000e+00> : vector<8x192xf32>
    %68 = tpu.matmul %37, %67, %cst_28 {dimension_numbers = #tpu.dot_dimension_numbers<[1], [0], [0], [1], [0, 0, 1, 1], [], []>} : vector<8x64xf32>, vector<64x192xf32>, vector<8x192xf32> -> vector<8x192xf32>
    %c1_29 = arith.constant 1 : index
    %c0_30 = arith.constant 0 : index
    %69 = vector.load %arg3[%c1_29, %c0_30] : memref<2x192xf32, #tpu.memory_space<vmem>>, vector<1x192xf32>
    %70 = vector.broadcast %69 : vector<1x192xf32> to vector<8x192xf32>
    %71 = arith.addf %68, %70 : vector<8x192xf32>
    %72 = arith.addf %66, %71 : vector<8x192xf32>
    %73 = vector.extract_strided_slice %72 {offsets = [0, 0], sizes = [8, 64], strides = [1, 1]} : vector<8x192xf32> to vector<8x64xf32>
    %74 = arith.negf %73 : vector<8x64xf32>
    %75 = math.exp %74 : vector<8x64xf32>
    %cst_31 = arith.constant 1.000000e+00 : f32
    %76 = vector.broadcast %cst_31 : f32 to vector<8x64xf32>
    %77 = arith.addf %76, %75 : vector<8x64xf32>
    %78 = arith.divf %76, %77 : vector<8x64xf32>
    %79 = vector.extract_strided_slice %72 {offsets = [0, 64], sizes = [8, 64], strides = [1, 1]} : vector<8x192xf32> to vector<8x64xf32>
    %80 = arith.negf %79 : vector<8x64xf32>
    %81 = math.exp %80 : vector<8x64xf32>
    %cst_32 = arith.constant 1.000000e+00 : f32
    %82 = vector.broadcast %cst_32 : f32 to vector<8x64xf32>
    %83 = arith.addf %82, %81 : vector<8x64xf32>
    %84 = arith.divf %82, %83 : vector<8x64xf32>
    %85 = vector.extract_strided_slice %66 {offsets = [0, 128], sizes = [8, 64], strides = [1, 1]} : vector<8x192xf32> to vector<8x64xf32>
    %86 = vector.extract_strided_slice %71 {offsets = [0, 128], sizes = [8, 64], strides = [1, 1]} : vector<8x192xf32> to vector<8x64xf32>
    %87 = arith.mulf %78, %86 : vector<8x64xf32>
    %88 = arith.addf %85, %87 : vector<8x64xf32>
    %89 = math.tanh %88 : vector<8x64xf32>
    %cst_33 = arith.constant 1.000000e+00 : f32
    %90 = vector.broadcast %cst_33 : f32 to vector<8x64xf32>
    %91 = arith.subf %90, %84 : vector<8x64xf32>
    %92 = arith.mulf %91, %89 : vector<8x64xf32>
    %93 = arith.mulf %84, %37 : vector<8x64xf32>
    %94 = arith.addf %92, %93 : vector<8x64xf32>
    %95 = tpu.concatenate %94, %65 in 1 : vector<8x64xf32>, vector<8x64xf32> -> vector<8x128xf32>
    %c0_34 = arith.constant 0 : index
    %c0_35 = arith.constant 0 : index
    %96 = vector.load %arg4[%c0_34, %c0_35] : memref<128x256xf32, #tpu.memory_space<vmem>>, vector<128x256xf32>
    %cst_36 = arith.constant dense<0.000000e+00> : vector<8x256xf32>
    %97 = tpu.matmul %95, %96, %cst_36 {dimension_numbers = #tpu.dot_dimension_numbers<[1], [0], [0], [1], [0, 0, 1, 1], [], []>} : vector<8x128xf32>, vector<128x256xf32>, vector<8x256xf32> -> vector<8x256xf32>
    %c0_37 = arith.constant 0 : index
    %c0_38 = arith.constant 0 : index
    %98 = vector.load %arg5[%c0_37, %c0_38] : memref<1x256xf32, #tpu.memory_space<vmem>>, vector<1x256xf32>
    %99 = vector.broadcast %98 : vector<1x256xf32> to vector<8x256xf32>
    %100 = arith.addf %97, %99 : vector<8x256xf32>
    %101 = vector.extract_strided_slice %100 {offsets = [0, 0], sizes = [8, 64], strides = [1, 1]} : vector<8x256xf32> to vector<8x64xf32>
    %102 = arith.negf %101 : vector<8x64xf32>
    %103 = math.exp %102 : vector<8x64xf32>
    %cst_39 = arith.constant 1.000000e+00 : f32
    %104 = vector.broadcast %cst_39 : f32 to vector<8x64xf32>
    %105 = arith.addf %104, %103 : vector<8x64xf32>
    %106 = arith.divf %104, %105 : vector<8x64xf32>
    %107 = vector.extract_strided_slice %100 {offsets = [0, 64], sizes = [8, 64], strides = [1, 1]} : vector<8x256xf32> to vector<8x64xf32>
    %108 = arith.negf %107 : vector<8x64xf32>
    %109 = math.exp %108 : vector<8x64xf32>
    %cst_40 = arith.constant 1.000000e+00 : f32
    %110 = vector.broadcast %cst_40 : f32 to vector<8x64xf32>
    %111 = arith.addf %110, %109 : vector<8x64xf32>
    %112 = arith.divf %110, %111 : vector<8x64xf32>
    %113 = vector.extract_strided_slice %100 {offsets = [0, 128], sizes = [8, 64], strides = [1, 1]} : vector<8x256xf32> to vector<8x64xf32>
    %114 = vector.extract_strided_slice %100 {offsets = [0, 192], sizes = [8, 64], strides = [1, 1]} : vector<8x256xf32> to vector<8x64xf32>
    %115 = arith.mulf %106, %114 : vector<8x64xf32>
    %116 = arith.addf %113, %115 : vector<8x64xf32>
    %117 = math.tanh %116 : vector<8x64xf32>
    %cst_41 = arith.constant 1.000000e+00 : f32
    %118 = vector.broadcast %cst_41 : f32 to vector<8x64xf32>
    %119 = arith.subf %118, %112 : vector<8x64xf32>
    %120 = arith.mulf %119, %117 : vector<8x64xf32>
    %121 = arith.mulf %112, %65 : vector<8x64xf32>
    %122 = arith.addf %120, %121 : vector<8x64xf32>
    %c16_42 = arith.constant 16 : index
    %c0_43 = arith.constant 0 : index
    %123 = vector.load %arg17[%c16_42, %c0_43] : memref<64x192xf32, #tpu.memory_space<vmem>>, vector<8x192xf32>
    %c16_44 = arith.constant 16 : index
    %c0_45 = arith.constant 0 : index
    %124 = vector.load %arg2[%c16_44, %c0_45] : memref<80x192xf32, #tpu.memory_space<vmem>>, vector<64x192xf32>
    %cst_46 = arith.constant dense<0.000000e+00> : vector<8x192xf32>
    %125 = tpu.matmul %94, %124, %cst_46 {dimension_numbers = #tpu.dot_dimension_numbers<[1], [0], [0], [1], [0, 0, 1, 1], [], []>} : vector<8x64xf32>, vector<64x192xf32>, vector<8x192xf32> -> vector<8x192xf32>
    %c1_47 = arith.constant 1 : index
    %c0_48 = arith.constant 0 : index
    %126 = vector.load %arg3[%c1_47, %c0_48] : memref<2x192xf32, #tpu.memory_space<vmem>>, vector<1x192xf32>
    %127 = vector.broadcast %126 : vector<1x192xf32> to vector<8x192xf32>
    %128 = arith.addf %125, %127 : vector<8x192xf32>
    %129 = arith.addf %123, %128 : vector<8x192xf32>
    %130 = vector.extract_strided_slice %129 {offsets = [0, 0], sizes = [8, 64], strides = [1, 1]} : vector<8x192xf32> to vector<8x64xf32>
    %131 = arith.negf %130 : vector<8x64xf32>
    %132 = math.exp %131 : vector<8x64xf32>
    %cst_49 = arith.constant 1.000000e+00 : f32
    %133 = vector.broadcast %cst_49 : f32 to vector<8x64xf32>
    %134 = arith.addf %133, %132 : vector<8x64xf32>
    %135 = arith.divf %133, %134 : vector<8x64xf32>
    %136 = vector.extract_strided_slice %129 {offsets = [0, 64], sizes = [8, 64], strides = [1, 1]} : vector<8x192xf32> to vector<8x64xf32>
    %137 = arith.negf %136 : vector<8x64xf32>
    %138 = math.exp %137 : vector<8x64xf32>
    %cst_50 = arith.constant 1.000000e+00 : f32
    %139 = vector.broadcast %cst_50 : f32 to vector<8x64xf32>
    %140 = arith.addf %139, %138 : vector<8x64xf32>
    %141 = arith.divf %139, %140 : vector<8x64xf32>
    %142 = vector.extract_strided_slice %123 {offsets = [0, 128], sizes = [8, 64], strides = [1, 1]} : vector<8x192xf32> to vector<8x64xf32>
    %143 = vector.extract_strided_slice %128 {offsets = [0, 128], sizes = [8, 64], strides = [1, 1]} : vector<8x192xf32> to vector<8x64xf32>
    %144 = arith.mulf %135, %143 : vector<8x64xf32>
    %145 = arith.addf %142, %144 : vector<8x64xf32>
    %146 = math.tanh %145 : vector<8x64xf32>
    %cst_51 = arith.constant 1.000000e+00 : f32
    %147 = vector.broadcast %cst_51 : f32 to vector<8x64xf32>
    %148 = arith.subf %147, %141 : vector<8x64xf32>
    %149 = arith.mulf %148, %146 : vector<8x64xf32>
    %150 = arith.mulf %141, %94 : vector<8x64xf32>
    %151 = arith.addf %149, %150 : vector<8x64xf32>
    %152 = tpu.concatenate %151, %122 in 1 : vector<8x64xf32>, vector<8x64xf32> -> vector<8x128xf32>
    %c0_52 = arith.constant 0 : index
    %c0_53 = arith.constant 0 : index
    %153 = vector.load %arg4[%c0_52, %c0_53] : memref<128x256xf32, #tpu.memory_space<vmem>>, vector<128x256xf32>
    %cst_54 = arith.constant dense<0.000000e+00> : vector<8x256xf32>
    %154 = tpu.matmul %152, %153, %cst_54 {dimension_numbers = #tpu.dot_dimension_numbers<[1], [0], [0], [1], [0, 0, 1, 1], [], []>} : vector<8x128xf32>, vector<128x256xf32>, vector<8x256xf32> -> vector<8x256xf32>
    %c0_55 = arith.constant 0 : index
    %c0_56 = arith.constant 0 : index
    %155 = vector.load %arg5[%c0_55, %c0_56] : memref<1x256xf32, #tpu.memory_space<vmem>>, vector<1x256xf32>
    %156 = vector.broadcast %155 : vector<1x256xf32> to vector<8x256xf32>
    %157 = arith.addf %154, %156 : vector<8x256xf32>
    %158 = vector.extract_strided_slice %157 {offsets = [0, 0], sizes = [8, 64], strides = [1, 1]} : vector<8x256xf32> to vector<8x64xf32>
    %159 = arith.negf %158 : vector<8x64xf32>
    %160 = math.exp %159 : vector<8x64xf32>
    %cst_57 = arith.constant 1.000000e+00 : f32
    %161 = vector.broadcast %cst_57 : f32 to vector<8x64xf32>
    %162 = arith.addf %161, %160 : vector<8x64xf32>
    %163 = arith.divf %161, %162 : vector<8x64xf32>
    %164 = vector.extract_strided_slice %157 {offsets = [0, 64], sizes = [8, 64], strides = [1, 1]} : vector<8x256xf32> to vector<8x64xf32>
    %165 = arith.negf %164 : vector<8x64xf32>
    %166 = math.exp %165 : vector<8x64xf32>
    %cst_58 = arith.constant 1.000000e+00 : f32
    %167 = vector.broadcast %cst_58 : f32 to vector<8x64xf32>
    %168 = arith.addf %167, %166 : vector<8x64xf32>
    %169 = arith.divf %167, %168 : vector<8x64xf32>
    %170 = vector.extract_strided_slice %157 {offsets = [0, 128], sizes = [8, 64], strides = [1, 1]} : vector<8x256xf32> to vector<8x64xf32>
    %171 = vector.extract_strided_slice %157 {offsets = [0, 192], sizes = [8, 64], strides = [1, 1]} : vector<8x256xf32> to vector<8x64xf32>
    %172 = arith.mulf %163, %171 : vector<8x64xf32>
    %173 = arith.addf %170, %172 : vector<8x64xf32>
    %174 = math.tanh %173 : vector<8x64xf32>
    %cst_59 = arith.constant 1.000000e+00 : f32
    %175 = vector.broadcast %cst_59 : f32 to vector<8x64xf32>
    %176 = arith.subf %175, %169 : vector<8x64xf32>
    %177 = arith.mulf %176, %174 : vector<8x64xf32>
    %178 = arith.mulf %169, %122 : vector<8x64xf32>
    %179 = arith.addf %177, %178 : vector<8x64xf32>
    %c24 = arith.constant 24 : index
    %c0_60 = arith.constant 0 : index
    %180 = vector.load %arg17[%c24, %c0_60] : memref<64x192xf32, #tpu.memory_space<vmem>>, vector<8x192xf32>
    %c16_61 = arith.constant 16 : index
    %c0_62 = arith.constant 0 : index
    %181 = vector.load %arg2[%c16_61, %c0_62] : memref<80x192xf32, #tpu.memory_space<vmem>>, vector<64x192xf32>
    %cst_63 = arith.constant dense<0.000000e+00> : vector<8x192xf32>
    %182 = tpu.matmul %151, %181, %cst_63 {dimension_numbers = #tpu.dot_dimension_numbers<[1], [0], [0], [1], [0, 0, 1, 1], [], []>} : vector<8x64xf32>, vector<64x192xf32>, vector<8x192xf32> -> vector<8x192xf32>
    %c1_64 = arith.constant 1 : index
    %c0_65 = arith.constant 0 : index
    %183 = vector.load %arg3[%c1_64, %c0_65] : memref<2x192xf32, #tpu.memory_space<vmem>>, vector<1x192xf32>
    %184 = vector.broadcast %183 : vector<1x192xf32> to vector<8x192xf32>
    %185 = arith.addf %182, %184 : vector<8x192xf32>
    %186 = arith.addf %180, %185 : vector<8x192xf32>
    %187 = vector.extract_strided_slice %186 {offsets = [0, 0], sizes = [8, 64], strides = [1, 1]} : vector<8x192xf32> to vector<8x64xf32>
    %188 = arith.negf %187 : vector<8x64xf32>
    %189 = math.exp %188 : vector<8x64xf32>
    %cst_66 = arith.constant 1.000000e+00 : f32
    %190 = vector.broadcast %cst_66 : f32 to vector<8x64xf32>
    %191 = arith.addf %190, %189 : vector<8x64xf32>
    %192 = arith.divf %190, %191 : vector<8x64xf32>
    %193 = vector.extract_strided_slice %186 {offsets = [0, 64], sizes = [8, 64], strides = [1, 1]} : vector<8x192xf32> to vector<8x64xf32>
    %194 = arith.negf %193 : vector<8x64xf32>
    %195 = math.exp %194 : vector<8x64xf32>
    %cst_67 = arith.constant 1.000000e+00 : f32
    %196 = vector.broadcast %cst_67 : f32 to vector<8x64xf32>
    %197 = arith.addf %196, %195 : vector<8x64xf32>
    %198 = arith.divf %196, %197 : vector<8x64xf32>
    %199 = vector.extract_strided_slice %180 {offsets = [0, 128], sizes = [8, 64], strides = [1, 1]} : vector<8x192xf32> to vector<8x64xf32>
    %200 = vector.extract_strided_slice %185 {offsets = [0, 128], sizes = [8, 64], strides = [1, 1]} : vector<8x192xf32> to vector<8x64xf32>
    %201 = arith.mulf %192, %200 : vector<8x64xf32>
    %202 = arith.addf %199, %201 : vector<8x64xf32>
    %203 = math.tanh %202 : vector<8x64xf32>
    %cst_68 = arith.constant 1.000000e+00 : f32
    %204 = vector.broadcast %cst_68 : f32 to vector<8x64xf32>
    %205 = arith.subf %204, %198 : vector<8x64xf32>
    %206 = arith.mulf %205, %203 : vector<8x64xf32>
    %207 = arith.mulf %198, %151 : vector<8x64xf32>
    %208 = arith.addf %206, %207 : vector<8x64xf32>
    %209 = tpu.concatenate %208, %179 in 1 : vector<8x64xf32>, vector<8x64xf32> -> vector<8x128xf32>
    %c0_69 = arith.constant 0 : index
    %c0_70 = arith.constant 0 : index
    %210 = vector.load %arg4[%c0_69, %c0_70] : memref<128x256xf32, #tpu.memory_space<vmem>>, vector<128x256xf32>
    %cst_71 = arith.constant dense<0.000000e+00> : vector<8x256xf32>
    %211 = tpu.matmul %209, %210, %cst_71 {dimension_numbers = #tpu.dot_dimension_numbers<[1], [0], [0], [1], [0, 0, 1, 1], [], []>} : vector<8x128xf32>, vector<128x256xf32>, vector<8x256xf32> -> vector<8x256xf32>
    %c0_72 = arith.constant 0 : index
    %c0_73 = arith.constant 0 : index
    %212 = vector.load %arg5[%c0_72, %c0_73] : memref<1x256xf32, #tpu.memory_space<vmem>>, vector<1x256xf32>
    %213 = vector.broadcast %212 : vector<1x256xf32> to vector<8x256xf32>
    %214 = arith.addf %211, %213 : vector<8x256xf32>
    %215 = vector.extract_strided_slice %214 {offsets = [0, 0], sizes = [8, 64], strides = [1, 1]} : vector<8x256xf32> to vector<8x64xf32>
    %216 = arith.negf %215 : vector<8x64xf32>
    %217 = math.exp %216 : vector<8x64xf32>
    %cst_74 = arith.constant 1.000000e+00 : f32
    %218 = vector.broadcast %cst_74 : f32 to vector<8x64xf32>
    %219 = arith.addf %218, %217 : vector<8x64xf32>
    %220 = arith.divf %218, %219 : vector<8x64xf32>
    %221 = vector.extract_strided_slice %214 {offsets = [0, 64], sizes = [8, 64], strides = [1, 1]} : vector<8x256xf32> to vector<8x64xf32>
    %222 = arith.negf %221 : vector<8x64xf32>
    %223 = math.exp %222 : vector<8x64xf32>
    %cst_75 = arith.constant 1.000000e+00 : f32
    %224 = vector.broadcast %cst_75 : f32 to vector<8x64xf32>
    %225 = arith.addf %224, %223 : vector<8x64xf32>
    %226 = arith.divf %224, %225 : vector<8x64xf32>
    %227 = vector.extract_strided_slice %214 {offsets = [0, 128], sizes = [8, 64], strides = [1, 1]} : vector<8x256xf32> to vector<8x64xf32>
    %228 = vector.extract_strided_slice %214 {offsets = [0, 192], sizes = [8, 64], strides = [1, 1]} : vector<8x256xf32> to vector<8x64xf32>
    %229 = arith.mulf %220, %228 : vector<8x64xf32>
    %230 = arith.addf %227, %229 : vector<8x64xf32>
    %231 = math.tanh %230 : vector<8x64xf32>
    %cst_76 = arith.constant 1.000000e+00 : f32
    %232 = vector.broadcast %cst_76 : f32 to vector<8x64xf32>
    %233 = arith.subf %232, %226 : vector<8x64xf32>
    %234 = arith.mulf %233, %231 : vector<8x64xf32>
    %235 = arith.mulf %226, %179 : vector<8x64xf32>
    %236 = arith.addf %234, %235 : vector<8x64xf32>
    %c32 = arith.constant 32 : index
    %c0_77 = arith.constant 0 : index
    %237 = vector.load %arg17[%c32, %c0_77] : memref<64x192xf32, #tpu.memory_space<vmem>>, vector<8x192xf32>
    %c16_78 = arith.constant 16 : index
    %c0_79 = arith.constant 0 : index
    %238 = vector.load %arg2[%c16_78, %c0_79] : memref<80x192xf32, #tpu.memory_space<vmem>>, vector<64x192xf32>
    %cst_80 = arith.constant dense<0.000000e+00> : vector<8x192xf32>
    %239 = tpu.matmul %208, %238, %cst_80 {dimension_numbers = #tpu.dot_dimension_numbers<[1], [0], [0], [1], [0, 0, 1, 1], [], []>} : vector<8x64xf32>, vector<64x192xf32>, vector<8x192xf32> -> vector<8x192xf32>
    %c1_81 = arith.constant 1 : index
    %c0_82 = arith.constant 0 : index
    %240 = vector.load %arg3[%c1_81, %c0_82] : memref<2x192xf32, #tpu.memory_space<vmem>>, vector<1x192xf32>
    %241 = vector.broadcast %240 : vector<1x192xf32> to vector<8x192xf32>
    %242 = arith.addf %239, %241 : vector<8x192xf32>
    %243 = arith.addf %237, %242 : vector<8x192xf32>
    %244 = vector.extract_strided_slice %243 {offsets = [0, 0], sizes = [8, 64], strides = [1, 1]} : vector<8x192xf32> to vector<8x64xf32>
    %245 = arith.negf %244 : vector<8x64xf32>
    %246 = math.exp %245 : vector<8x64xf32>
    %cst_83 = arith.constant 1.000000e+00 : f32
    %247 = vector.broadcast %cst_83 : f32 to vector<8x64xf32>
    %248 = arith.addf %247, %246 : vector<8x64xf32>
    %249 = arith.divf %247, %248 : vector<8x64xf32>
    %250 = vector.extract_strided_slice %243 {offsets = [0, 64], sizes = [8, 64], strides = [1, 1]} : vector<8x192xf32> to vector<8x64xf32>
    %251 = arith.negf %250 : vector<8x64xf32>
    %252 = math.exp %251 : vector<8x64xf32>
    %cst_84 = arith.constant 1.000000e+00 : f32
    %253 = vector.broadcast %cst_84 : f32 to vector<8x64xf32>
    %254 = arith.addf %253, %252 : vector<8x64xf32>
    %255 = arith.divf %253, %254 : vector<8x64xf32>
    %256 = vector.extract_strided_slice %237 {offsets = [0, 128], sizes = [8, 64], strides = [1, 1]} : vector<8x192xf32> to vector<8x64xf32>
    %257 = vector.extract_strided_slice %242 {offsets = [0, 128], sizes = [8, 64], strides = [1, 1]} : vector<8x192xf32> to vector<8x64xf32>
    %258 = arith.mulf %249, %257 : vector<8x64xf32>
    %259 = arith.addf %256, %258 : vector<8x64xf32>
    %260 = math.tanh %259 : vector<8x64xf32>
    %cst_85 = arith.constant 1.000000e+00 : f32
    %261 = vector.broadcast %cst_85 : f32 to vector<8x64xf32>
    %262 = arith.subf %261, %255 : vector<8x64xf32>
    %263 = arith.mulf %262, %260 : vector<8x64xf32>
    %264 = arith.mulf %255, %208 : vector<8x64xf32>
    %265 = arith.addf %263, %264 : vector<8x64xf32>
    %266 = tpu.concatenate %265, %236 in 1 : vector<8x64xf32>, vector<8x64xf32> -> vector<8x128xf32>
    %c0_86 = arith.constant 0 : index
    %c0_87 = arith.constant 0 : index
    %267 = vector.load %arg4[%c0_86, %c0_87] : memref<128x256xf32, #tpu.memory_space<vmem>>, vector<128x256xf32>
    %cst_88 = arith.constant dense<0.000000e+00> : vector<8x256xf32>
    %268 = tpu.matmul %266, %267, %cst_88 {dimension_numbers = #tpu.dot_dimension_numbers<[1], [0], [0], [1], [0, 0, 1, 1], [], []>} : vector<8x128xf32>, vector<128x256xf32>, vector<8x256xf32> -> vector<8x256xf32>
    %c0_89 = arith.constant 0 : index
    %c0_90 = arith.constant 0 : index
    %269 = vector.load %arg5[%c0_89, %c0_90] : memref<1x256xf32, #tpu.memory_space<vmem>>, vector<1x256xf32>
    %270 = vector.broadcast %269 : vector<1x256xf32> to vector<8x256xf32>
    %271 = arith.addf %268, %270 : vector<8x256xf32>
    %272 = vector.extract_strided_slice %271 {offsets = [0, 0], sizes = [8, 64], strides = [1, 1]} : vector<8x256xf32> to vector<8x64xf32>
    %273 = arith.negf %272 : vector<8x64xf32>
    %274 = math.exp %273 : vector<8x64xf32>
    %cst_91 = arith.constant 1.000000e+00 : f32
    %275 = vector.broadcast %cst_91 : f32 to vector<8x64xf32>
    %276 = arith.addf %275, %274 : vector<8x64xf32>
    %277 = arith.divf %275, %276 : vector<8x64xf32>
    %278 = vector.extract_strided_slice %271 {offsets = [0, 64], sizes = [8, 64], strides = [1, 1]} : vector<8x256xf32> to vector<8x64xf32>
    %279 = arith.negf %278 : vector<8x64xf32>
    %280 = math.exp %279 : vector<8x64xf32>
    %cst_92 = arith.constant 1.000000e+00 : f32
    %281 = vector.broadcast %cst_92 : f32 to vector<8x64xf32>
    %282 = arith.addf %281, %280 : vector<8x64xf32>
    %283 = arith.divf %281, %282 : vector<8x64xf32>
    %284 = vector.extract_strided_slice %271 {offsets = [0, 128], sizes = [8, 64], strides = [1, 1]} : vector<8x256xf32> to vector<8x64xf32>
    %285 = vector.extract_strided_slice %271 {offsets = [0, 192], sizes = [8, 64], strides = [1, 1]} : vector<8x256xf32> to vector<8x64xf32>
    %286 = arith.mulf %277, %285 : vector<8x64xf32>
    %287 = arith.addf %284, %286 : vector<8x64xf32>
    %288 = math.tanh %287 : vector<8x64xf32>
    %cst_93 = arith.constant 1.000000e+00 : f32
    %289 = vector.broadcast %cst_93 : f32 to vector<8x64xf32>
    %290 = arith.subf %289, %283 : vector<8x64xf32>
    %291 = arith.mulf %290, %288 : vector<8x64xf32>
    %292 = arith.mulf %283, %236 : vector<8x64xf32>
    %293 = arith.addf %291, %292 : vector<8x64xf32>
    %c40 = arith.constant 40 : index
    %c0_94 = arith.constant 0 : index
    %294 = vector.load %arg17[%c40, %c0_94] : memref<64x192xf32, #tpu.memory_space<vmem>>, vector<8x192xf32>
    %c16_95 = arith.constant 16 : index
    %c0_96 = arith.constant 0 : index
    %295 = vector.load %arg2[%c16_95, %c0_96] : memref<80x192xf32, #tpu.memory_space<vmem>>, vector<64x192xf32>
    %cst_97 = arith.constant dense<0.000000e+00> : vector<8x192xf32>
    %296 = tpu.matmul %265, %295, %cst_97 {dimension_numbers = #tpu.dot_dimension_numbers<[1], [0], [0], [1], [0, 0, 1, 1], [], []>} : vector<8x64xf32>, vector<64x192xf32>, vector<8x192xf32> -> vector<8x192xf32>
    %c1_98 = arith.constant 1 : index
    %c0_99 = arith.constant 0 : index
    %297 = vector.load %arg3[%c1_98, %c0_99] : memref<2x192xf32, #tpu.memory_space<vmem>>, vector<1x192xf32>
    %298 = vector.broadcast %297 : vector<1x192xf32> to vector<8x192xf32>
    %299 = arith.addf %296, %298 : vector<8x192xf32>
    %300 = arith.addf %294, %299 : vector<8x192xf32>
    %301 = vector.extract_strided_slice %300 {offsets = [0, 0], sizes = [8, 64], strides = [1, 1]} : vector<8x192xf32> to vector<8x64xf32>
    %302 = arith.negf %301 : vector<8x64xf32>
    %303 = math.exp %302 : vector<8x64xf32>
    %cst_100 = arith.constant 1.000000e+00 : f32
    %304 = vector.broadcast %cst_100 : f32 to vector<8x64xf32>
    %305 = arith.addf %304, %303 : vector<8x64xf32>
    %306 = arith.divf %304, %305 : vector<8x64xf32>
    %307 = vector.extract_strided_slice %300 {offsets = [0, 64], sizes = [8, 64], strides = [1, 1]} : vector<8x192xf32> to vector<8x64xf32>
    %308 = arith.negf %307 : vector<8x64xf32>
    %309 = math.exp %308 : vector<8x64xf32>
    %cst_101 = arith.constant 1.000000e+00 : f32
    %310 = vector.broadcast %cst_101 : f32 to vector<8x64xf32>
    %311 = arith.addf %310, %309 : vector<8x64xf32>
    %312 = arith.divf %310, %311 : vector<8x64xf32>
    %313 = vector.extract_strided_slice %294 {offsets = [0, 128], sizes = [8, 64], strides = [1, 1]} : vector<8x192xf32> to vector<8x64xf32>
    %314 = vector.extract_strided_slice %299 {offsets = [0, 128], sizes = [8, 64], strides = [1, 1]} : vector<8x192xf32> to vector<8x64xf32>
    %315 = arith.mulf %306, %314 : vector<8x64xf32>
    %316 = arith.addf %313, %315 : vector<8x64xf32>
    %317 = math.tanh %316 : vector<8x64xf32>
    %cst_102 = arith.constant 1.000000e+00 : f32
    %318 = vector.broadcast %cst_102 : f32 to vector<8x64xf32>
    %319 = arith.subf %318, %312 : vector<8x64xf32>
    %320 = arith.mulf %319, %317 : vector<8x64xf32>
    %321 = arith.mulf %312, %265 : vector<8x64xf32>
    %322 = arith.addf %320, %321 : vector<8x64xf32>
    %323 = tpu.concatenate %322, %293 in 1 : vector<8x64xf32>, vector<8x64xf32> -> vector<8x128xf32>
    %c0_103 = arith.constant 0 : index
    %c0_104 = arith.constant 0 : index
    %324 = vector.load %arg4[%c0_103, %c0_104] : memref<128x256xf32, #tpu.memory_space<vmem>>, vector<128x256xf32>
    %cst_105 = arith.constant dense<0.000000e+00> : vector<8x256xf32>
    %325 = tpu.matmul %323, %324, %cst_105 {dimension_numbers = #tpu.dot_dimension_numbers<[1], [0], [0], [1], [0, 0, 1, 1], [], []>} : vector<8x128xf32>, vector<128x256xf32>, vector<8x256xf32> -> vector<8x256xf32>
    %c0_106 = arith.constant 0 : index
    %c0_107 = arith.constant 0 : index
    %326 = vector.load %arg5[%c0_106, %c0_107] : memref<1x256xf32, #tpu.memory_space<vmem>>, vector<1x256xf32>
    %327 = vector.broadcast %326 : vector<1x256xf32> to vector<8x256xf32>
    %328 = arith.addf %325, %327 : vector<8x256xf32>
    %329 = vector.extract_strided_slice %328 {offsets = [0, 0], sizes = [8, 64], strides = [1, 1]} : vector<8x256xf32> to vector<8x64xf32>
    %330 = arith.negf %329 : vector<8x64xf32>
    %331 = math.exp %330 : vector<8x64xf32>
    %cst_108 = arith.constant 1.000000e+00 : f32
    %332 = vector.broadcast %cst_108 : f32 to vector<8x64xf32>
    %333 = arith.addf %332, %331 : vector<8x64xf32>
    %334 = arith.divf %332, %333 : vector<8x64xf32>
    %335 = vector.extract_strided_slice %328 {offsets = [0, 64], sizes = [8, 64], strides = [1, 1]} : vector<8x256xf32> to vector<8x64xf32>
    %336 = arith.negf %335 : vector<8x64xf32>
    %337 = math.exp %336 : vector<8x64xf32>
    %cst_109 = arith.constant 1.000000e+00 : f32
    %338 = vector.broadcast %cst_109 : f32 to vector<8x64xf32>
    %339 = arith.addf %338, %337 : vector<8x64xf32>
    %340 = arith.divf %338, %339 : vector<8x64xf32>
    %341 = vector.extract_strided_slice %328 {offsets = [0, 128], sizes = [8, 64], strides = [1, 1]} : vector<8x256xf32> to vector<8x64xf32>
    %342 = vector.extract_strided_slice %328 {offsets = [0, 192], sizes = [8, 64], strides = [1, 1]} : vector<8x256xf32> to vector<8x64xf32>
    %343 = arith.mulf %334, %342 : vector<8x64xf32>
    %344 = arith.addf %341, %343 : vector<8x64xf32>
    %345 = math.tanh %344 : vector<8x64xf32>
    %cst_110 = arith.constant 1.000000e+00 : f32
    %346 = vector.broadcast %cst_110 : f32 to vector<8x64xf32>
    %347 = arith.subf %346, %340 : vector<8x64xf32>
    %348 = arith.mulf %347, %345 : vector<8x64xf32>
    %349 = arith.mulf %340, %293 : vector<8x64xf32>
    %350 = arith.addf %348, %349 : vector<8x64xf32>
    %c48 = arith.constant 48 : index
    %c0_111 = arith.constant 0 : index
    %351 = vector.load %arg17[%c48, %c0_111] : memref<64x192xf32, #tpu.memory_space<vmem>>, vector<8x192xf32>
    %c16_112 = arith.constant 16 : index
    %c0_113 = arith.constant 0 : index
    %352 = vector.load %arg2[%c16_112, %c0_113] : memref<80x192xf32, #tpu.memory_space<vmem>>, vector<64x192xf32>
    %cst_114 = arith.constant dense<0.000000e+00> : vector<8x192xf32>
    %353 = tpu.matmul %322, %352, %cst_114 {dimension_numbers = #tpu.dot_dimension_numbers<[1], [0], [0], [1], [0, 0, 1, 1], [], []>} : vector<8x64xf32>, vector<64x192xf32>, vector<8x192xf32> -> vector<8x192xf32>
    %c1_115 = arith.constant 1 : index
    %c0_116 = arith.constant 0 : index
    %354 = vector.load %arg3[%c1_115, %c0_116] : memref<2x192xf32, #tpu.memory_space<vmem>>, vector<1x192xf32>
    %355 = vector.broadcast %354 : vector<1x192xf32> to vector<8x192xf32>
    %356 = arith.addf %353, %355 : vector<8x192xf32>
    %357 = arith.addf %351, %356 : vector<8x192xf32>
    %358 = vector.extract_strided_slice %357 {offsets = [0, 0], sizes = [8, 64], strides = [1, 1]} : vector<8x192xf32> to vector<8x64xf32>
    %359 = arith.negf %358 : vector<8x64xf32>
    %360 = math.exp %359 : vector<8x64xf32>
    %cst_117 = arith.constant 1.000000e+00 : f32
    %361 = vector.broadcast %cst_117 : f32 to vector<8x64xf32>
    %362 = arith.addf %361, %360 : vector<8x64xf32>
    %363 = arith.divf %361, %362 : vector<8x64xf32>
    %364 = vector.extract_strided_slice %357 {offsets = [0, 64], sizes = [8, 64], strides = [1, 1]} : vector<8x192xf32> to vector<8x64xf32>
    %365 = arith.negf %364 : vector<8x64xf32>
    %366 = math.exp %365 : vector<8x64xf32>
    %cst_118 = arith.constant 1.000000e+00 : f32
    %367 = vector.broadcast %cst_118 : f32 to vector<8x64xf32>
    %368 = arith.addf %367, %366 : vector<8x64xf32>
    %369 = arith.divf %367, %368 : vector<8x64xf32>
    %370 = vector.extract_strided_slice %351 {offsets = [0, 128], sizes = [8, 64], strides = [1, 1]} : vector<8x192xf32> to vector<8x64xf32>
    %371 = vector.extract_strided_slice %356 {offsets = [0, 128], sizes = [8, 64], strides = [1, 1]} : vector<8x192xf32> to vector<8x64xf32>
    %372 = arith.mulf %363, %371 : vector<8x64xf32>
    %373 = arith.addf %370, %372 : vector<8x64xf32>
    %374 = math.tanh %373 : vector<8x64xf32>
    %cst_119 = arith.constant 1.000000e+00 : f32
    %375 = vector.broadcast %cst_119 : f32 to vector<8x64xf32>
    %376 = arith.subf %375, %369 : vector<8x64xf32>
    %377 = arith.mulf %376, %374 : vector<8x64xf32>
    %378 = arith.mulf %369, %322 : vector<8x64xf32>
    %379 = arith.addf %377, %378 : vector<8x64xf32>
    %380 = tpu.concatenate %379, %350 in 1 : vector<8x64xf32>, vector<8x64xf32> -> vector<8x128xf32>
    %c0_120 = arith.constant 0 : index
    %c0_121 = arith.constant 0 : index
    %381 = vector.load %arg4[%c0_120, %c0_121] : memref<128x256xf32, #tpu.memory_space<vmem>>, vector<128x256xf32>
    %cst_122 = arith.constant dense<0.000000e+00> : vector<8x256xf32>
    %382 = tpu.matmul %380, %381, %cst_122 {dimension_numbers = #tpu.dot_dimension_numbers<[1], [0], [0], [1], [0, 0, 1, 1], [], []>} : vector<8x128xf32>, vector<128x256xf32>, vector<8x256xf32> -> vector<8x256xf32>
    %c0_123 = arith.constant 0 : index
    %c0_124 = arith.constant 0 : index
    %383 = vector.load %arg5[%c0_123, %c0_124] : memref<1x256xf32, #tpu.memory_space<vmem>>, vector<1x256xf32>
    %384 = vector.broadcast %383 : vector<1x256xf32> to vector<8x256xf32>
    %385 = arith.addf %382, %384 : vector<8x256xf32>
    %386 = vector.extract_strided_slice %385 {offsets = [0, 0], sizes = [8, 64], strides = [1, 1]} : vector<8x256xf32> to vector<8x64xf32>
    %387 = arith.negf %386 : vector<8x64xf32>
    %388 = math.exp %387 : vector<8x64xf32>
    %cst_125 = arith.constant 1.000000e+00 : f32
    %389 = vector.broadcast %cst_125 : f32 to vector<8x64xf32>
    %390 = arith.addf %389, %388 : vector<8x64xf32>
    %391 = arith.divf %389, %390 : vector<8x64xf32>
    %392 = vector.extract_strided_slice %385 {offsets = [0, 64], sizes = [8, 64], strides = [1, 1]} : vector<8x256xf32> to vector<8x64xf32>
    %393 = arith.negf %392 : vector<8x64xf32>
    %394 = math.exp %393 : vector<8x64xf32>
    %cst_126 = arith.constant 1.000000e+00 : f32
    %395 = vector.broadcast %cst_126 : f32 to vector<8x64xf32>
    %396 = arith.addf %395, %394 : vector<8x64xf32>
    %397 = arith.divf %395, %396 : vector<8x64xf32>
    %398 = vector.extract_strided_slice %385 {offsets = [0, 128], sizes = [8, 64], strides = [1, 1]} : vector<8x256xf32> to vector<8x64xf32>
    %399 = vector.extract_strided_slice %385 {offsets = [0, 192], sizes = [8, 64], strides = [1, 1]} : vector<8x256xf32> to vector<8x64xf32>
    %400 = arith.mulf %391, %399 : vector<8x64xf32>
    %401 = arith.addf %398, %400 : vector<8x64xf32>
    %402 = math.tanh %401 : vector<8x64xf32>
    %cst_127 = arith.constant 1.000000e+00 : f32
    %403 = vector.broadcast %cst_127 : f32 to vector<8x64xf32>
    %404 = arith.subf %403, %397 : vector<8x64xf32>
    %405 = arith.mulf %404, %402 : vector<8x64xf32>
    %406 = arith.mulf %397, %350 : vector<8x64xf32>
    %407 = arith.addf %405, %406 : vector<8x64xf32>
    %c56 = arith.constant 56 : index
    %c0_128 = arith.constant 0 : index
    %408 = vector.load %arg17[%c56, %c0_128] : memref<64x192xf32, #tpu.memory_space<vmem>>, vector<8x192xf32>
    %c16_129 = arith.constant 16 : index
    %c0_130 = arith.constant 0 : index
    %409 = vector.load %arg2[%c16_129, %c0_130] : memref<80x192xf32, #tpu.memory_space<vmem>>, vector<64x192xf32>
    %cst_131 = arith.constant dense<0.000000e+00> : vector<8x192xf32>
    %410 = tpu.matmul %379, %409, %cst_131 {dimension_numbers = #tpu.dot_dimension_numbers<[1], [0], [0], [1], [0, 0, 1, 1], [], []>} : vector<8x64xf32>, vector<64x192xf32>, vector<8x192xf32> -> vector<8x192xf32>
    %c1_132 = arith.constant 1 : index
    %c0_133 = arith.constant 0 : index
    %411 = vector.load %arg3[%c1_132, %c0_133] : memref<2x192xf32, #tpu.memory_space<vmem>>, vector<1x192xf32>
    %412 = vector.broadcast %411 : vector<1x192xf32> to vector<8x192xf32>
    %413 = arith.addf %410, %412 : vector<8x192xf32>
    %414 = arith.addf %408, %413 : vector<8x192xf32>
    %415 = vector.extract_strided_slice %414 {offsets = [0, 0], sizes = [8, 64], strides = [1, 1]} : vector<8x192xf32> to vector<8x64xf32>
    %416 = arith.negf %415 : vector<8x64xf32>
    %417 = math.exp %416 : vector<8x64xf32>
    %cst_134 = arith.constant 1.000000e+00 : f32
    %418 = vector.broadcast %cst_134 : f32 to vector<8x64xf32>
    %419 = arith.addf %418, %417 : vector<8x64xf32>
    %420 = arith.divf %418, %419 : vector<8x64xf32>
    %421 = vector.extract_strided_slice %414 {offsets = [0, 64], sizes = [8, 64], strides = [1, 1]} : vector<8x192xf32> to vector<8x64xf32>
    %422 = arith.negf %421 : vector<8x64xf32>
    %423 = math.exp %422 : vector<8x64xf32>
    %cst_135 = arith.constant 1.000000e+00 : f32
    %424 = vector.broadcast %cst_135 : f32 to vector<8x64xf32>
    %425 = arith.addf %424, %423 : vector<8x64xf32>
    %426 = arith.divf %424, %425 : vector<8x64xf32>
    %427 = vector.extract_strided_slice %408 {offsets = [0, 128], sizes = [8, 64], strides = [1, 1]} : vector<8x192xf32> to vector<8x64xf32>
    %428 = vector.extract_strided_slice %413 {offsets = [0, 128], sizes = [8, 64], strides = [1, 1]} : vector<8x192xf32> to vector<8x64xf32>
    %429 = arith.mulf %420, %428 : vector<8x64xf32>
    %430 = arith.addf %427, %429 : vector<8x64xf32>
    %431 = math.tanh %430 : vector<8x64xf32>
    %cst_136 = arith.constant 1.000000e+00 : f32
    %432 = vector.broadcast %cst_136 : f32 to vector<8x64xf32>
    %433 = arith.subf %432, %426 : vector<8x64xf32>
    %434 = arith.mulf %433, %431 : vector<8x64xf32>
    %435 = arith.mulf %426, %379 : vector<8x64xf32>
    %436 = arith.addf %434, %435 : vector<8x64xf32>
    %437 = tpu.concatenate %436, %407 in 1 : vector<8x64xf32>, vector<8x64xf32> -> vector<8x128xf32>
    %c0_137 = arith.constant 0 : index
    %c0_138 = arith.constant 0 : index
    %438 = vector.load %arg4[%c0_137, %c0_138] : memref<128x256xf32, #tpu.memory_space<vmem>>, vector<128x256xf32>
    %cst_139 = arith.constant dense<0.000000e+00> : vector<8x256xf32>
    %439 = tpu.matmul %437, %438, %cst_139 {dimension_numbers = #tpu.dot_dimension_numbers<[1], [0], [0], [1], [0, 0, 1, 1], [], []>} : vector<8x128xf32>, vector<128x256xf32>, vector<8x256xf32> -> vector<8x256xf32>
    %c0_140 = arith.constant 0 : index
    %c0_141 = arith.constant 0 : index
    %440 = vector.load %arg5[%c0_140, %c0_141] : memref<1x256xf32, #tpu.memory_space<vmem>>, vector<1x256xf32>
    %441 = vector.broadcast %440 : vector<1x256xf32> to vector<8x256xf32>
    %442 = arith.addf %439, %441 : vector<8x256xf32>
    %443 = vector.extract_strided_slice %442 {offsets = [0, 0], sizes = [8, 64], strides = [1, 1]} : vector<8x256xf32> to vector<8x64xf32>
    %444 = arith.negf %443 : vector<8x64xf32>
    %445 = math.exp %444 : vector<8x64xf32>
    %cst_142 = arith.constant 1.000000e+00 : f32
    %446 = vector.broadcast %cst_142 : f32 to vector<8x64xf32>
    %447 = arith.addf %446, %445 : vector<8x64xf32>
    %448 = arith.divf %446, %447 : vector<8x64xf32>
    %449 = vector.extract_strided_slice %442 {offsets = [0, 64], sizes = [8, 64], strides = [1, 1]} : vector<8x256xf32> to vector<8x64xf32>
    %450 = arith.negf %449 : vector<8x64xf32>
    %451 = math.exp %450 : vector<8x64xf32>
    %cst_143 = arith.constant 1.000000e+00 : f32
    %452 = vector.broadcast %cst_143 : f32 to vector<8x64xf32>
    %453 = arith.addf %452, %451 : vector<8x64xf32>
    %454 = arith.divf %452, %453 : vector<8x64xf32>
    %455 = vector.extract_strided_slice %442 {offsets = [0, 128], sizes = [8, 64], strides = [1, 1]} : vector<8x256xf32> to vector<8x64xf32>
    %456 = vector.extract_strided_slice %442 {offsets = [0, 192], sizes = [8, 64], strides = [1, 1]} : vector<8x256xf32> to vector<8x64xf32>
    %457 = arith.mulf %448, %456 : vector<8x64xf32>
    %458 = arith.addf %455, %457 : vector<8x64xf32>
    %459 = math.tanh %458 : vector<8x64xf32>
    %cst_144 = arith.constant 1.000000e+00 : f32
    %460 = vector.broadcast %cst_144 : f32 to vector<8x64xf32>
    %461 = arith.subf %460, %454 : vector<8x64xf32>
    %462 = arith.mulf %461, %459 : vector<8x64xf32>
    %463 = arith.mulf %454, %407 : vector<8x64xf32>
    %464 = arith.addf %462, %463 : vector<8x64xf32>
    %cst_145 = arith.constant 0.000000e+00 : f32
    %465 = vector.broadcast %cst_145 : f32 to vector<8x64xf32>
    %466 = arith.cmpf oge, %464, %465 : vector<8x64xf32>
    %cst_146 = arith.constant 0.00999999977 : f32
    %467 = vector.broadcast %cst_146 : f32 to vector<8x64xf32>
    %468 = arith.mulf %467, %464 : vector<8x64xf32>
    %469 = arith.select %466, %464, %468 : vector<8x64xi1>, vector<8x64xf32>
    %c0_147 = arith.constant 0 : index
    %c0_148 = arith.constant 0 : index
    %470 = vector.load %arg1[%c0_147, %c0_148] : memref<8x64xf32, #tpu.memory_space<vmem>>, vector<8x64xf32>
    %471 = tpu.concatenate %469, %470 in 1 : vector<8x64xf32>, vector<8x64xf32> -> vector<8x128xf32>
    %c0_149 = arith.constant 0 : index
    %c0_150 = arith.constant 0 : index
    %472 = vector.load %arg6[%c0_149, %c0_150] : memref<128x256xf32, #tpu.memory_space<vmem>>, vector<128x256xf32>
    %cst_151 = arith.constant dense<0.000000e+00> : vector<8x256xf32>
    %473 = tpu.matmul %471, %472, %cst_151 {dimension_numbers = #tpu.dot_dimension_numbers<[1], [0], [0], [1], [0, 0, 1, 1], [], []>} : vector<8x128xf32>, vector<128x256xf32>, vector<8x256xf32> -> vector<8x256xf32>
    %c0_152 = arith.constant 0 : index
    %c0_153 = arith.constant 0 : index
    %474 = vector.load %arg7[%c0_152, %c0_153] : memref<1x256xf32, #tpu.memory_space<vmem>>, vector<1x256xf32>
    %475 = vector.broadcast %474 : vector<1x256xf32> to vector<8x256xf32>
    %476 = arith.addf %473, %475 : vector<8x256xf32>
    %cst_154 = arith.constant 0.000000e+00 : f32
    %477 = vector.broadcast %cst_154 : f32 to vector<8x256xf32>
    %478 = arith.cmpf oge, %476, %477 : vector<8x256xf32>
    %cst_155 = arith.constant 0.00999999977 : f32
    %479 = vector.broadcast %cst_155 : f32 to vector<8x256xf32>
    %480 = arith.mulf %479, %476 : vector<8x256xf32>
    %481 = arith.select %478, %476, %480 : vector<8x256xi1>, vector<8x256xf32>
    %c0_156 = arith.constant 0 : index
    %c0_157 = arith.constant 0 : index
    %482 = vector.load %arg8[%c0_156, %c0_157] : memref<256x128xf32, #tpu.memory_space<vmem>>, vector<256x128xf32>
    %cst_158 = arith.constant dense<0.000000e+00> : vector<8x128xf32>
    %483 = tpu.matmul %481, %482, %cst_158 {dimension_numbers = #tpu.dot_dimension_numbers<[1], [0], [0], [1], [0, 0, 1, 1], [], []>} : vector<8x256xf32>, vector<256x128xf32>, vector<8x128xf32> -> vector<8x128xf32>
    %c0_159 = arith.constant 0 : index
    %c0_160 = arith.constant 0 : index
    %484 = vector.load %arg9[%c0_159, %c0_160] : memref<1x128xf32, #tpu.memory_space<vmem>>, vector<1x128xf32>
    %485 = vector.broadcast %484 : vector<1x128xf32> to vector<8x128xf32>
    %486 = arith.addf %483, %485 : vector<8x128xf32>
    %cst_161 = arith.constant 0.000000e+00 : f32
    %487 = vector.broadcast %cst_161 : f32 to vector<8x128xf32>
    %488 = arith.cmpf oge, %486, %487 : vector<8x128xf32>
    %cst_162 = arith.constant 0.00999999977 : f32
    %489 = vector.broadcast %cst_162 : f32 to vector<8x128xf32>
    %490 = arith.mulf %489, %486 : vector<8x128xf32>
    %491 = arith.select %488, %486, %490 : vector<8x128xi1>, vector<8x128xf32>
    %c0_163 = arith.constant 0 : index
    %c0_164 = arith.constant 0 : index
    %492 = vector.load %arg10[%c0_163, %c0_164] : memref<128x64xf32, #tpu.memory_space<vmem>>, vector<128x64xf32>
    %cst_165 = arith.constant dense<0.000000e+00> : vector<8x64xf32>
    %493 = tpu.matmul %491, %492, %cst_165 {dimension_numbers = #tpu.dot_dimension_numbers<[1], [0], [0], [1], [0, 0, 1, 1], [], []>} : vector<8x128xf32>, vector<128x64xf32>, vector<8x64xf32> -> vector<8x64xf32>
    %c0_166 = arith.constant 0 : index
    %c0_167 = arith.constant 0 : index
    %494 = vector.load %arg11[%c0_166, %c0_167] : memref<1x64xf32, #tpu.memory_space<vmem>>, vector<1x64xf32>
    %495 = vector.broadcast %494 : vector<1x64xf32> to vector<8x64xf32>
    %496 = arith.addf %493, %495 : vector<8x64xf32>
    %cst_168 = arith.constant 0.000000e+00 : f32
    %497 = vector.broadcast %cst_168 : f32 to vector<8x64xf32>
    %498 = arith.cmpf oge, %496, %497 : vector<8x64xf32>
    %cst_169 = arith.constant 0.00999999977 : f32
    %499 = vector.broadcast %cst_169 : f32 to vector<8x64xf32>
    %500 = arith.mulf %499, %496 : vector<8x64xf32>
    %501 = arith.select %498, %496, %500 : vector<8x64xi1>, vector<8x64xf32>
    %c0_170 = arith.constant 0 : index
    %c0_171 = arith.constant 0 : index
    %502 = vector.load %arg12[%c0_170, %c0_171] : memref<64x32xf32, #tpu.memory_space<vmem>>, vector<64x32xf32>
    %cst_172 = arith.constant dense<0.000000e+00> : vector<8x32xf32>
    %503 = tpu.matmul %501, %502, %cst_172 {dimension_numbers = #tpu.dot_dimension_numbers<[1], [0], [0], [1], [0, 0, 1, 1], [], []>} : vector<8x64xf32>, vector<64x32xf32>, vector<8x32xf32> -> vector<8x32xf32>
    %c0_173 = arith.constant 0 : index
    %c0_174 = arith.constant 0 : index
    %504 = vector.load %arg13[%c0_173, %c0_174] : memref<1x32xf32, #tpu.memory_space<vmem>>, vector<1x32xf32>
    %505 = vector.broadcast %504 : vector<1x32xf32> to vector<8x32xf32>
    %506 = arith.addf %503, %505 : vector<8x32xf32>
    %cst_175 = arith.constant 0.000000e+00 : f32
    %507 = vector.broadcast %cst_175 : f32 to vector<8x32xf32>
    %508 = arith.cmpf oge, %506, %507 : vector<8x32xf32>
    %cst_176 = arith.constant 0.00999999977 : f32
    %509 = vector.broadcast %cst_176 : f32 to vector<8x32xf32>
    %510 = arith.mulf %509, %506 : vector<8x32xf32>
    %511 = arith.select %508, %506, %510 : vector<8x32xi1>, vector<8x32xf32>
    %c0_177 = arith.constant 0 : index
    %c0_178 = arith.constant 0 : index
    %512 = vector.load %arg14[%c0_177, %c0_178] : memref<1x32xf32, #tpu.memory_space<vmem>>, vector<1x32xf32>
    %513 = vector.broadcast %512 : vector<1x32xf32> to vector<8x32xf32>
    %514 = arith.mulf %511, %513 : vector<8x32xf32>
    %515 = vector.extract_strided_slice %514 {offsets = [0, 0], sizes = [8, 16], strides = [1, 1]} : vector<8x32xf32> to vector<8x16xf32>
    %cst_179 = arith.constant dense<0.000000e+00> : vector<8xf32>
    %516 = vector.multi_reduction <add>, %515, %cst_179 [1] : vector<8x16xf32> to vector<8xf32>
    %517 = vector.shape_cast %516 : vector<8xf32> to vector<8x1xf32>
    %518 = vector.extract_strided_slice %514 {offsets = [0, 16], sizes = [8, 16], strides = [1, 1]} : vector<8x32xf32> to vector<8x16xf32>
    %cst_180 = arith.constant dense<0.000000e+00> : vector<8xf32>
    %519 = vector.multi_reduction <add>, %518, %cst_180 [1] : vector<8x16xf32> to vector<8xf32>
    %520 = vector.shape_cast %519 : vector<8xf32> to vector<8x1xf32>
    %521 = tpu.concatenate %517, %520 in 1 : vector<8x1xf32>, vector<8x1xf32> -> vector<8x2xf32>
    %c0_181 = arith.constant 0 : index
    %c0_182 = arith.constant 0 : index
    %522 = vector.load %arg15[%c0_181, %c0_182] : memref<1x2xf32, #tpu.memory_space<vmem>>, vector<1x2xf32>
    %523 = vector.broadcast %522 : vector<1x2xf32> to vector<8x2xf32>
    %524 = arith.addf %521, %523 : vector<8x2xf32>
    %c0_183 = arith.constant 0 : index
    %c0_184 = arith.constant 0 : index
    %525 = vector.load %arg16[%c0_183, %c0_184] : memref<8x2xf32, #tpu.memory_space<vmem>>, vector<8x2xf32>
    tpu.vector_store %arg16[%c0_183, %c0_184], %524 {strides = array<i32>} : memref<8x2xf32, #tpu.memory_space<vmem>>, vector<8x2xf32>,
    return
  }
}

</mosaic_0001>

<llo_original>
// kernel: double_gru_critic_forward.1
$region0: #{double_gru_critic_forward.1}
  #allocation0 [shape = 'u32[]', space=smem, size = 0x4, offset = 0x4, fixed_abs, tag = 'smem constant byte address 0x4 - core index']
  #allocation1 [shape = 'u32[144,128]{1,0:T(1,128)}', space=vmem, size = 0x12000, scoped, tag = 'internal scratch']
  #allocation2 [shape = 'f32[64,192]{1,0:T(8,128)}', space=vmem, size = 0x10000, scoped, tag = 'scratch operand']
  %s0 = inlined_call_operand.vmem [shape: f32[64,16], index: 0, kind: input, shape index: {}]
  %s1 = inlined_call_operand.vmem [shape: f32[8,64], index: 1, kind: input, shape index: {}]
  %s2 = inlined_call_operand.vmem [shape: f32[80,192], index: 2, kind: input, shape index: {}]
  %s3 = inlined_call_operand.vmem [shape: f32[2,192], index: 3, kind: input, shape index: {}]
  %s4 = inlined_call_operand.vmem [shape: f32[128,256], index: 4, kind: input, shape index: {}]
  %s5 = inlined_call_operand.vmem [shape: f32[1,256], index: 5, kind: input, shape index: {}]
  %s6 = inlined_call_operand.vmem [shape: f32[128,256], index: 6, kind: input, shape index: {}]
  %s7 = inlined_call_operand.vmem [shape: f32[1,256], index: 7, kind: input, shape index: {}]
  %s8 = inlined_call_operand.vmem [shape: f32[256,128], index: 8, kind: input, shape index: {}]
  %s9 = inlined_call_operand.vmem [shape: f32[1,128], index: 9, kind: input, shape index: {}]
  %s10 = inlined_call_operand.vmem [shape: f32[128,64], index: 10, kind: input, shape index: {}]
  %s11 = inlined_call_operand.vmem [shape: f32[1,64], index: 11, kind: input, shape index: {}]
  %s12 = inlined_call_operand.vmem [shape: f32[64,32], index: 12, kind: input, shape index: {}]
  %s13 = inlined_call_operand.vmem [shape: f32[1,32], index: 13, kind: input, shape index: {}]
  %s14 = inlined_call_operand.vmem [shape: f32[1,32], index: 14, kind: input, shape index: {}]
  %s15 = inlined_call_operand.vmem [shape: f32[1,2], index: 15, kind: input, shape index: {}]
  %s16 = inlined_call_operand.vmem [shape: f32[8,2], index: 16, kind: output, shape index: {}]
  %s17 = sld [smem:[#allocation0]]
  $region74: #{double_gru_critic_forward.1} parent=0
    _
  %s19 = ssub.s32 1, %s17
  %s20 = scalar_select 0, %s19, %s17
  // Predicated region
  $region2: #{double_gru_critic_forward.1} parent=0 // pred_check
    _
  $region3: #{double_gru_critic_forward.1} parent=0 // pred_check_branch
    %22 = sbr.rel (0) target = $region5
  $region4: #{double_gru_critic_forward.1} parent=0 // pred_region
    _
  $region5: #{double_gru_critic_forward.1} parent=0 // pred_fallthru
    _
  // Predicated region
  $region6: #{double_gru_critic_forward.1} parent=0 // pred_check
    _
  $region7: #{double_gru_critic_forward.1} parent=0 // pred_check_branch
    %24 = sbr.rel (0) target = $region9
  $region8: #{double_gru_critic_forward.1} parent=0 // pred_region
    _
  $region9: #{double_gru_critic_forward.1} parent=0 // pred_fallthru
    _
  // Predicated region
  $region10: #{double_gru_critic_forward.1} parent=0 // pred_check
    _
  $region11: #{double_gru_critic_forward.1} parent=0 // pred_check_branch
    %26 = sbr.rel (0) target = $region13
  $region12: #{double_gru_critic_forward.1} parent=0 // pred_region
    _
  $region13: #{double_gru_critic_forward.1} parent=0 // pred_fallthru
    _
  // Predicated region
  $region14: #{double_gru_critic_forward.1} parent=0 // pred_check
    _
  $region15: #{double_gru_critic_forward.1} parent=0 // pred_check_branch
    %28 = sbr.rel (0) target = $region17
  $region16: #{double_gru_critic_forward.1} parent=0 // pred_region
    _
  $region17: #{double_gru_critic_forward.1} parent=0 // pred_fallthru
    _
  // Predicated region
  $region18: #{double_gru_critic_forward.1} parent=0 // pred_check
    _
  $region19: #{double_gru_critic_forward.1} parent=0 // pred_check_branch
    %30 = sbr.rel (0) target = $region21
  $region20: #{double_gru_critic_forward.1} parent=0 // pred_region
    _
  $region21: #{double_gru_critic_forward.1} parent=0 // pred_fallthru
    _
  // Predicated region
  $region22: #{double_gru_critic_forward.1} parent=0 // pred_check
    _
  $region23: #{double_gru_critic_forward.1} parent=0 // pred_check_branch
    %32 = sbr.rel (0) target = $region25
  $region24: #{double_gru_critic_forward.1} parent=0 // pred_region
    _
  $region25: #{double_gru_critic_forward.1} parent=0 // pred_fallthru
    _
  // Predicated region
  $region26: #{double_gru_critic_forward.1} parent=0 // pred_check
    _
  $region27: #{double_gru_critic_forward.1} parent=0 // pred_check_branch
    %34 = sbr.rel (0) target = $region29
  $region28: #{double_gru_critic_forward.1} parent=0 // pred_region
    _
  $region29: #{double_gru_critic_forward.1} parent=0 // pred_fallthru
    _
  // Predicated region
  $region30: #{double_gru_critic_forward.1} parent=0 // pred_check
    _
  $region31: #{double_gru_critic_forward.1} parent=0 // pred_check_branch
    %36 = sbr.rel (0) target = $region33
  $region32: #{double_gru_critic_forward.1} parent=0 // pred_region
    _
  $region33: #{double_gru_critic_forward.1} parent=0 // pred_fallthru
    _
  // Predicated region
  $region34: #{double_gru_critic_forward.1} parent=0 // pred_check
    _
  $region35: #{double_gru_critic_forward.1} parent=0 // pred_check_branch
    %38 = sbr.rel (0) target = $region37
  $region36: #{double_gru_critic_forward.1} parent=0 // pred_region
    _
  $region37: #{double_gru_critic_forward.1} parent=0 // pred_fallthru
    _
  // Predicated region
  $region38: #{double_gru_critic_forward.1} parent=0 // pred_check
    _
  $region39: #{double_gru_critic_forward.1} parent=0 // pred_check_branch
    %40 = sbr.rel (0) target = $region41
  $region40: #{double_gru_critic_forward.1} parent=0 // pred_region
    _
  $region41: #{double_gru_critic_forward.1} parent=0 // pred_fallthru
    _
  // Predicated region
  $region42: #{double_gru_critic_forward.1} parent=0 // pred_check
    _
  $region43: #{double_gru_critic_forward.1} parent=0 // pred_check_branch
    %42 = sbr.rel (0) target = $region45
  $region44: #{double_gru_critic_forward.1} parent=0 // pred_region
    _
  $region45: #{double_gru_critic_forward.1} parent=0 // pred_fallthru
    _
  // Predicated region
  $region46: #{double_gru_critic_forward.1} parent=0 // pred_check
    _
  $region47: #{double_gru_critic_forward.1} parent=0 // pred_check_branch
    %44 = sbr.rel (0) target = $region49
  $region48: #{double_gru_critic_forward.1} parent=0 // pred_region
    _
  $region49: #{double_gru_critic_forward.1} parent=0 // pred_fallthru
    _
  // Predicated region
  $region50: #{double_gru_critic_forward.1} parent=0 // pred_check
    _
  $region51: #{double_gru_critic_forward.1} parent=0 // pred_check_branch
    %46 = sbr.rel (0) target = $region53
  $region52: #{double_gru_critic_forward.1} parent=0 // pred_region
    _
  $region53: #{double_gru_critic_forward.1} parent=0 // pred_fallthru
    _
  // Predicated region
  $region54: #{double_gru_critic_forward.1} parent=0 // pred_check
    _
  $region55: #{double_gru_critic_forward.1} parent=0 // pred_check_branch
    %48 = sbr.rel (0) target = $region57
  $region56: #{double_gru_critic_forward.1} parent=0 // pred_region
    _
  $region57: #{double_gru_critic_forward.1} parent=0 // pred_fallthru
    _
  // Predicated region
  $region58: #{double_gru_critic_forward.1} parent=0 // pred_check
    _
  $region59: #{double_gru_critic_forward.1} parent=0 // pred_check_branch
    %50 = sbr.rel (0) target = $region61
  $region60: #{double_gru_critic_forward.1} parent=0 // pred_region
    _
  $region61: #{double_gru_critic_forward.1} parent=0 // pred_fallthru
    _
  // Predicated region
  $region62: #{double_gru_critic_forward.1} parent=0 // pred_check
    _
  $region63: #{double_gru_critic_forward.1} parent=0 // pred_check_branch
    %52 = sbr.rel (0) target = $region65
  $region64: #{double_gru_critic_forward.1} parent=0 // pred_region
    _
  $region65: #{double_gru_critic_forward.1} parent=0 // pred_fallthru
    _
  %v53 = vld [vmem:[%s0] sm:$0xff]
  %v54 = vld [vmem:[%s0 + $0x8] sm:$0xff]
  %v55 = vld [vmem:[%s0 + $0x10] sm:$0xff]
  %v56 = vld [vmem:[%s0 + $0x18] sm:$0xff]
  %v57 = vld [vmem:[%s0 + $0x20] sm:$0xff]
  %v58 = vld [vmem:[%s0 + $0x28] sm:$0xff]
  %v59 = vld [vmem:[%s0 + $0x30] sm:$0xff]
  %v60 = vld [vmem:[%s0 + $0x38] sm:$0xff]
  %v61 = vld [vmem:[%s2] sm:$0xff]
  %v62 = vld [vmem:[%s2 + $0x8] sm:$0xff]
  %v63 = vld [vmem:[%s2 + $0x10] sm:$0xff]
  %v64 = vld [vmem:[%s2 + $0x18] sm:$0xff]
  %v65 = vld [vmem:[%s3] ss:$2 sm:$0x3]
  %v67 = vlaneseq
  %v68 = vshrl.u32 %v67, 7
  %v69 = vsub.s32 0, %v68
  %v70 = vrot.slane %v65, %v69
  %v71 = vlaneseq
  %v72 = vshrl.u32 %v71, 7
  %v73 = vsub.s32 1, %v72
  %v74 = vrot.slane %v65, %v73
  %vm77 = vcmask 130048
  %v79 = vsel %vm77, %v53, 0
  %v82 = vsel %vm77, %v54, 0
  %v85 = vsel %vm77, %v55, 0
  %v88 = vsel %vm77, %v56, 0
  %v91 = vsel %vm77, %v57, 0
  %v94 = vsel %vm77, %v58, 0
  %v97 = vsel %vm77, %v59, 0
  %v100 = vsel %vm77, %v60, 0
  %102 = vmatprep.subr.mxu0 %v62
  %103 = vmatpush1.msra.mxu0 %v61
  %104 = vmatprep.subr.mxu0 %v64
  %105 = vmatpush1.msra.mxu0 %v63
  %106 = vmatprep.subr.mxu0 0.0
  %107 = vmatpush1.msra.mxu0 0.0
  %108 = vmatprep.subr.mxu0 0.0
  %109 = vmatpush1.msra.mxu0 0.0
  %110 = vmatprep.subr.mxu0 0.0
  %111 = vmatpush1.msra.mxu0 0.0
  %112 = vmatprep.subr.mxu0 0.0
  %113 = vmatpush1.msra.mxu0 0.0
  %114 = vmatprep.subr.mxu0 0.0
  %115 = vmatpush1.msra.mxu0 0.0
  %116 = vmatprep.subr.mxu0 0.0
  %117 = vmatpush1.msra.mxu0 0.0
  %118 = vmatprep.subr.mxu0 0.0
  %119 = vmatpush1.msra.mxu0 0.0
  %120 = vmatprep.subr.mxu0 0.0
  %121 = vmatpush1.msra.mxu0 0.0
  %122 = vmatprep.subr.mxu0 0.0
  %123 = vmatpush1.msra.mxu0 0.0
  %124 = vmatprep.subr.mxu0 0.0
  %125 = vmatpush1.msra.mxu0 0.0
  %126 = vmatprep.subr.mxu0 0.0
  %127 = vmatpush1.msra.mxu0 0.0
  %128 = vmatprep.subr.mxu0 0.0
  %129 = vmatpush1.msra.mxu0 0.0
  %130 = vmatprep.subr.mxu0 0.0
  %131 = vmatpush1.msra.mxu0 0.0
  %132 = vmatprep.subr.mxu0 0.0
  %133 = vmatpush1.msra.mxu0 0.0
  %134 = vmatprep.subr.mxu0 0.0
  %135 = vmatpush1.msra.mxu0 0.0
  %136 = vmatprep.subr.mxu0 0.0
  %137 = vmatpush1.msra.mxu0 0.0
  %138 = vmatprep.subr.mxu0 0.0
  %139 = vmatpush1.msra.mxu0 0.0
  %140 = vmatprep.subr.mxu0 0.0
  %141 = vmatpush1.msra.mxu0 0.0
  %142 = vmatprep.subr.mxu0 0.0
  %143 = vmatpush1.msra.mxu0 0.0
  %144 = vmatprep.subr.mxu0 0.0
  %145 = vmatpush1.msra.mxu0 0.0
  %146 = vmatprep.subr.mxu0 0.0
  %147 = vmatpush1.msra.mxu0 0.0
  %148 = vmatprep.subr.mxu0 0.0
  %149 = vmatpush1.msra.mxu0 0.0
  %150 = vmatprep.subr.mxu0 0.0
  %151 = vmatpush1.msra.mxu0 0.0
  %152 = vmatprep.subr.mxu0 0.0
  %153 = vmatpush1.msra.mxu0 0.0
  %154 = vmatprep.subr.mxu0 0.0
  %155 = vmatpush1.msra.mxu0 0.0
  %156 = vmatprep.subr.mxu0 0.0
  %157 = vmatpush1.msra.mxu0 0.0
  %158 = vmatprep.subr.mxu0 0.0
  %159 = vmatpush1.msra.mxu0 0.0
  %160 = vmatprep.subr.mxu0 0.0
  %161 = vmatpush1.msra.mxu0 0.0
  %162 = vmatprep.subr.mxu0 0.0
  %163 = vmatpush1.msra.mxu0 0.0
  %164 = vmatprep.subr.mxu0 0.0
  %165 = vmatpush1.msra.mxu0 0.0
  %166 = vmatprep.mubr.f32.mxu0 0.0
  %167 = vmatmul.mubr.f32.gmra.mrb[0].mxu0 %v79
  %v168 = vpop.f32.mrb[0].mxu0
  %v169 = vadd.f32 %v70, %v168
  %v170 = vpop.f32.mrb[0].mxu0
  %v171 = vadd.f32 %v74, %v170
  %172 = vmatprep.mubr.f32.mxu0 0.0
  %173 = vmatmul.mubr.f32.gmra.mrb[0].mxu0 %v82
  %v174 = vpop.f32.mrb[0].mxu0
  %v175 = vadd.f32 %v70, %v174
  %v176 = vpop.f32.mrb[0].mxu0
  %v177 = vadd.f32 %v74, %v176
  %178 = vmatprep.mubr.f32.mxu0 0.0
  %179 = vmatmul.mubr.f32.gmra.mrb[0].mxu0 %v85
  %v180 = vpop.f32.mrb[0].mxu0
  %v181 = vadd.f32 %v70, %v180
  %v182 = vpop.f32.mrb[0].mxu0
  %v183 = vadd.f32 %v74, %v182
  %184 = vmatprep.mubr.f32.mxu0 0.0
  %185 = vmatmul.mubr.f32.gmra.mrb[0].mxu0 %v88
  %v186 = vpop.f32.mrb[0].mxu0
  %v187 = vadd.f32 %v70, %v186
  %v188 = vpop.f32.mrb[0].mxu0
  %v189 = vadd.f32 %v74, %v188
  %190 = vmatprep.mubr.f32.mxu0 0.0
  %191 = vmatmul.mubr.f32.gmra.mrb[0].mxu0 %v91
  %v192 = vpop.f32.mrb[0].mxu0
  %v193 = vadd.f32 %v70, %v192
  %v194 = vpop.f32.mrb[0].mxu0
  %v195 = vadd.f32 %v74, %v194
  %196 = vmatprep.mubr.f32.mxu0 0.0
  %197 = vmatmul.mubr.f32.gmra.mrb[0].mxu0 %v94
  %v198 = vpop.f32.mrb[0].mxu0
  %v199 = vadd.f32 %v70, %v198
  %v200 = vpop.f32.mrb[0].mxu0
  %v201 = vadd.f32 %v74, %v200
  %202 = vmatprep.mubr.f32.mxu0 0.0
  %203 = vmatmul.mubr.f32.gmra.mrb[0].mxu0 %v97
  %v204 = vpop.f32.mrb[0].mxu0
  %v205 = vadd.f32 %v70, %v204
  %v206 = vpop.f32.mrb[0].mxu0
  %v207 = vadd.f32 %v74, %v206
  %208 = vmatprep.mubr.f32.mxu0 0.0
  %209 = vmatmul.mubr.f32.gmra.mrb[0].mxu0 %v100
  %v210 = vpop.f32.mrb[0].mxu0
  %v211 = vadd.f32 %v70, %v210
  %v212 = vpop.f32.mrb[0].mxu0
  %v213 = vadd.f32 %v74, %v212
  %214 = vdwg.mxu0
  %215 = vst [vmem:[#allocation2] sm:$0xff] %v169
  %vm216 = vcmask 523264
  %217 = vst.msk [vmem:[#allocation2 + $0x8] sm:$0xff] %vm216, %v171
  %218 = vst [vmem:[#allocation2 + $0x10] sm:$0xff] %v175
  %219 = vst.msk [vmem:[#allocation2 + $0x18] sm:$0xff] %vm216, %v177
  %220 = vst [vmem:[#allocation2 + $0x20] sm:$0xff] %v181
  %221 = vst.msk [vmem:[#allocation2 + $0x28] sm:$0xff] %vm216, %v183
  %222 = vst [vmem:[#allocation2 + $0x30] sm:$0xff] %v187
  %223 = vst.msk [vmem:[#allocation2 + $0x38] sm:$0xff] %vm216, %v189
  %224 = vst [vmem:[#allocation2 + $0x40] sm:$0xff] %v193
  %225 = vst.msk [vmem:[#allocation2 + $0x48] sm:$0xff] %vm216, %v195
  %226 = vst [vmem:[#allocation2 + $0x50] sm:$0xff] %v199
  %227 = vst.msk [vmem:[#allocation2 + $0x58] sm:$0xff] %vm216, %v201
  %228 = vst [vmem:[#allocation2 + $0x60] sm:$0xff] %v205
  %229 = vst.msk [vmem:[#allocation2 + $0x68] sm:$0xff] %vm216, %v207
  %230 = vst [vmem:[#allocation2 + $0x70] sm:$0xff] %v211
  %231 = vst.msk [vmem:[#allocation2 + $0x78] sm:$0xff] %vm216, %v213
  %v232 = vld [vmem:[#allocation2] sm:$0xff]
  %v233 = vld [vmem:[#allocation2 + $0x8] sm:$0xff]
  %v234 = vld [vmem:[%s2 + $0x20] sm:$0xff]
  %v235 = vld [vmem:[%s2 + $0x28] sm:$0xff]
  %v236 = vld [vmem:[%s2 + $0x30] sm:$0xff]
  %v237 = vld [vmem:[%s2 + $0x38] sm:$0xff]
  %v238 = vld [vmem:[%s2 + $0x40] sm:$0xff]
  %v239 = vld [vmem:[%s2 + $0x48] sm:$0xff]
  %v240 = vld [vmem:[%s2 + $0x50] sm:$0xff]
  %v241 = vld [vmem:[%s2 + $0x58] sm:$0xff]
  %v242 = vld [vmem:[%s2 + $0x60] sm:$0xff]
  %v243 = vld [vmem:[%s2 + $0x68] sm:$0xff]
  %v244 = vld [vmem:[%s2 + $0x70] sm:$0xff]
  %v245 = vld [vmem:[%s2 + $0x78] sm:$0xff]
  %v246 = vld [vmem:[%s2 + $0x80] sm:$0xff]
  %v247 = vld [vmem:[%s2 + $0x88] sm:$0xff]
  %v248 = vld [vmem:[%s2 + $0x90] sm:$0xff]
  %v249 = vld [vmem:[%s2 + $0x98] sm:$0xff]
  %s250 = scalar_lea.vmem %s3, 1
  %v251 = vld [vmem:[%s250] ss:$2 sm:$0x3]
  %v253 = vlaneseq
  %v254 = vshrl.u32 %v253, 7
  %v255 = vsub.s32 0, %v254
  %v256 = vrot.slane %v251, %v255
  %v257 = vlaneseq
  %v258 = vshrl.u32 %v257, 7
  %v259 = vsub.s32 1, %v258
  %v260 = vrot.slane %v251, %v259
  %v264 = vsel %vm216, 0.0, 0
  %266 = vmatprep.subr.mxu0 %v235
  %267 = vmatpush1.msra.mxu0 %v234
  %268 = vmatprep.subr.mxu0 %v237
  %269 = vmatpush1.msra.mxu0 %v236
  %270 = vmatprep.subr.mxu0 %v239
  %271 = vmatpush1.msra.mxu0 %v238
  %272 = vmatprep.subr.mxu0 %v241
  %273 = vmatpush1.msra.mxu0 %v240
  %274 = vmatprep.subr.mxu0 %v243
  %275 = vmatpush1.msra.mxu0 %v242
  %276 = vmatprep.subr.mxu0 %v245
  %277 = vmatpush1.msra.mxu0 %v244
  %278 = vmatprep.subr.mxu0 %v247
  %279 = vmatpush1.msra.mxu0 %v246
  %280 = vmatprep.subr.mxu0 %v249
  %281 = vmatpush1.msra.mxu0 %v248
  %282 = vmatprep.subr.mxu0 0.0
  %283 = vmatpush1.msra.mxu0 0.0
  %284 = vmatprep.subr.mxu0 0.0
  %285 = vmatpush1.msra.mxu0 0.0
  %286 = vmatprep.subr.mxu0 0.0
  %287 = vmatpush1.msra.mxu0 0.0
  %288 = vmatprep.subr.mxu0 0.0
  %289 = vmatpush1.msra.mxu0 0.0
  %290 = vmatprep.subr.mxu0 0.0
  %291 = vmatpush1.msra.mxu0 0.0
  %292 = vmatprep.subr.mxu0 0.0
  %293 = vmatpush1.msra.mxu0 0.0
  %294 = vmatprep.subr.mxu0 0.0
  %295 = vmatpush1.msra.mxu0 0.0
  %296 = vmatprep.subr.mxu0 0.0
  %297 = vmatpush1.msra.mxu0 0.0
  %298 = vmatprep.subr.mxu0 0.0
  %299 = vmatpush1.msra.mxu0 0.0
  %300 = vmatprep.subr.mxu0 0.0
  %301 = vmatpush1.msra.mxu0 0.0
  %302 = vmatprep.subr.mxu0 0.0
  %303 = vmatpush1.msra.mxu0 0.0
  %304 = vmatprep.subr.mxu0 0.0
  %305 = vmatpush1.msra.mxu0 0.0
  %306 = vmatprep.subr.mxu0 0.0
  %307 = vmatpush1.msra.mxu0 0.0
  %308 = vmatprep.subr.mxu0 0.0
  %309 = vmatpush1.msra.mxu0 0.0
  %310 = vmatprep.subr.mxu0 0.0
  %311 = vmatpush1.msra.mxu0 0.0
  %312 = vmatprep.subr.mxu0 0.0
  %313 = vmatpush1.msra.mxu0 0.0
  %314 = vmatprep.subr.mxu0 0.0
  %315 = vmatpush1.msra.mxu0 0.0
  %316 = vmatprep.subr.mxu0 0.0
  %317 = vmatpush1.msra.mxu0 0.0
  %318 = vmatprep.subr.mxu0 0.0
  %319 = vmatpush1.msra.mxu0 0.0
  %320 = vmatprep.subr.mxu0 0.0
  %321 = vmatpush1.msra.mxu0 0.0
  %322 = vmatprep.subr.mxu0 0.0
  %323 = vmatpush1.msra.mxu0 0.0
  %324 = vmatprep.subr.mxu0 0.0
  %325 = vmatpush1.msra.mxu0 0.0
  %326 = vmatprep.subr.mxu0 0.0
  %327 = vmatpush1.msra.mxu0 0.0
  %328 = vmatprep.subr.mxu0 0.0
  %329 = vmatpush1.msra.mxu0 0.0
  %330 = vmatprep.mubr.f32.mxu0 0.0
  %331 = vmatmul.mubr.f32.gmra.mrb[0].mxu0 %v264
  %v332 = vpop.f32.mrb[0].mxu0
  %v333 = vadd.f32 %v256, %v332
  %v334 = vpop.f32.mrb[0].mxu0
  %v335 = vadd.f32 %v260, %v334
  %336 = vdwg.mxu0
  %v337 = vadd.f32 %v232, %v333
  %v338 = vxor.u32 %v337, 2147483648
  %v339 = vmul.f32 %v338, 1.442695
  %v340 = vpow.pop %v339
  %v341 = vadd.f32 %v340, 1.0
  %v342 = vrcp.pop %v341
  %v343 = vmul.f32 1.0, %v342
  %v344 = vmul.f32 %v343, %v335
  %v345 = vadd.f32 %v233, %v344
  %v346 = vtanh.pop %v345
  %v347 = vsub.f32 1.0, %v343
  %349 = vrot.lane.b32.xlu0 %v346, 64
  %v350 = vpop.permute.xlu0 %349
  %v352 = vmul.f32 %v347, %v350
  %v353 = vmul.f32 %v343, 0.0
  %v354 = vadd.f32 %v352, %v353
  %356 = vrot.lane.b32.xlu0 %v354, 64
  %v357 = vpop.permute.xlu0 %356
  %v359 = vsel %vm216, %v357, 0.0
  %v360 = vld [vmem:[%s4] sm:$0xff]
  %v361 = vld [vmem:[%s4 + $0x8] sm:$0xff]
  %v362 = vld [vmem:[%s4 + $0x10] sm:$0xff]
  %v363 = vld [vmem:[%s4 + $0x18] sm:$0xff]
  %v364 = vld [vmem:[%s4 + $0x20] sm:$0xff]
  %v365 = vld [vmem:[%s4 + $0x28] sm:$0xff]
  %v366 = vld [vmem:[%s4 + $0x30] sm:$0xff]
  %v367 = vld [vmem:[%s4 + $0x38] sm:$0xff]
  %v368 = vld [vmem:[%s4 + $0x40] sm:$0xff]
  %v369 = vld [vmem:[%s4 + $0x48] sm:$0xff]
  %v370 = vld [vmem:[%s4 + $0x50] sm:$0xff]
  %v371 = vld [vmem:[%s4 + $0x58] sm:$0xff]
  %v372 = vld [vmem:[%s4 + $0x60] sm:$0xff]
  %v373 = vld [vmem:[%s4 + $0x68] sm:$0xff]
  %v374 = vld [vmem:[%s4 + $0x70] sm:$0xff]
  %v375 = vld [vmem:[%s4 + $0x78] sm:$0xff]
  %v376 = vld [vmem:[%s4 + $0x80] sm:$0xff]
  %v377 = vld [vmem:[%s4 + $0x88] sm:$0xff]
  %v378 = vld [vmem:[%s4 + $0x90] sm:$0xff]
  %v379 = vld [vmem:[%s4 + $0x98] sm:$0xff]
  %v380 = vld [vmem:[%s4 + $0xa0] sm:$0xff]
  %v381 = vld [vmem:[%s4 + $0xa8] sm:$0xff]
  %v382 = vld [vmem:[%s4 + $0xb0] sm:$0xff]
  %v383 = vld [vmem:[%s4 + $0xb8] sm:$0xff]
  %v384 = vld [vmem:[%s4 + $0xc0] sm:$0xff]
  %v385 = vld [vmem:[%s4 + $0xc8] sm:$0xff]
  %v386 = vld [vmem:[%s4 + $0xd0] sm:$0xff]
  %v387 = vld [vmem:[%s4 + $0xd8] sm:$0xff]
  %v388 = vld [vmem:[%s4 + $0xe0] sm:$0xff]
  %v389 = vld [vmem:[%s4 + $0xe8] sm:$0xff]
  %v390 = vld [vmem:[%s4 + $0xf0] sm:$0xff]
  %v391 = vld [vmem:[%s4 + $0xf8] sm:$0xff]
  %v392 = vld [vmem:[%s5] sm:$0x3]
  %v394 = vlaneseq
  %v395 = vshrl.u32 %v394, 7
  %v396 = vsub.s32 0, %v395
  %v397 = vrot.slane %v392, %v396
  %v398 = vlaneseq
  %v399 = vshrl.u32 %v398, 7
  %v400 = vsub.s32 1, %v399
  %v401 = vrot.slane %v392, %v400
  %404 = vmatprep.subr.mxu0 %v361
  %405 = vmatpush1.msra.mxu0 %v360
  %406 = vmatprep.subr.mxu0 %v363
  %407 = vmatpush1.msra.mxu0 %v362
  %408 = vmatprep.subr.mxu0 %v365
  %409 = vmatpush1.msra.mxu0 %v364
  %410 = vmatprep.subr.mxu0 %v367
  %411 = vmatpush1.msra.mxu0 %v366
  %412 = vmatprep.subr.mxu0 %v369
  %413 = vmatpush1.msra.mxu0 %v368
  %414 = vmatprep.subr.mxu0 %v371
  %415 = vmatpush1.msra.mxu0 %v370
  %416 = vmatprep.subr.mxu0 %v373
  %417 = vmatpush1.msra.mxu0 %v372
  %418 = vmatprep.subr.mxu0 %v375
  %419 = vmatpush1.msra.mxu0 %v374
  %420 = vmatprep.subr.mxu0 %v377
  %421 = vmatpush1.msra.mxu0 %v376
  %422 = vmatprep.subr.mxu0 %v379
  %423 = vmatpush1.msra.mxu0 %v378
  %424 = vmatprep.subr.mxu0 %v381
  %425 = vmatpush1.msra.mxu0 %v380
  %426 = vmatprep.subr.mxu0 %v383
  %427 = vmatpush1.msra.mxu0 %v382
  %428 = vmatprep.subr.mxu0 %v385
  %429 = vmatpush1.msra.mxu0 %v384
  %430 = vmatprep.subr.mxu0 %v387
  %431 = vmatpush1.msra.mxu0 %v386
  %432 = vmatprep.subr.mxu0 %v389
  %433 = vmatpush1.msra.mxu0 %v388
  %434 = vmatprep.subr.mxu0 %v391
  %435 = vmatpush1.msra.mxu0 %v390
  %436 = vmatprep.subr.mxu0 0.0
  %437 = vmatpush1.msra.mxu0 0.0
  %438 = vmatprep.subr.mxu0 0.0
  %439 = vmatpush1.msra.mxu0 0.0
  %440 = vmatprep.subr.mxu0 0.0
  %441 = vmatpush1.msra.mxu0 0.0
  %442 = vmatprep.subr.mxu0 0.0
  %443 = vmatpush1.msra.mxu0 0.0
  %444 = vmatprep.subr.mxu0 0.0
  %445 = vmatpush1.msra.mxu0 0.0
  %446 = vmatprep.subr.mxu0 0.0
  %447 = vmatpush1.msra.mxu0 0.0
  %448 = vmatprep.subr.mxu0 0.0
  %449 = vmatpush1.msra.mxu0 0.0
  %450 = vmatprep.subr.mxu0 0.0
  %451 = vmatpush1.msra.mxu0 0.0
  %452 = vmatprep.subr.mxu0 0.0
  %453 = vmatpush1.msra.mxu0 0.0
  %454 = vmatprep.subr.mxu0 0.0
  %455 = vmatpush1.msra.mxu0 0.0
  %456 = vmatprep.subr.mxu0 0.0
  %457 = vmatpush1.msra.mxu0 0.0
  %458 = vmatprep.subr.mxu0 0.0
  %459 = vmatpush1.msra.mxu0 0.0
  %460 = vmatprep.subr.mxu0 0.0
  %461 = vmatpush1.msra.mxu0 0.0
  %462 = vmatprep.subr.mxu0 0.0
  %463 = vmatpush1.msra.mxu0 0.0
  %464 = vmatprep.subr.mxu0 0.0
  %465 = vmatpush1.msra.mxu0 0.0
  %466 = vmatprep.subr.mxu0 0.0
  %467 = vmatpush1.msra.mxu0 0.0
  %468 = vmatprep.mubr.f32.mxu0 0.0
  %469 = vmatmul.mubr.f32.gmra.mrb[0].mxu0 %v359
  %v470 = vpop.f32.mrb[0].mxu0
  %v471 = vadd.f32 %v397, %v470
  %v472 = vpop.f32.mrb[0].mxu0
  %v473 = vadd.f32 %v401, %v472
  %474 = vdwg.mxu0
  %v475 = vxor.u32 %v471, 2147483648
  %v476 = vmul.f32 %v475, 1.442695
  %v477 = vpow.pop %v476
  %v478 = vadd.f32 %v477, 1.0
  %v479 = vrcp.pop %v478
  %v480 = vmul.f32 1.0, %v479
  %482 = vrot.lane.b32.xlu0 %v473, 64
  %v483 = vpop.permute.xlu0 %482
  %v485 = vmul.f32 %v480, %v483
  %v486 = vadd.f32 %v473, %v485
  %v487 = vtanh.pop %v486
  %v488 = vsub.f32 1.0, %v480
  %490 = vrot.lane.b32.xlu0 %v487, 64
  %v491 = vpop.permute.xlu0 %490
  %v493 = vmul.f32 %v488, %v491
  %v494 = vmul.f32 %v480, 0.0
  %v495 = vadd.f32 %v493, %v494
  %v496 = vld [vmem:[#allocation2 + $0x10] sm:$0xff]
  %v497 = vld [vmem:[#allocation2 + $0x18] sm:$0xff]
  %v498 = vsel %vm216, %v357, 0
  %500 = vmatprep.subr.mxu0 %v235
  %501 = vmatpush1.msra.mxu0 %v234
  %502 = vmatprep.subr.mxu0 %v237
  %503 = vmatpush1.msra.mxu0 %v236
  %504 = vmatprep.subr.mxu0 %v239
  %505 = vmatpush1.msra.mxu0 %v238
  %506 = vmatprep.subr.mxu0 %v241
  %507 = vmatpush1.msra.mxu0 %v240
  %508 = vmatprep.subr.mxu0 %v243
  %509 = vmatpush1.msra.mxu0 %v242
  %510 = vmatprep.subr.mxu0 %v245
  %511 = vmatpush1.msra.mxu0 %v244
  %512 = vmatprep.subr.mxu0 %v247
  %513 = vmatpush1.msra.mxu0 %v246
  %514 = vmatprep.subr.mxu0 %v249
  %515 = vmatpush1.msra.mxu0 %v248
  %516 = vmatprep.subr.mxu0 0.0
  %517 = vmatpush1.msra.mxu0 0.0
  %518 = vmatprep.subr.mxu0 0.0
  %519 = vmatpush1.msra.mxu0 0.0
  %520 = vmatprep.subr.mxu0 0.0
  %521 = vmatpush1.msra.mxu0 0.0
  %522 = vmatprep.subr.mxu0 0.0
  %523 = vmatpush1.msra.mxu0 0.0
  %524 = vmatprep.subr.mxu0 0.0
  %525 = vmatpush1.msra.mxu0 0.0
  %526 = vmatprep.subr.mxu0 0.0
  %527 = vmatpush1.msra.mxu0 0.0
  %528 = vmatprep.subr.mxu0 0.0
  %529 = vmatpush1.msra.mxu0 0.0
  %530 = vmatprep.subr.mxu0 0.0
  %531 = vmatpush1.msra.mxu0 0.0
  %532 = vmatprep.subr.mxu0 0.0
  %533 = vmatpush1.msra.mxu0 0.0
  %534 = vmatprep.subr.mxu0 0.0
  %535 = vmatpush1.msra.mxu0 0.0
  %536 = vmatprep.subr.mxu0 0.0
  %537 = vmatpush1.msra.mxu0 0.0
  %538 = vmatprep.subr.mxu0 0.0
  %539 = vmatpush1.msra.mxu0 0.0
  %540 = vmatprep.subr.mxu0 0.0
  %541 = vmatpush1.msra.mxu0 0.0
  %542 = vmatprep.subr.mxu0 0.0
  %543 = vmatpush1.msra.mxu0 0.0
  %544 = vmatprep.subr.mxu0 0.0
  %545 = vmatpush1.msra.mxu0 0.0
  %546 = vmatprep.subr.mxu0 0.0
  %547 = vmatpush1.msra.mxu0 0.0
  %548 = vmatprep.subr.mxu0 0.0
  %549 = vmatpush1.msra.mxu0 0.0
  %550 = vmatprep.subr.mxu0 0.0
  %551 = vmatpush1.msra.mxu0 0.0
  %552 = vmatprep.subr.mxu0 0.0
  %553 = vmatpush1.msra.mxu0 0.0
  %554 = vmatprep.subr.mxu0 0.0
  %555 = vmatpush1.msra.mxu0 0.0
  %556 = vmatprep.subr.mxu0 0.0
  %557 = vmatpush1.msra.mxu0 0.0
  %558 = vmatprep.subr.mxu0 0.0
  %559 = vmatpush1.msra.mxu0 0.0
  %560 = vmatprep.subr.mxu0 0.0
  %561 = vmatpush1.msra.mxu0 0.0
  %562 = vmatprep.subr.mxu0 0.0
  %563 = vmatpush1.msra.mxu0 0.0
  %564 = vmatprep.mubr.f32.mxu0 0.0
  %565 = vmatmul.mubr.f32.gmra.mrb[0].mxu0 %v498
  %v566 = vpop.f32.mrb[0].mxu0
  %v567 = vadd.f32 %v256, %v566
  %v568 = vpop.f32.mrb[0].mxu0
  %v569 = vadd.f32 %v260, %v568
  %570 = vdwg.mxu0
  %v571 = vadd.f32 %v496, %v567
  %v572 = vxor.u32 %v571, 2147483648
  %v573 = vmul.f32 %v572, 1.442695
  %v574 = vpow.pop %v573
  %v575 = vadd.f32 %v574, 1.0
  %v576 = vrcp.pop %v575
  %v577 = vmul.f32 1.0, %v576
  %v578 = vmul.f32 %v577, %v569
  %v579 = vadd.f32 %v497, %v578
  %v580 = vtanh.pop %v579
  %v581 = vsub.f32 1.0, %v577
  %583 = vrot.lane.b32.xlu0 %v580, 64
  %v584 = vpop.permute.xlu0 %583
  %v586 = vmul.f32 %v581, %v584
  %v587 = vmul.f32 %v577, %v354
  %v588 = vadd.f32 %v586, %v587
  %590 = vrot.lane.b32.xlu0 %v588, 64
  %v591 = vpop.permute.xlu0 %590
  %v593 = vsel %vm216, %v591, %v495
  %594 = vmatprep.subr.mxu0 %v361
  %595 = vmatpush1.msra.mxu0 %v360
  %596 = vmatprep.subr.mxu0 %v363
  %597 = vmatpush1.msra.mxu0 %v362
  %598 = vmatprep.subr.mxu0 %v365
  %599 = vmatpush1.msra.mxu0 %v364
  %600 = vmatprep.subr.mxu0 %v367
  %601 = vmatpush1.msra.mxu0 %v366
  %602 = vmatprep.subr.mxu0 %v369
  %603 = vmatpush1.msra.mxu0 %v368
  %604 = vmatprep.subr.mxu0 %v371
  %605 = vmatpush1.msra.mxu0 %v370
  %606 = vmatprep.subr.mxu0 %v373
  %607 = vmatpush1.msra.mxu0 %v372
  %608 = vmatprep.subr.mxu0 %v375
  %609 = vmatpush1.msra.mxu0 %v374
  %610 = vmatprep.subr.mxu0 %v377
  %611 = vmatpush1.msra.mxu0 %v376
  %612 = vmatprep.subr.mxu0 %v379
  %613 = vmatpush1.msra.mxu0 %v378
  %614 = vmatprep.subr.mxu0 %v381
  %615 = vmatpush1.msra.mxu0 %v380
  %616 = vmatprep.subr.mxu0 %v383
  %617 = vmatpush1.msra.mxu0 %v382
  %618 = vmatprep.subr.mxu0 %v385
  %619 = vmatpush1.msra.mxu0 %v384
  %620 = vmatprep.subr.mxu0 %v387
  %621 = vmatpush1.msra.mxu0 %v386
  %622 = vmatprep.subr.mxu0 %v389
  %623 = vmatpush1.msra.mxu0 %v388
  %624 = vmatprep.subr.mxu0 %v391
  %625 = vmatpush1.msra.mxu0 %v390
  %626 = vmatprep.subr.mxu0 0.0
  %627 = vmatpush1.msra.mxu0 0.0
  %628 = vmatprep.subr.mxu0 0.0
  %629 = vmatpush1.msra.mxu0 0.0
  %630 = vmatprep.subr.mxu0 0.0
  %631 = vmatpush1.msra.mxu0 0.0
  %632 = vmatprep.subr.mxu0 0.0
  %633 = vmatpush1.msra.mxu0 0.0
  %634 = vmatprep.subr.mxu0 0.0
  %635 = vmatpush1.msra.mxu0 0.0
  %636 = vmatprep.subr.mxu0 0.0
  %637 = vmatpush1.msra.mxu0 0.0
  %638 = vmatprep.subr.mxu0 0.0
  %639 = vmatpush1.msra.mxu0 0.0
  %640 = vmatprep.subr.mxu0 0.0
  %641 = vmatpush1.msra.mxu0 0.0
  %642 = vmatprep.subr.mxu0 0.0
  %643 = vmatpush1.msra.mxu0 0.0
  %644 = vmatprep.subr.mxu0 0.0
  %645 = vmatpush1.msra.mxu0 0.0
  %646 = vmatprep.subr.mxu0 0.0
  %647 = vmatpush1.msra.mxu0 0.0
  %648 = vmatprep.subr.mxu0 0.0
  %649 = vmatpush1.msra.mxu0 0.0
  %650 = vmatprep.subr.mxu0 0.0
  %651 = vmatpush1.msra.mxu0 0.0
  %652 = vmatprep.subr.mxu0 0.0
  %653 = vmatpush1.msra.mxu0 0.0
  %654 = vmatprep.subr.mxu0 0.0
  %655 = vmatpush1.msra.mxu0 0.0
  %656 = vmatprep.subr.mxu0 0.0
  %657 = vmatpush1.msra.mxu0 0.0
  %658 = vmatprep.mubr.f32.mxu0 0.0
  %659 = vmatmul.mubr.f32.gmra.mrb[0].mxu0 %v593
  %v660 = vpop.f32.mrb[0].mxu0
  %v661 = vadd.f32 %v397, %v660
  %v662 = vpop.f32.mrb[0].mxu0
  %v663 = vadd.f32 %v401, %v662
  %664 = vdwg.mxu0
  %v665 = vxor.u32 %v661, 2147483648
  %v666 = vmul.f32 %v665, 1.442695
  %v667 = vpow.pop %v666
  %v668 = vadd.f32 %v667, 1.0
  %v669 = vrcp.pop %v668
  %v670 = vmul.f32 1.0, %v669
  %672 = vrot.lane.b32.xlu0 %v663, 64
  %v673 = vpop.permute.xlu0 %672
  %v675 = vmul.f32 %v670, %v673
  %v676 = vadd.f32 %v663, %v675
  %v677 = vtanh.pop %v676
  %v678 = vsub.f32 1.0, %v670
  %680 = vrot.lane.b32.xlu0 %v677, 64
  %v681 = vpop.permute.xlu0 %680
  %v683 = vmul.f32 %v678, %v681
  %v684 = vmul.f32 %v670, %v495
  %v685 = vadd.f32 %v683, %v684
  %v686 = vld [vmem:[#allocation2 + $0x20] sm:$0xff]
  %v687 = vld [vmem:[#allocation2 + $0x28] sm:$0xff]
  %v688 = vsel %vm216, %v591, 0
  %690 = vmatprep.subr.mxu0 %v235
  %691 = vmatpush1.msra.mxu0 %v234
  %692 = vmatprep.subr.mxu0 %v237
  %693 = vmatpush1.msra.mxu0 %v236
  %694 = vmatprep.subr.mxu0 %v239
  %695 = vmatpush1.msra.mxu0 %v238
  %696 = vmatprep.subr.mxu0 %v241
  %697 = vmatpush1.msra.mxu0 %v240
  %698 = vmatprep.subr.mxu0 %v243
  %699 = vmatpush1.msra.mxu0 %v242
  %700 = vmatprep.subr.mxu0 %v245
  %701 = vmatpush1.msra.mxu0 %v244
  %702 = vmatprep.subr.mxu0 %v247
  %703 = vmatpush1.msra.mxu0 %v246
  %704 = vmatprep.subr.mxu0 %v249
  %705 = vmatpush1.msra.mxu0 %v248
  %706 = vmatprep.subr.mxu0 0.0
  %707 = vmatpush1.msra.mxu0 0.0
  %708 = vmatprep.subr.mxu0 0.0
  %709 = vmatpush1.msra.mxu0 0.0
  %710 = vmatprep.subr.mxu0 0.0
  %711 = vmatpush1.msra.mxu0 0.0
  %712 = vmatprep.subr.mxu0 0.0
  %713 = vmatpush1.msra.mxu0 0.0
  %714 = vmatprep.subr.mxu0 0.0
  %715 = vmatpush1.msra.mxu0 0.0
  %716 = vmatprep.subr.mxu0 0.0
  %717 = vmatpush1.msra.mxu0 0.0
  %718 = vmatprep.subr.mxu0 0.0
  %719 = vmatpush1.msra.mxu0 0.0
  %720 = vmatprep.subr.mxu0 0.0
  %721 = vmatpush1.msra.mxu0 0.0
  %722 = vmatprep.subr.mxu0 0.0
  %723 = vmatpush1.msra.mxu0 0.0
  %724 = vmatprep.subr.mxu0 0.0
  %725 = vmatpush1.msra.mxu0 0.0
  %726 = vmatprep.subr.mxu0 0.0
  %727 = vmatpush1.msra.mxu0 0.0
  %728 = vmatprep.subr.mxu0 0.0
  %729 = vmatpush1.msra.mxu0 0.0
  %730 = vmatprep.subr.mxu0 0.0
  %731 = vmatpush1.msra.mxu0 0.0
  %732 = vmatprep.subr.mxu0 0.0
  %733 = vmatpush1.msra.mxu0 0.0
  %734 = vmatprep.subr.mxu0 0.0
  %735 = vmatpush1.msra.mxu0 0.0
  %736 = vmatprep.subr.mxu0 0.0
  %737 = vmatpush1.msra.mxu0 0.0
  %738 = vmatprep.subr.mxu0 0.0
  %739 = vmatpush1.msra.mxu0 0.0
  %740 = vmatprep.subr.mxu0 0.0
  %741 = vmatpush1.msra.mxu0 0.0
  %742 = vmatprep.subr.mxu0 0.0
  %743 = vmatpush1.msra.mxu0 0.0
  %744 = vmatprep.subr.mxu0 0.0
  %745 = vmatpush1.msra.mxu0 0.0
  %746 = vmatprep.subr.mxu0 0.0
  %747 = vmatpush1.msra.mxu0 0.0
  %748 = vmatprep.subr.mxu0 0.0
  %749 = vmatpush1.msra.mxu0 0.0
  %750 = vmatprep.subr.mxu0 0.0
  %751 = vmatpush1.msra.mxu0 0.0
  %752 = vmatprep.subr.mxu0 0.0
  %753 = vmatpush1.msra.mxu0 0.0
  %754 = vmatprep.mubr.f32.mxu0 0.0
  %755 = vmatmul.mubr.f32.gmra.mrb[0].mxu0 %v688
  %v756 = vpop.f32.mrb[0].mxu0
  %v757 = vadd.f32 %v256, %v756
  %v758 = vpop.f32.mrb[0].mxu0
  %v759 = vadd.f32 %v260, %v758
  %760 = vdwg.mxu0
  %v761 = vadd.f32 %v686, %v757
  %v762 = vxor.u32 %v761, 2147483648
  %v763 = vmul.f32 %v762, 1.442695
  %v764 = vpow.pop %v763
  %v765 = vadd.f32 %v764, 1.0
  %v766 = vrcp.pop %v765
  %v767 = vmul.f32 1.0, %v766
  %v768 = vmul.f32 %v767, %v759
  %v769 = vadd.f32 %v687, %v768
  %v770 = vtanh.pop %v769
  %v771 = vsub.f32 1.0, %v767
  %773 = vrot.lane.b32.xlu0 %v770, 64
  %v774 = vpop.permute.xlu0 %773
  %v776 = vmul.f32 %v771, %v774
  %v777 = vmul.f32 %v767, %v588
  %v778 = vadd.f32 %v776, %v777
  %780 = vrot.lane.b32.xlu0 %v778, 64
  %v781 = vpop.permute.xlu0 %780
  %v783 = vsel %vm216, %v781, %v685
  %784 = vmatprep.subr.mxu0 %v361
  %785 = vmatpush1.msra.mxu0 %v360
  %786 = vmatprep.subr.mxu0 %v363
  %787 = vmatpush1.msra.mxu0 %v362
  %788 = vmatprep.subr.mxu0 %v365
  %789 = vmatpush1.msra.mxu0 %v364
  %790 = vmatprep.subr.mxu0 %v367
  %791 = vmatpush1.msra.mxu0 %v366
  %792 = vmatprep.subr.mxu0 %v369
  %793 = vmatpush1.msra.mxu0 %v368
  %794 = vmatprep.subr.mxu0 %v371
  %795 = vmatpush1.msra.mxu0 %v370
  %796 = vmatprep.subr.mxu0 %v373
  %797 = vmatpush1.msra.mxu0 %v372
  %798 = vmatprep.subr.mxu0 %v375
  %799 = vmatpush1.msra.mxu0 %v374
  %800 = vmatprep.subr.mxu0 %v377
  %801 = vmatpush1.msra.mxu0 %v376
  %802 = vmatprep.subr.mxu0 %v379
  %803 = vmatpush1.msra.mxu0 %v378
  %804 = vmatprep.subr.mxu0 %v381
  %805 = vmatpush1.msra.mxu0 %v380
  %806 = vmatprep.subr.mxu0 %v383
  %807 = vmatpush1.msra.mxu0 %v382
  %808 = vmatprep.subr.mxu0 %v385
  %809 = vmatpush1.msra.mxu0 %v384
  %810 = vmatprep.subr.mxu0 %v387
  %811 = vmatpush1.msra.mxu0 %v386
  %812 = vmatprep.subr.mxu0 %v389
  %813 = vmatpush1.msra.mxu0 %v388
  %814 = vmatprep.subr.mxu0 %v391
  %815 = vmatpush1.msra.mxu0 %v390
  %816 = vmatprep.subr.mxu0 0.0
  %817 = vmatpush1.msra.mxu0 0.0
  %818 = vmatprep.subr.mxu0 0.0
  %819 = vmatpush1.msra.mxu0 0.0
  %820 = vmatprep.subr.mxu0 0.0
  %821 = vmatpush1.msra.mxu0 0.0
  %822 = vmatprep.subr.mxu0 0.0
  %823 = vmatpush1.msra.mxu0 0.0
  %824 = vmatprep.subr.mxu0 0.0
  %825 = vmatpush1.msra.mxu0 0.0
  %826 = vmatprep.subr.mxu0 0.0
  %827 = vmatpush1.msra.mxu0 0.0
  %828 = vmatprep.subr.mxu0 0.0
  %829 = vmatpush1.msra.mxu0 0.0
  %830 = vmatprep.subr.mxu0 0.0
  %831 = vmatpush1.msra.mxu0 0.0
  %832 = vmatprep.subr.mxu0 0.0
  %833 = vmatpush1.msra.mxu0 0.0
  %834 = vmatprep.subr.mxu0 0.0
  %835 = vmatpush1.msra.mxu0 0.0
  %836 = vmatprep.subr.mxu0 0.0
  %837 = vmatpush1.msra.mxu0 0.0
  %838 = vmatprep.subr.mxu0 0.0
  %839 = vmatpush1.msra.mxu0 0.0
  %840 = vmatprep.subr.mxu0 0.0
  %841 = vmatpush1.msra.mxu0 0.0
  %842 = vmatprep.subr.mxu0 0.0
  %843 = vmatpush1.msra.mxu0 0.0
  %844 = vmatprep.subr.mxu0 0.0
  %845 = vmatpush1.msra.mxu0 0.0
  %846 = vmatprep.subr.mxu0 0.0
  %847 = vmatpush1.msra.mxu0 0.0
  %848 = vmatprep.mubr.f32.mxu0 0.0
  %849 = vmatmul.mubr.f32.gmra.mrb[0].mxu0 %v783
  %v850 = vpop.f32.mrb[0].mxu0
  %v851 = vadd.f32 %v397, %v850
  %v852 = vpop.f32.mrb[0].mxu0
  %v853 = vadd.f32 %v401, %v852
  %854 = vdwg.mxu0
  %v855 = vxor.u32 %v851, 2147483648
  %v856 = vmul.f32 %v855, 1.442695
  %v857 = vpow.pop %v856
  %v858 = vadd.f32 %v857, 1.0
  %v859 = vrcp.pop %v858
  %v860 = vmul.f32 1.0, %v859
  %862 = vrot.lane.b32.xlu0 %v853, 64
  %v863 = vpop.permute.xlu0 %862
  %v865 = vmul.f32 %v860, %v863
  %v866 = vadd.f32 %v853, %v865
  %v867 = vtanh.pop %v866
  %v868 = vsub.f32 1.0, %v860
  %870 = vrot.lane.b32.xlu0 %v867, 64
  %v871 = vpop.permute.xlu0 %870
  %v873 = vmul.f32 %v868, %v871
  %v874 = vmul.f32 %v860, %v685
  %v875 = vadd.f32 %v873, %v874
  %v876 = vld [vmem:[#allocation2 + $0x30] sm:$0xff]
  %v877 = vld [vmem:[#allocation2 + $0x38] sm:$0xff]
  %v878 = vsel %vm216, %v781, 0
  %880 = vmatprep.subr.mxu0 %v235
  %881 = vmatpush1.msra.mxu0 %v234
  %882 = vmatprep.subr.mxu0 %v237
  %883 = vmatpush1.msra.mxu0 %v236
  %884 = vmatprep.subr.mxu0 %v239
  %885 = vmatpush1.msra.mxu0 %v238
  %886 = vmatprep.subr.mxu0 %v241
  %887 = vmatpush1.msra.mxu0 %v240
  %888 = vmatprep.subr.mxu0 %v243
  %889 = vmatpush1.msra.mxu0 %v242
  %890 = vmatprep.subr.mxu0 %v245
  %891 = vmatpush1.msra.mxu0 %v244
  %892 = vmatprep.subr.mxu0 %v247
  %893 = vmatpush1.msra.mxu0 %v246
  %894 = vmatprep.subr.mxu0 %v249
  %895 = vmatpush1.msra.mxu0 %v248
  %896 = vmatprep.subr.mxu0 0.0
  %897 = vmatpush1.msra.mxu0 0.0
  %898 = vmatprep.subr.mxu0 0.0
  %899 = vmatpush1.msra.mxu0 0.0
  %900 = vmatprep.subr.mxu0 0.0
  %901 = vmatpush1.msra.mxu0 0.0
  %902 = vmatprep.subr.mxu0 0.0
  %903 = vmatpush1.msra.mxu0 0.0
  %904 = vmatprep.subr.mxu0 0.0
  %905 = vmatpush1.msra.mxu0 0.0
  %906 = vmatprep.subr.mxu0 0.0
  %907 = vmatpush1.msra.mxu0 0.0
  %908 = vmatprep.subr.mxu0 0.0
  %909 = vmatpush1.msra.mxu0 0.0
  %910 = vmatprep.subr.mxu0 0.0
  %911 = vmatpush1.msra.mxu0 0.0
  %912 = vmatprep.subr.mxu0 0.0
  %913 = vmatpush1.msra.mxu0 0.0
  %914 = vmatprep.subr.mxu0 0.0
  %915 = vmatpush1.msra.mxu0 0.0
  %916 = vmatprep.subr.mxu0 0.0
  %917 = vmatpush1.msra.mxu0 0.0
  %918 = vmatprep.subr.mxu0 0.0
  %919 = vmatpush1.msra.mxu0 0.0
  %920 = vmatprep.subr.mxu0 0.0
  %921 = vmatpush1.msra.mxu0 0.0
  %922 = vmatprep.subr.mxu0 0.0
  %923 = vmatpush1.msra.mxu0 0.0
  %924 = vmatprep.subr.mxu0 0.0
  %925 = vmatpush1.msra.mxu0 0.0
  %926 = vmatprep.subr.mxu0 0.0
  %927 = vmatpush1.msra.mxu0 0.0
  %928 = vmatprep.subr.mxu0 0.0
  %929 = vmatpush1.msra.mxu0 0.0
  %930 = vmatprep.subr.mxu0 0.0
  %931 = vmatpush1.msra.mxu0 0.0
  %932 = vmatprep.subr.mxu0 0.0
  %933 = vmatpush1.msra.mxu0 0.0
  %934 = vmatprep.subr.mxu0 0.0
  %935 = vmatpush1.msra.mxu0 0.0
  %936 = vmatprep.subr.mxu0 0.0
  %937 = vmatpush1.msra.mxu0 0.0
  %938 = vmatprep.subr.mxu0 0.0
  %939 = vmatpush1.msra.mxu0 0.0
  %940 = vmatprep.subr.mxu0 0.0
  %941 = vmatpush1.msra.mxu0 0.0
  %942 = vmatprep.subr.mxu0 0.0
  %943 = vmatpush1.msra.mxu0 0.0
  %944 = vmatprep.mubr.f32.mxu0 0.0
  %945 = vmatmul.mubr.f32.gmra.mrb[0].mxu0 %v878
  %v946 = vpop.f32.mrb[0].mxu0
  %v947 = vadd.f32 %v256, %v946
  %v948 = vpop.f32.mrb[0].mxu0
  %v949 = vadd.f32 %v260, %v948
  %950 = vdwg.mxu0
  %v951 = vadd.f32 %v876, %v947
  %v952 = vxor.u32 %v951, 2147483648
  %v953 = vmul.f32 %v952, 1.442695
  %v954 = vpow.pop %v953
  %v955 = vadd.f32 %v954, 1.0
  %v956 = vrcp.pop %v955
  %v957 = vmul.f32 1.0, %v956
  %v958 = vmul.f32 %v957, %v949
  %v959 = vadd.f32 %v877, %v958
  %v960 = vtanh.pop %v959
  %v961 = vsub.f32 1.0, %v957
  %963 = vrot.lane.b32.xlu0 %v960, 64
  %v964 = vpop.permute.xlu0 %963
  %v966 = vmul.f32 %v961, %v964
  %v967 = vmul.f32 %v957, %v778
  %v968 = vadd.f32 %v966, %v967
  %970 = vrot.lane.b32.xlu0 %v968, 64
  %v971 = vpop.permute.xlu0 %970
  %v973 = vsel %vm216, %v971, %v875
  %974 = vmatprep.subr.mxu0 %v361
  %975 = vmatpush1.msra.mxu0 %v360
  %976 = vmatprep.subr.mxu0 %v363
  %977 = vmatpush1.msra.mxu0 %v362
  %978 = vmatprep.subr.mxu0 %v365
  %979 = vmatpush1.msra.mxu0 %v364
  %980 = vmatprep.subr.mxu0 %v367
  %981 = vmatpush1.msra.mxu0 %v366
  %982 = vmatprep.subr.mxu0 %v369
  %983 = vmatpush1.msra.mxu0 %v368
  %984 = vmatprep.subr.mxu0 %v371
  %985 = vmatpush1.msra.mxu0 %v370
  %986 = vmatprep.subr.mxu0 %v373
  %987 = vmatpush1.msra.mxu0 %v372
  %988 = vmatprep.subr.mxu0 %v375
  %989 = vmatpush1.msra.mxu0 %v374
  %990 = vmatprep.subr.mxu0 %v377
  %991 = vmatpush1.msra.mxu0 %v376
  %992 = vmatprep.subr.mxu0 %v379
  %993 = vmatpush1.msra.mxu0 %v378
  %994 = vmatprep.subr.mxu0 %v381
  %995 = vmatpush1.msra.mxu0 %v380
  %996 = vmatprep.subr.mxu0 %v383
  %997 = vmatpush1.msra.mxu0 %v382
  %998 = vmatprep.subr.mxu0 %v385
  %999 = vmatpush1.msra.mxu0 %v384
  %1000 = vmatprep.subr.mxu0 %v387
  %1001 = vmatpush1.msra.mxu0 %v386
  %1002 = vmatprep.subr.mxu0 %v389
  %1003 = vmatpush1.msra.mxu0 %v388
  %1004 = vmatprep.subr.mxu0 %v391
  %1005 = vmatpush1.msra.mxu0 %v390
  %1006 = vmatprep.subr.mxu0 0.0
  %1007 = vmatpush1.msra.mxu0 0.0
  %1008 = vmatprep.subr.mxu0 0.0
  %1009 = vmatpush1.msra.mxu0 0.0
  %1010 = vmatprep.subr.mxu0 0.0
  %1011 = vmatpush1.msra.mxu0 0.0
  %1012 = vmatprep.subr.mxu0 0.0
  %1013 = vmatpush1.msra.mxu0 0.0
  %1014 = vmatprep.subr.mxu0 0.0
  %1015 = vmatpush1.msra.mxu0 0.0
  %1016 = vmatprep.subr.mxu0 0.0
  %1017 = vmatpush1.msra.mxu0 0.0
  %1018 = vmatprep.subr.mxu0 0.0
  %1019 = vmatpush1.msra.mxu0 0.0
  %1020 = vmatprep.subr.mxu0 0.0
  %1021 = vmatpush1.msra.mxu0 0.0
  %1022 = vmatprep.subr.mxu0 0.0
  %1023 = vmatpush1.msra.mxu0 0.0
  %1024 = vmatprep.subr.mxu0 0.0
  %1025 = vmatpush1.msra.mxu0 0.0
  %1026 = vmatprep.subr.mxu0 0.0
  %1027 = vmatpush1.msra.mxu0 0.0
  %1028 = vmatprep.subr.mxu0 0.0
  %1029 = vmatpush1.msra.mxu0 0.0
  %1030 = vmatprep.subr.mxu0 0.0
  %1031 = vmatpush1.msra.mxu0 0.0
  %1032 = vmatprep.subr.mxu0 0.0
  %1033 = vmatpush1.msra.mxu0 0.0
  %1034 = vmatprep.subr.mxu0 0.0
  %1035 = vmatpush1.msra.mxu0 0.0
  %1036 = vmatprep.subr.mxu0 0.0
  %1037 = vmatpush1.msra.mxu0 0.0
  %1038 = vmatprep.mubr.f32.mxu0 0.0
  %1039 = vmatmul.mubr.f32.gmra.mrb[0].mxu0 %v973
  %v1040 = vpop.f32.mrb[0].mxu0
  %v1041 = vadd.f32 %v397, %v1040
  %v1042 = vpop.f32.mrb[0].mxu0
  %v1043 = vadd.f32 %v401, %v1042
  %1044 = vdwg.mxu0
  %v1045 = vxor.u32 %v1041, 2147483648
  %v1046 = vmul.f32 %v1045, 1.442695
  %v1047 = vpow.pop %v1046
  %v1048 = vadd.f32 %v1047, 1.0
  %v1049 = vrcp.pop %v1048
  %v1050 = vmul.f32 1.0, %v1049
  %1052 = vrot.lane.b32.xlu0 %v1043, 64
  %v1053 = vpop.permute.xlu0 %1052
  %v1055 = vmul.f32 %v1050, %v1053
  %v1056 = vadd.f32 %v1043, %v1055
  %v1057 = vtanh.pop %v1056
  %v1058 = vsub.f32 1.0, %v1050
  %1060 = vrot.lane.b32.xlu0 %v1057, 64
  %v1061 = vpop.permute.xlu0 %1060
  %v1063 = vmul.f32 %v1058, %v1061
  %v1064 = vmul.f32 %v1050, %v875
  %v1065 = vadd.f32 %v1063, %v1064
  %v1066 = vld [vmem:[#allocation2 + $0x40] sm:$0xff]
  %v1067 = vld [vmem:[#allocation2 + $0x48] sm:$0xff]
  %v1068 = vsel %vm216, %v971, 0
  %1070 = vmatprep.subr.mxu0 %v235
  %1071 = vmatpush1.msra.mxu0 %v234
  %1072 = vmatprep.subr.mxu0 %v237
  %1073 = vmatpush1.msra.mxu0 %v236
  %1074 = vmatprep.subr.mxu0 %v239
  %1075 = vmatpush1.msra.mxu0 %v238
  %1076 = vmatprep.subr.mxu0 %v241
  %1077 = vmatpush1.msra.mxu0 %v240
  %1078 = vmatprep.subr.mxu0 %v243
  %1079 = vmatpush1.msra.mxu0 %v242
  %1080 = vmatprep.subr.mxu0 %v245
  %1081 = vmatpush1.msra.mxu0 %v244
  %1082 = vmatprep.subr.mxu0 %v247
  %1083 = vmatpush1.msra.mxu0 %v246
  %1084 = vmatprep.subr.mxu0 %v249
  %1085 = vmatpush1.msra.mxu0 %v248
  %1086 = vmatprep.subr.mxu0 0.0
  %1087 = vmatpush1.msra.mxu0 0.0
  %1088 = vmatprep.subr.mxu0 0.0
  %1089 = vmatpush1.msra.mxu0 0.0
  %1090 = vmatprep.subr.mxu0 0.0
  %1091 = vmatpush1.msra.mxu0 0.0
  %1092 = vmatprep.subr.mxu0 0.0
  %1093 = vmatpush1.msra.mxu0 0.0
  %1094 = vmatprep.subr.mxu0 0.0
  %1095 = vmatpush1.msra.mxu0 0.0
  %1096 = vmatprep.subr.mxu0 0.0
  %1097 = vmatpush1.msra.mxu0 0.0
  %1098 = vmatprep.subr.mxu0 0.0
  %1099 = vmatpush1.msra.mxu0 0.0
  %1100 = vmatprep.subr.mxu0 0.0
  %1101 = vmatpush1.msra.mxu0 0.0
  %1102 = vmatprep.subr.mxu0 0.0
  %1103 = vmatpush1.msra.mxu0 0.0
  %1104 = vmatprep.subr.mxu0 0.0
  %1105 = vmatpush1.msra.mxu0 0.0
  %1106 = vmatprep.subr.mxu0 0.0
  %1107 = vmatpush1.msra.mxu0 0.0
  %1108 = vmatprep.subr.mxu0 0.0
  %1109 = vmatpush1.msra.mxu0 0.0
  %1110 = vmatprep.subr.mxu0 0.0
  %1111 = vmatpush1.msra.mxu0 0.0
  %1112 = vmatprep.subr.mxu0 0.0
  %1113 = vmatpush1.msra.mxu0 0.0
  %1114 = vmatprep.subr.mxu0 0.0
  %1115 = vmatpush1.msra.mxu0 0.0
  %1116 = vmatprep.subr.mxu0 0.0
  %1117 = vmatpush1.msra.mxu0 0.0
  %1118 = vmatprep.subr.mxu0 0.0
  %1119 = vmatpush1.msra.mxu0 0.0
  %1120 = vmatprep.subr.mxu0 0.0
  %1121 = vmatpush1.msra.mxu0 0.0
  %1122 = vmatprep.subr.mxu0 0.0
  %1123 = vmatpush1.msra.mxu0 0.0
  %1124 = vmatprep.subr.mxu0 0.0
  %1125 = vmatpush1.msra.mxu0 0.0
  %1126 = vmatprep.subr.mxu0 0.0
  %1127 = vmatpush1.msra.mxu0 0.0
  %1128 = vmatprep.subr.mxu0 0.0
  %1129 = vmatpush1.msra.mxu0 0.0
  %1130 = vmatprep.subr.mxu0 0.0
  %1131 = vmatpush1.msra.mxu0 0.0
  %1132 = vmatprep.subr.mxu0 0.0
  %1133 = vmatpush1.msra.mxu0 0.0
  %1134 = vmatprep.mubr.f32.mxu0 0.0
  %1135 = vmatmul.mubr.f32.gmra.mrb[0].mxu0 %v1068
  %v1136 = vpop.f32.mrb[0].mxu0
  %v1137 = vadd.f32 %v256, %v1136
  %v1138 = vpop.f32.mrb[0].mxu0
  %v1139 = vadd.f32 %v260, %v1138
  %1140 = vdwg.mxu0
  %v1141 = vadd.f32 %v1066, %v1137
  %v1142 = vxor.u32 %v1141, 2147483648
  %v1143 = vmul.f32 %v1142, 1.442695
  %v1144 = vpow.pop %v1143
  %v1145 = vadd.f32 %v1144, 1.0
  %v1146 = vrcp.pop %v1145
  %v1147 = vmul.f32 1.0, %v1146
  %v1148 = vmul.f32 %v1147, %v1139
  %v1149 = vadd.f32 %v1067, %v1148
  %v1150 = vtanh.pop %v1149
  %v1151 = vsub.f32 1.0, %v1147
  %1153 = vrot.lane.b32.xlu0 %v1150, 64
  %v1154 = vpop.permute.xlu0 %1153
  %v1156 = vmul.f32 %v1151, %v1154
  %v1157 = vmul.f32 %v1147, %v968
  %v1158 = vadd.f32 %v1156, %v1157
  %1160 = vrot.lane.b32.xlu0 %v1158, 64
  %v1161 = vpop.permute.xlu0 %1160
  %v1163 = vsel %vm216, %v1161, %v1065
  %1164 = vmatprep.subr.mxu0 %v361
  %1165 = vmatpush1.msra.mxu0 %v360
  %1166 = vmatprep.subr.mxu0 %v363
  %1167 = vmatpush1.msra.mxu0 %v362
  %1168 = vmatprep.subr.mxu0 %v365
  %1169 = vmatpush1.msra.mxu0 %v364
  %1170 = vmatprep.subr.mxu0 %v367
  %1171 = vmatpush1.msra.mxu0 %v366
  %1172 = vmatprep.subr.mxu0 %v369
  %1173 = vmatpush1.msra.mxu0 %v368
  %1174 = vmatprep.subr.mxu0 %v371
  %1175 = vmatpush1.msra.mxu0 %v370
  %1176 = vmatprep.subr.mxu0 %v373
  %1177 = vmatpush1.msra.mxu0 %v372
  %1178 = vmatprep.subr.mxu0 %v375
  %1179 = vmatpush1.msra.mxu0 %v374
  %1180 = vmatprep.subr.mxu0 %v377
  %1181 = vmatpush1.msra.mxu0 %v376
  %1182 = vmatprep.subr.mxu0 %v379
  %1183 = vmatpush1.msra.mxu0 %v378
  %1184 = vmatprep.subr.mxu0 %v381
  %1185 = vmatpush1.msra.mxu0 %v380
  %1186 = vmatprep.subr.mxu0 %v383
  %1187 = vmatpush1.msra.mxu0 %v382
  %1188 = vmatprep.subr.mxu0 %v385
  %1189 = vmatpush1.msra.mxu0 %v384
  %1190 = vmatprep.subr.mxu0 %v387
  %1191 = vmatpush1.msra.mxu0 %v386
  %1192 = vmatprep.subr.mxu0 %v389
  %1193 = vmatpush1.msra.mxu0 %v388
  %1194 = vmatprep.subr.mxu0 %v391
  %1195 = vmatpush1.msra.mxu0 %v390
  %1196 = vmatprep.subr.mxu0 0.0
  %1197 = vmatpush1.msra.mxu0 0.0
  %1198 = vmatprep.subr.mxu0 0.0
  %1199 = vmatpush1.msra.mxu0 0.0
  %1200 = vmatprep.subr.mxu0 0.0
  %1201 = vmatpush1.msra.mxu0 0.0
  %1202 = vmatprep.subr.mxu0 0.0
  %1203 = vmatpush1.msra.mxu0 0.0
  %1204 = vmatprep.subr.mxu0 0.0
  %1205 = vmatpush1.msra.mxu0 0.0
  %1206 = vmatprep.subr.mxu0 0.0
  %1207 = vmatpush1.msra.mxu0 0.0
  %1208 = vmatprep.subr.mxu0 0.0
  %1209 = vmatpush1.msra.mxu0 0.0
  %1210 = vmatprep.subr.mxu0 0.0
  %1211 = vmatpush1.msra.mxu0 0.0
  %1212 = vmatprep.subr.mxu0 0.0
  %1213 = vmatpush1.msra.mxu0 0.0
  %1214 = vmatprep.subr.mxu0 0.0
  %1215 = vmatpush1.msra.mxu0 0.0
  %1216 = vmatprep.subr.mxu0 0.0
  %1217 = vmatpush1.msra.mxu0 0.0
  %1218 = vmatprep.subr.mxu0 0.0
  %1219 = vmatpush1.msra.mxu0 0.0
  %1220 = vmatprep.subr.mxu0 0.0
  %1221 = vmatpush1.msra.mxu0 0.0
  %1222 = vmatprep.subr.mxu0 0.0
  %1223 = vmatpush1.msra.mxu0 0.0
  %1224 = vmatprep.subr.mxu0 0.0
  %1225 = vmatpush1.msra.mxu0 0.0
  %1226 = vmatprep.subr.mxu0 0.0
  %1227 = vmatpush1.msra.mxu0 0.0
  %1228 = vmatprep.mubr.f32.mxu0 0.0
  %1229 = vmatmul.mubr.f32.gmra.mrb[0].mxu0 %v1163
  %v1230 = vpop.f32.mrb[0].mxu0
  %v1231 = vadd.f32 %v397, %v1230
  %v1232 = vpop.f32.mrb[0].mxu0
  %v1233 = vadd.f32 %v401, %v1232
  %1234 = vdwg.mxu0
  %v1235 = vxor.u32 %v1231, 2147483648
  %v1236 = vmul.f32 %v1235, 1.442695
  %v1237 = vpow.pop %v1236
  %v1238 = vadd.f32 %v1237, 1.0
  %v1239 = vrcp.pop %v1238
  %v1240 = vmul.f32 1.0, %v1239
  %1242 = vrot.lane.b32.xlu0 %v1233, 64
  %v1243 = vpop.permute.xlu0 %1242
  %v1245 = vmul.f32 %v1240, %v1243
  %v1246 = vadd.f32 %v1233, %v1245
  %v1247 = vtanh.pop %v1246
  %v1248 = vsub.f32 1.0, %v1240
  %1250 = vrot.lane.b32.xlu0 %v1247, 64
  %v1251 = vpop.permute.xlu0 %1250
  %v1253 = vmul.f32 %v1248, %v1251
  %v1254 = vmul.f32 %v1240, %v1065
  %v1255 = vadd.f32 %v1253, %v1254
  %v1256 = vld [vmem:[#allocation2 + $0x50] sm:$0xff]
  %v1257 = vld [vmem:[#allocation2 + $0x58] sm:$0xff]
  %v1258 = vsel %vm216, %v1161, 0
  %1260 = vmatprep.subr.mxu0 %v235
  %1261 = vmatpush1.msra.mxu0 %v234
  %1262 = vmatprep.subr.mxu0 %v237
  %1263 = vmatpush1.msra.mxu0 %v236
  %1264 = vmatprep.subr.mxu0 %v239
  %1265 = vmatpush1.msra.mxu0 %v238
  %1266 = vmatprep.subr.mxu0 %v241
  %1267 = vmatpush1.msra.mxu0 %v240
  %1268 = vmatprep.subr.mxu0 %v243
  %1269 = vmatpush1.msra.mxu0 %v242
  %1270 = vmatprep.subr.mxu0 %v245
  %1271 = vmatpush1.msra.mxu0 %v244
  %1272 = vmatprep.subr.mxu0 %v247
  %1273 = vmatpush1.msra.mxu0 %v246
  %1274 = vmatprep.subr.mxu0 %v249
  %1275 = vmatpush1.msra.mxu0 %v248
  %1276 = vmatprep.subr.mxu0 0.0
  %1277 = vmatpush1.msra.mxu0 0.0
  %1278 = vmatprep.subr.mxu0 0.0
  %1279 = vmatpush1.msra.mxu0 0.0
  %1280 = vmatprep.subr.mxu0 0.0
  %1281 = vmatpush1.msra.mxu0 0.0
  %1282 = vmatprep.subr.mxu0 0.0
  %1283 = vmatpush1.msra.mxu0 0.0
  %1284 = vmatprep.subr.mxu0 0.0
  %1285 = vmatpush1.msra.mxu0 0.0
  %1286 = vmatprep.subr.mxu0 0.0
  %1287 = vmatpush1.msra.mxu0 0.0
  %1288 = vmatprep.subr.mxu0 0.0
  %1289 = vmatpush1.msra.mxu0 0.0
  %1290 = vmatprep.subr.mxu0 0.0
  %1291 = vmatpush1.msra.mxu0 0.0
  %1292 = vmatprep.subr.mxu0 0.0
  %1293 = vmatpush1.msra.mxu0 0.0
  %1294 = vmatprep.subr.mxu0 0.0
  %1295 = vmatpush1.msra.mxu0 0.0
  %1296 = vmatprep.subr.mxu0 0.0
  %1297 = vmatpush1.msra.mxu0 0.0
  %1298 = vmatprep.subr.mxu0 0.0
  %1299 = vmatpush1.msra.mxu0 0.0
  %1300 = vmatprep.subr.mxu0 0.0
  %1301 = vmatpush1.msra.mxu0 0.0
  %1302 = vmatprep.subr.mxu0 0.0
  %1303 = vmatpush1.msra.mxu0 0.0
  %1304 = vmatprep.subr.mxu0 0.0
  %1305 = vmatpush1.msra.mxu0 0.0
  %1306 = vmatprep.subr.mxu0 0.0
  %1307 = vmatpush1.msra.mxu0 0.0
  %1308 = vmatprep.subr.mxu0 0.0
  %1309 = vmatpush1.msra.mxu0 0.0
  %1310 = vmatprep.subr.mxu0 0.0
  %1311 = vmatpush1.msra.mxu0 0.0
  %1312 = vmatprep.subr.mxu0 0.0
  %1313 = vmatpush1.msra.mxu0 0.0
  %1314 = vmatprep.subr.mxu0 0.0
  %1315 = vmatpush1.msra.mxu0 0.0
  %1316 = vmatprep.subr.mxu0 0.0
  %1317 = vmatpush1.msra.mxu0 0.0
  %1318 = vmatprep.subr.mxu0 0.0
  %1319 = vmatpush1.msra.mxu0 0.0
  %1320 = vmatprep.subr.mxu0 0.0
  %1321 = vmatpush1.msra.mxu0 0.0
  %1322 = vmatprep.subr.mxu0 0.0
  %1323 = vmatpush1.msra.mxu0 0.0
  %1324 = vmatprep.mubr.f32.mxu0 0.0
  %1325 = vmatmul.mubr.f32.gmra.mrb[0].mxu0 %v1258
  %v1326 = vpop.f32.mrb[0].mxu0
  %v1327 = vadd.f32 %v256, %v1326
  %v1328 = vpop.f32.mrb[0].mxu0
  %v1329 = vadd.f32 %v260, %v1328
  %1330 = vdwg.mxu0
  %v1331 = vadd.f32 %v1256, %v1327
  %v1332 = vxor.u32 %v1331, 2147483648
  %v1333 = vmul.f32 %v1332, 1.442695
  %v1334 = vpow.pop %v1333
  %v1335 = vadd.f32 %v1334, 1.0
  %v1336 = vrcp.pop %v1335
  %v1337 = vmul.f32 1.0, %v1336
  %v1338 = vmul.f32 %v1337, %v1329
  %v1339 = vadd.f32 %v1257, %v1338
  %v1340 = vtanh.pop %v1339
  %v1341 = vsub.f32 1.0, %v1337
  %1343 = vrot.lane.b32.xlu0 %v1340, 64
  %v1344 = vpop.permute.xlu0 %1343
  %v1346 = vmul.f32 %v1341, %v1344
  %v1347 = vmul.f32 %v1337, %v1158
  %v1348 = vadd.f32 %v1346, %v1347
  %1350 = vrot.lane.b32.xlu0 %v1348, 64
  %v1351 = vpop.permute.xlu0 %1350
  %v1353 = vsel %vm216, %v1351, %v1255
  %1354 = vmatprep.subr.mxu0 %v361
  %1355 = vmatpush1.msra.mxu0 %v360
  %1356 = vmatprep.subr.mxu0 %v363
  %1357 = vmatpush1.msra.mxu0 %v362
  %1358 = vmatprep.subr.mxu0 %v365
  %1359 = vmatpush1.msra.mxu0 %v364
  %1360 = vmatprep.subr.mxu0 %v367
  %1361 = vmatpush1.msra.mxu0 %v366
  %1362 = vmatprep.subr.mxu0 %v369
  %1363 = vmatpush1.msra.mxu0 %v368
  %1364 = vmatprep.subr.mxu0 %v371
  %1365 = vmatpush1.msra.mxu0 %v370
  %1366 = vmatprep.subr.mxu0 %v373
  %1367 = vmatpush1.msra.mxu0 %v372
  %1368 = vmatprep.subr.mxu0 %v375
  %1369 = vmatpush1.msra.mxu0 %v374
  %1370 = vmatprep.subr.mxu0 %v377
  %1371 = vmatpush1.msra.mxu0 %v376
  %1372 = vmatprep.subr.mxu0 %v379
  %1373 = vmatpush1.msra.mxu0 %v378
  %1374 = vmatprep.subr.mxu0 %v381
  %1375 = vmatpush1.msra.mxu0 %v380
  %1376 = vmatprep.subr.mxu0 %v383
  %1377 = vmatpush1.msra.mxu0 %v382
  %1378 = vmatprep.subr.mxu0 %v385
  %1379 = vmatpush1.msra.mxu0 %v384
  %1380 = vmatprep.subr.mxu0 %v387
  %1381 = vmatpush1.msra.mxu0 %v386
  %1382 = vmatprep.subr.mxu0 %v389
  %1383 = vmatpush1.msra.mxu0 %v388
  %1384 = vmatprep.subr.mxu0 %v391
  %1385 = vmatpush1.msra.mxu0 %v390
  %1386 = vmatprep.subr.mxu0 0.0
  %1387 = vmatpush1.msra.mxu0 0.0
  %1388 = vmatprep.subr.mxu0 0.0
  %1389 = vmatpush1.msra.mxu0 0.0
  %1390 = vmatprep.subr.mxu0 0.0
  %1391 = vmatpush1.msra.mxu0 0.0
  %1392 = vmatprep.subr.mxu0 0.0
  %1393 = vmatpush1.msra.mxu0 0.0
  %1394 = vmatprep.subr.mxu0 0.0
  %1395 = vmatpush1.msra.mxu0 0.0
  %1396 = vmatprep.subr.mxu0 0.0
  %1397 = vmatpush1.msra.mxu0 0.0
  %1398 = vmatprep.subr.mxu0 0.0
  %1399 = vmatpush1.msra.mxu0 0.0
  %1400 = vmatprep.subr.mxu0 0.0
  %1401 = vmatpush1.msra.mxu0 0.0
  %1402 = vmatprep.subr.mxu0 0.0
  %1403 = vmatpush1.msra.mxu0 0.0
  %1404 = vmatprep.subr.mxu0 0.0
  %1405 = vmatpush1.msra.mxu0 0.0
  %1406 = vmatprep.subr.mxu0 0.0
  %1407 = vmatpush1.msra.mxu0 0.0
  %1408 = vmatprep.subr.mxu0 0.0
  %1409 = vmatpush1.msra.mxu0 0.0
  %1410 = vmatprep.subr.mxu0 0.0
  %1411 = vmatpush1.msra.mxu0 0.0
  %1412 = vmatprep.subr.mxu0 0.0
  %1413 = vmatpush1.msra.mxu0 0.0
  %1414 = vmatprep.subr.mxu0 0.0
  %1415 = vmatpush1.msra.mxu0 0.0
  %1416 = vmatprep.subr.mxu0 0.0
  %1417 = vmatpush1.msra.mxu0 0.0
  %1418 = vmatprep.mubr.f32.mxu0 0.0
  %1419 = vmatmul.mubr.f32.gmra.mrb[0].mxu0 %v1353
  %v1420 = vpop.f32.mrb[0].mxu0
  %v1421 = vadd.f32 %v397, %v1420
  %v1422 = vpop.f32.mrb[0].mxu0
  %v1423 = vadd.f32 %v401, %v1422
  %1424 = vdwg.mxu0
  %v1425 = vxor.u32 %v1421, 2147483648
  %v1426 = vmul.f32 %v1425, 1.442695
  %v1427 = vpow.pop %v1426
  %v1428 = vadd.f32 %v1427, 1.0
  %v1429 = vrcp.pop %v1428
  %v1430 = vmul.f32 1.0, %v1429
  %1432 = vrot.lane.b32.xlu0 %v1423, 64
  %v1433 = vpop.permute.xlu0 %1432
  %v1435 = vmul.f32 %v1430, %v1433
  %v1436 = vadd.f32 %v1423, %v1435
  %v1437 = vtanh.pop %v1436
  %v1438 = vsub.f32 1.0, %v1430
  %1440 = vrot.lane.b32.xlu0 %v1437, 64
  %v1441 = vpop.permute.xlu0 %1440
  %v1443 = vmul.f32 %v1438, %v1441
  %v1444 = vmul.f32 %v1430, %v1255
  %v1445 = vadd.f32 %v1443, %v1444
  %v1446 = vld [vmem:[#allocation2 + $0x60] sm:$0xff]
  %v1447 = vld [vmem:[#allocation2 + $0x68] sm:$0xff]
  %v1448 = vsel %vm216, %v1351, 0
  %1450 = vmatprep.subr.mxu0 %v235
  %1451 = vmatpush1.msra.mxu0 %v234
  %1452 = vmatprep.subr.mxu0 %v237
  %1453 = vmatpush1.msra.mxu0 %v236
  %1454 = vmatprep.subr.mxu0 %v239
  %1455 = vmatpush1.msra.mxu0 %v238
  %1456 = vmatprep.subr.mxu0 %v241
  %1457 = vmatpush1.msra.mxu0 %v240
  %1458 = vmatprep.subr.mxu0 %v243
  %1459 = vmatpush1.msra.mxu0 %v242
  %1460 = vmatprep.subr.mxu0 %v245
  %1461 = vmatpush1.msra.mxu0 %v244
  %1462 = vmatprep.subr.mxu0 %v247
  %1463 = vmatpush1.msra.mxu0 %v246
  %1464 = vmatprep.subr.mxu0 %v249
  %1465 = vmatpush1.msra.mxu0 %v248
  %1466 = vmatprep.subr.mxu0 0.0
  %1467 = vmatpush1.msra.mxu0 0.0
  %1468 = vmatprep.subr.mxu0 0.0
  %1469 = vmatpush1.msra.mxu0 0.0
  %1470 = vmatprep.subr.mxu0 0.0
  %1471 = vmatpush1.msra.mxu0 0.0
  %1472 = vmatprep.subr.mxu0 0.0
  %1473 = vmatpush1.msra.mxu0 0.0
  %1474 = vmatprep.subr.mxu0 0.0
  %1475 = vmatpush1.msra.mxu0 0.0
  %1476 = vmatprep.subr.mxu0 0.0
  %1477 = vmatpush1.msra.mxu0 0.0
  %1478 = vmatprep.subr.mxu0 0.0
  %1479 = vmatpush1.msra.mxu0 0.0
  %1480 = vmatprep.subr.mxu0 0.0
  %1481 = vmatpush1.msra.mxu0 0.0
  %1482 = vmatprep.subr.mxu0 0.0
  %1483 = vmatpush1.msra.mxu0 0.0
  %1484 = vmatprep.subr.mxu0 0.0
  %1485 = vmatpush1.msra.mxu0 0.0
  %1486 = vmatprep.subr.mxu0 0.0
  %1487 = vmatpush1.msra.mxu0 0.0
  %1488 = vmatprep.subr.mxu0 0.0
  %1489 = vmatpush1.msra.mxu0 0.0
  %1490 = vmatprep.subr.mxu0 0.0
  %1491 = vmatpush1.msra.mxu0 0.0
  %1492 = vmatprep.subr.mxu0 0.0
  %1493 = vmatpush1.msra.mxu0 0.0
  %1494 = vmatprep.subr.mxu0 0.0
  %1495 = vmatpush1.msra.mxu0 0.0
  %1496 = vmatprep.subr.mxu0 0.0
  %1497 = vmatpush1.msra.mxu0 0.0
  %1498 = vmatprep.subr.mxu0 0.0
  %1499 = vmatpush1.msra.mxu0 0.0
  %1500 = vmatprep.subr.mxu0 0.0
  %1501 = vmatpush1.msra.mxu0 0.0
  %1502 = vmatprep.subr.mxu0 0.0
  %1503 = vmatpush1.msra.mxu0 0.0
  %1504 = vmatprep.subr.mxu0 0.0
  %1505 = vmatpush1.msra.mxu0 0.0
  %1506 = vmatprep.subr.mxu0 0.0
  %1507 = vmatpush1.msra.mxu0 0.0
  %1508 = vmatprep.subr.mxu0 0.0
  %1509 = vmatpush1.msra.mxu0 0.0
  %1510 = vmatprep.subr.mxu0 0.0
  %1511 = vmatpush1.msra.mxu0 0.0
  %1512 = vmatprep.subr.mxu0 0.0
  %1513 = vmatpush1.msra.mxu0 0.0
  %1514 = vmatprep.mubr.f32.mxu0 0.0
  %1515 = vmatmul.mubr.f32.gmra.mrb[0].mxu0 %v1448
  %v1516 = vpop.f32.mrb[0].mxu0
  %v1517 = vadd.f32 %v256, %v1516
  %v1518 = vpop.f32.mrb[0].mxu0
  %v1519 = vadd.f32 %v260, %v1518
  %1520 = vdwg.mxu0
  %v1521 = vadd.f32 %v1446, %v1517
  %v1522 = vxor.u32 %v1521, 2147483648
  %v1523 = vmul.f32 %v1522, 1.442695
  %v1524 = vpow.pop %v1523
  %v1525 = vadd.f32 %v1524, 1.0
  %v1526 = vrcp.pop %v1525
  %v1527 = vmul.f32 1.0, %v1526
  %v1528 = vmul.f32 %v1527, %v1519
  %v1529 = vadd.f32 %v1447, %v1528
  %v1530 = vtanh.pop %v1529
  %v1531 = vsub.f32 1.0, %v1527
  %1533 = vrot.lane.b32.xlu0 %v1530, 64
  %v1534 = vpop.permute.xlu0 %1533
  %v1536 = vmul.f32 %v1531, %v1534
  %v1537 = vmul.f32 %v1527, %v1348
  %v1538 = vadd.f32 %v1536, %v1537
  %1540 = vrot.lane.b32.xlu0 %v1538, 64
  %v1541 = vpop.permute.xlu0 %1540
  %v1543 = vsel %vm216, %v1541, %v1445
  %1544 = vmatprep.subr.mxu0 %v361
  %1545 = vmatpush1.msra.mxu0 %v360
  %1546 = vmatprep.subr.mxu0 %v363
  %1547 = vmatpush1.msra.mxu0 %v362
  %1548 = vmatprep.subr.mxu0 %v365
  %1549 = vmatpush1.msra.mxu0 %v364
  %1550 = vmatprep.subr.mxu0 %v367
  %1551 = vmatpush1.msra.mxu0 %v366
  %1552 = vmatprep.subr.mxu0 %v369
  %1553 = vmatpush1.msra.mxu0 %v368
  %1554 = vmatprep.subr.mxu0 %v371
  %1555 = vmatpush1.msra.mxu0 %v370
  %1556 = vmatprep.subr.mxu0 %v373
  %1557 = vmatpush1.msra.mxu0 %v372
  %1558 = vmatprep.subr.mxu0 %v375
  %1559 = vmatpush1.msra.mxu0 %v374
  %1560 = vmatprep.subr.mxu0 %v377
  %1561 = vmatpush1.msra.mxu0 %v376
  %1562 = vmatprep.subr.mxu0 %v379
  %1563 = vmatpush1.msra.mxu0 %v378
  %1564 = vmatprep.subr.mxu0 %v381
  %1565 = vmatpush1.msra.mxu0 %v380
  %1566 = vmatprep.subr.mxu0 %v383
  %1567 = vmatpush1.msra.mxu0 %v382
  %1568 = vmatprep.subr.mxu0 %v385
  %1569 = vmatpush1.msra.mxu0 %v384
  %1570 = vmatprep.subr.mxu0 %v387
  %1571 = vmatpush1.msra.mxu0 %v386
  %1572 = vmatprep.subr.mxu0 %v389
  %1573 = vmatpush1.msra.mxu0 %v388
  %1574 = vmatprep.subr.mxu0 %v391
  %1575 = vmatpush1.msra.mxu0 %v390
  %1576 = vmatprep.subr.mxu0 0.0
  %1577 = vmatpush1.msra.mxu0 0.0
  %1578 = vmatprep.subr.mxu0 0.0
  %1579 = vmatpush1.msra.mxu0 0.0
  %1580 = vmatprep.subr.mxu0 0.0
  %1581 = vmatpush1.msra.mxu0 0.0
  %1582 = vmatprep.subr.mxu0 0.0
  %1583 = vmatpush1.msra.mxu0 0.0
  %1584 = vmatprep.subr.mxu0 0.0
  %1585 = vmatpush1.msra.mxu0 0.0
  %1586 = vmatprep.subr.mxu0 0.0
  %1587 = vmatpush1.msra.mxu0 0.0
  %1588 = vmatprep.subr.mxu0 0.0
  %1589 = vmatpush1.msra.mxu0 0.0
  %1590 = vmatprep.subr.mxu0 0.0
  %1591 = vmatpush1.msra.mxu0 0.0
  %1592 = vmatprep.subr.mxu0 0.0
  %1593 = vmatpush1.msra.mxu0 0.0
  %1594 = vmatprep.subr.mxu0 0.0
  %1595 = vmatpush1.msra.mxu0 0.0
  %1596 = vmatprep.subr.mxu0 0.0
  %1597 = vmatpush1.msra.mxu0 0.0
  %1598 = vmatprep.subr.mxu0 0.0
  %1599 = vmatpush1.msra.mxu0 0.0
  %1600 = vmatprep.subr.mxu0 0.0
  %1601 = vmatpush1.msra.mxu0 0.0
  %1602 = vmatprep.subr.mxu0 0.0
  %1603 = vmatpush1.msra.mxu0 0.0
  %1604 = vmatprep.subr.mxu0 0.0
  %1605 = vmatpush1.msra.mxu0 0.0
  %1606 = vmatprep.subr.mxu0 0.0
  %1607 = vmatpush1.msra.mxu0 0.0
  %1608 = vmatprep.mubr.f32.mxu0 0.0
  %1609 = vmatmul.mubr.f32.gmra.mrb[0].mxu0 %v1543
  %v1610 = vpop.f32.mrb[0].mxu0
  %v1611 = vadd.f32 %v397, %v1610
  %v1612 = vpop.f32.mrb[0].mxu0
  %v1613 = vadd.f32 %v401, %v1612
  %1614 = vdwg.mxu0
  %v1615 = vxor.u32 %v1611, 2147483648
  %v1616 = vmul.f32 %v1615, 1.442695
  %v1617 = vpow.pop %v1616
  %v1618 = vadd.f32 %v1617, 1.0
  %v1619 = vrcp.pop %v1618
  %v1620 = vmul.f32 1.0, %v1619
  %1622 = vrot.lane.b32.xlu0 %v1613, 64
  %v1623 = vpop.permute.xlu0 %1622
  %v1625 = vmul.f32 %v1620, %v1623
  %v1626 = vadd.f32 %v1613, %v1625
  %v1627 = vtanh.pop %v1626
  %v1628 = vsub.f32 1.0, %v1620
  %1630 = vrot.lane.b32.xlu0 %v1627, 64
  %v1631 = vpop.permute.xlu0 %1630
  %v1633 = vmul.f32 %v1628, %v1631
  %v1634 = vmul.f32 %v1620, %v1445
  %v1635 = vadd.f32 %v1633, %v1634
  %v1636 = vld [vmem:[#allocation2 + $0x70] sm:$0xff]
  %v1637 = vld [vmem:[#allocation2 + $0x78] sm:$0xff]
  %v1638 = vsel %vm216, %v1541, 0
  %1640 = vmatprep.subr.mxu0 %v235
  %1641 = vmatpush1.msra.mxu0 %v234
  %1642 = vmatprep.subr.mxu0 %v237
  %1643 = vmatpush1.msra.mxu0 %v236
  %1644 = vmatprep.subr.mxu0 %v239
  %1645 = vmatpush1.msra.mxu0 %v238
  %1646 = vmatprep.subr.mxu0 %v241
  %1647 = vmatpush1.msra.mxu0 %v240
  %1648 = vmatprep.subr.mxu0 %v243
  %1649 = vmatpush1.msra.mxu0 %v242
  %1650 = vmatprep.subr.mxu0 %v245
  %1651 = vmatpush1.msra.mxu0 %v244
  %1652 = vmatprep.subr.mxu0 %v247
  %1653 = vmatpush1.msra.mxu0 %v246
  %1654 = vmatprep.subr.mxu0 %v249
  %1655 = vmatpush1.msra.mxu0 %v248
  %1656 = vmatprep.subr.mxu0 0.0
  %1657 = vmatpush1.msra.mxu0 0.0
  %1658 = vmatprep.subr.mxu0 0.0
  %1659 = vmatpush1.msra.mxu0 0.0
  %1660 = vmatprep.subr.mxu0 0.0
  %1661 = vmatpush1.msra.mxu0 0.0
  %1662 = vmatprep.subr.mxu0 0.0
  %1663 = vmatpush1.msra.mxu0 0.0
  %1664 = vmatprep.subr.mxu0 0.0
  %1665 = vmatpush1.msra.mxu0 0.0
  %1666 = vmatprep.subr.mxu0 0.0
  %1667 = vmatpush1.msra.mxu0 0.0
  %1668 = vmatprep.subr.mxu0 0.0
  %1669 = vmatpush1.msra.mxu0 0.0
  %1670 = vmatprep.subr.mxu0 0.0
  %1671 = vmatpush1.msra.mxu0 0.0
  %1672 = vmatprep.subr.mxu0 0.0
  %1673 = vmatpush1.msra.mxu0 0.0
  %1674 = vmatprep.subr.mxu0 0.0
  %1675 = vmatpush1.msra.mxu0 0.0
  %1676 = vmatprep.subr.mxu0 0.0
  %1677 = vmatpush1.msra.mxu0 0.0
  %1678 = vmatprep.subr.mxu0 0.0
  %1679 = vmatpush1.msra.mxu0 0.0
  %1680 = vmatprep.subr.mxu0 0.0
  %1681 = vmatpush1.msra.mxu0 0.0
  %1682 = vmatprep.subr.mxu0 0.0
  %1683 = vmatpush1.msra.mxu0 0.0
  %1684 = vmatprep.subr.mxu0 0.0
  %1685 = vmatpush1.msra.mxu0 0.0
  %1686 = vmatprep.subr.mxu0 0.0
  %1687 = vmatpush1.msra.mxu0 0.0
  %1688 = vmatprep.subr.mxu0 0.0
  %1689 = vmatpush1.msra.mxu0 0.0
  %1690 = vmatprep.subr.mxu0 0.0
  %1691 = vmatpush1.msra.mxu0 0.0
  %1692 = vmatprep.subr.mxu0 0.0
  %1693 = vmatpush1.msra.mxu0 0.0
  %1694 = vmatprep.subr.mxu0 0.0
  %1695 = vmatpush1.msra.mxu0 0.0
  %1696 = vmatprep.subr.mxu0 0.0
  %1697 = vmatpush1.msra.mxu0 0.0
  %1698 = vmatprep.subr.mxu0 0.0
  %1699 = vmatpush1.msra.mxu0 0.0
  %1700 = vmatprep.subr.mxu0 0.0
  %1701 = vmatpush1.msra.mxu0 0.0
  %1702 = vmatprep.subr.mxu0 0.0
  %1703 = vmatpush1.msra.mxu0 0.0
  %1704 = vmatprep.mubr.f32.mxu0 0.0
  %1705 = vmatmul.mubr.f32.gmra.mrb[0].mxu0 %v1638
  %v1706 = vpop.f32.mrb[0].mxu0
  %v1707 = vadd.f32 %v256, %v1706
  %v1708 = vpop.f32.mrb[0].mxu0
  %v1709 = vadd.f32 %v260, %v1708
  %1710 = vdwg.mxu0
  %v1711 = vadd.f32 %v1636, %v1707
  %v1712 = vxor.u32 %v1711, 2147483648
  %v1713 = vmul.f32 %v1712, 1.442695
  %v1714 = vpow.pop %v1713
  %v1715 = vadd.f32 %v1714, 1.0
  %v1716 = vrcp.pop %v1715
  %v1717 = vmul.f32 1.0, %v1716
  %v1718 = vmul.f32 %v1717, %v1709
  %v1719 = vadd.f32 %v1637, %v1718
  %v1720 = vtanh.pop %v1719
  %v1721 = vsub.f32 1.0, %v1717
  %1723 = vrot.lane.b32.xlu0 %v1720, 64
  %v1724 = vpop.permute.xlu0 %1723
  %v1726 = vmul.f32 %v1721, %v1724
  %v1727 = vmul.f32 %v1717, %v1538
  %v1728 = vadd.f32 %v1726, %v1727
  %1730 = vrot.lane.b32.xlu0 %v1728, 64
  %v1731 = vpop.permute.xlu0 %1730
  %v1733 = vsel %vm216, %v1731, %v1635
  %1734 = vmatprep.subr.mxu0 %v361
  %1735 = vmatpush1.msra.mxu0 %v360
  %1736 = vmatprep.subr.mxu0 %v363
  %1737 = vmatpush1.msra.mxu0 %v362
  %1738 = vmatprep.subr.mxu0 %v365
  %1739 = vmatpush1.msra.mxu0 %v364
  %1740 = vmatprep.subr.mxu0 %v367
  %1741 = vmatpush1.msra.mxu0 %v366
  %1742 = vmatprep.subr.mxu0 %v369
  %1743 = vmatpush1.msra.mxu0 %v368
  %1744 = vmatprep.subr.mxu0 %v371
  %1745 = vmatpush1.msra.mxu0 %v370
  %1746 = vmatprep.subr.mxu0 %v373
  %1747 = vmatpush1.msra.mxu0 %v372
  %1748 = vmatprep.subr.mxu0 %v375
  %1749 = vmatpush1.msra.mxu0 %v374
  %1750 = vmatprep.subr.mxu0 %v377
  %1751 = vmatpush1.msra.mxu0 %v376
  %1752 = vmatprep.subr.mxu0 %v379
  %1753 = vmatpush1.msra.mxu0 %v378
  %1754 = vmatprep.subr.mxu0 %v381
  %1755 = vmatpush1.msra.mxu0 %v380
  %1756 = vmatprep.subr.mxu0 %v383
  %1757 = vmatpush1.msra.mxu0 %v382
  %1758 = vmatprep.subr.mxu0 %v385
  %1759 = vmatpush1.msra.mxu0 %v384
  %1760 = vmatprep.subr.mxu0 %v387
  %1761 = vmatpush1.msra.mxu0 %v386
  %1762 = vmatprep.subr.mxu0 %v389
  %1763 = vmatpush1.msra.mxu0 %v388
  %1764 = vmatprep.subr.mxu0 %v391
  %1765 = vmatpush1.msra.mxu0 %v390
  %1766 = vmatprep.subr.mxu0 0.0
  %1767 = vmatpush1.msra.mxu0 0.0
  %1768 = vmatprep.subr.mxu0 0.0
  %1769 = vmatpush1.msra.mxu0 0.0
  %1770 = vmatprep.subr.mxu0 0.0
  %1771 = vmatpush1.msra.mxu0 0.0
  %1772 = vmatprep.subr.mxu0 0.0
  %1773 = vmatpush1.msra.mxu0 0.0
  %1774 = vmatprep.subr.mxu0 0.0
  %1775 = vmatpush1.msra.mxu0 0.0
  %1776 = vmatprep.subr.mxu0 0.0
  %1777 = vmatpush1.msra.mxu0 0.0
  %1778 = vmatprep.subr.mxu0 0.0
  %1779 = vmatpush1.msra.mxu0 0.0
  %1780 = vmatprep.subr.mxu0 0.0
  %1781 = vmatpush1.msra.mxu0 0.0
  %1782 = vmatprep.subr.mxu0 0.0
  %1783 = vmatpush1.msra.mxu0 0.0
  %1784 = vmatprep.subr.mxu0 0.0
  %1785 = vmatpush1.msra.mxu0 0.0
  %1786 = vmatprep.subr.mxu0 0.0
  %1787 = vmatpush1.msra.mxu0 0.0
  %1788 = vmatprep.subr.mxu0 0.0
  %1789 = vmatpush1.msra.mxu0 0.0
  %1790 = vmatprep.subr.mxu0 0.0
  %1791 = vmatpush1.msra.mxu0 0.0
  %1792 = vmatprep.subr.mxu0 0.0
  %1793 = vmatpush1.msra.mxu0 0.0
  %1794 = vmatprep.subr.mxu0 0.0
  %1795 = vmatpush1.msra.mxu0 0.0
  %1796 = vmatprep.subr.mxu0 0.0
  %1797 = vmatpush1.msra.mxu0 0.0
  %1798 = vmatprep.mubr.f32.mxu0 0.0
  %1799 = vmatmul.mubr.f32.gmra.mrb[0].mxu0 %v1733
  %v1800 = vpop.f32.mrb[0].mxu0
  %v1801 = vadd.f32 %v397, %v1800
  %v1802 = vpop.f32.mrb[0].mxu0
  %v1803 = vadd.f32 %v401, %v1802
  %1804 = vdwg.mxu0
  %v1805 = vxor.u32 %v1801, 2147483648
  %v1806 = vmul.f32 %v1805, 1.442695
  %v1807 = vpow.pop %v1806
  %v1808 = vadd.f32 %v1807, 1.0
  %v1809 = vrcp.pop %v1808
  %v1810 = vmul.f32 1.0, %v1809
  %1812 = vrot.lane.b32.xlu0 %v1803, 64
  %v1813 = vpop.permute.xlu0 %1812
  %v1815 = vmul.f32 %v1810, %v1813
  %v1816 = vadd.f32 %v1803, %v1815
  %v1817 = vtanh.pop %v1816
  %v1818 = vsub.f32 1.0, %v1810
  %1820 = vrot.lane.b32.xlu0 %v1817, 64
  %v1821 = vpop.permute.xlu0 %1820
  %v1823 = vmul.f32 %v1818, %v1821
  %v1824 = vmul.f32 %v1810, %v1635
  %v1825 = vadd.f32 %v1823, %v1824
  %vm1826 = vcmp.ge.f32.partialorder %v1825, 0.0
  %v1827 = vmul.f32 %v1825, 0.01
  %v1828 = vsel %vm1826, %v1825, %v1827
  %v1829 = vld [vmem:[%s1] sm:$0xff]
  %1831 = vrot.lane.b32.xlu0 %v1828, 64
  %v1832 = vpop.permute.xlu0 %1831
  %1835 = vrot.lane.b32.xlu0 %v1829, 64
  %v1836 = vpop.permute.xlu0 %1835
  %v1838 = vsel %vm216, %v1832, %v1836
  %v1839 = vld [vmem:[%s6] sm:$0xff]
  %v1840 = vld [vmem:[%s6 + $0x8] sm:$0xff]
  %v1841 = vld [vmem:[%s6 + $0x10] sm:$0xff]
  %v1842 = vld [vmem:[%s6 + $0x18] sm:$0xff]
  %v1843 = vld [vmem:[%s6 + $0x20] sm:$0xff]
  %v1844 = vld [vmem:[%s6 + $0x28] sm:$0xff]
  %v1845 = vld [vmem:[%s6 + $0x30] sm:$0xff]
  %v1846 = vld [vmem:[%s6 + $0x38] sm:$0xff]
  %v1847 = vld [vmem:[%s6 + $0x40] sm:$0xff]
  %v1848 = vld [vmem:[%s6 + $0x48] sm:$0xff]
  %v1849 = vld [vmem:[%s6 + $0x50] sm:$0xff]
  %v1850 = vld [vmem:[%s6 + $0x58] sm:$0xff]
  %v1851 = vld [vmem:[%s6 + $0x60] sm:$0xff]
  %v1852 = vld [vmem:[%s6 + $0x68] sm:$0xff]
  %v1853 = vld [vmem:[%s6 + $0x70] sm:$0xff]
  %v1854 = vld [vmem:[%s6 + $0x78] sm:$0xff]
  %v1855 = vld [vmem:[%s6 + $0x80] sm:$0xff]
  %v1856 = vld [vmem:[%s6 + $0x88] sm:$0xff]
  %v1857 = vld [vmem:[%s6 + $0x90] sm:$0xff]
  %v1858 = vld [vmem:[%s6 + $0x98] sm:$0xff]
  %v1859 = vld [vmem:[%s6 + $0xa0] sm:$0xff]
  %v1860 = vld [vmem:[%s6 + $0xa8] sm:$0xff]
  %v1861 = vld [vmem:[%s6 + $0xb0] sm:$0xff]
  %v1862 = vld [vmem:[%s6 + $0xb8] sm:$0xff]
  %v1863 = vld [vmem:[%s6 + $0xc0] sm:$0xff]
  %v1864 = vld [vmem:[%s6 + $0xc8] sm:$0xff]
  %v1865 = vld [vmem:[%s6 + $0xd0] sm:$0xff]
  %v1866 = vld [vmem:[%s6 + $0xd8] sm:$0xff]
  %v1867 = vld [vmem:[%s6 + $0xe0] sm:$0xff]
  %v1868 = vld [vmem:[%s6 + $0xe8] sm:$0xff]
  %v1869 = vld [vmem:[%s6 + $0xf0] sm:$0xff]
  %v1870 = vld [vmem:[%s6 + $0xf8] sm:$0xff]
  %v1871 = vld [vmem:[%s7] sm:$0x3]
  %v1873 = vlaneseq
  %v1874 = vshrl.u32 %v1873, 7
  %v1875 = vsub.s32 0, %v1874
  %v1876 = vrot.slane %v1871, %v1875
  %v1877 = vlaneseq
  %v1878 = vshrl.u32 %v1877, 7
  %v1879 = vsub.s32 1, %v1878
  %v1880 = vrot.slane %v1871, %v1879
  %1883 = vmatprep.subr.mxu0 %v1840
  %1884 = vmatpush1.msra.mxu0 %v1839
  %1885 = vmatprep.subr.mxu0 %v1842
  %1886 = vmatpush1.msra.mxu0 %v1841
  %1887 = vmatprep.subr.mxu0 %v1844
  %1888 = vmatpush1.msra.mxu0 %v1843
  %1889 = vmatprep.subr.mxu0 %v1846
  %1890 = vmatpush1.msra.mxu0 %v1845
  %1891 = vmatprep.subr.mxu0 %v1848
  %1892 = vmatpush1.msra.mxu0 %v1847
  %1893 = vmatprep.subr.mxu0 %v1850
  %1894 = vmatpush1.msra.mxu0 %v1849
  %1895 = vmatprep.subr.mxu0 %v1852
  %1896 = vmatpush1.msra.mxu0 %v1851
  %1897 = vmatprep.subr.mxu0 %v1854
  %1898 = vmatpush1.msra.mxu0 %v1853
  %1899 = vmatprep.subr.mxu0 %v1856
  %1900 = vmatpush1.msra.mxu0 %v1855
  %1901 = vmatprep.subr.mxu0 %v1858
  %1902 = vmatpush1.msra.mxu0 %v1857
  %1903 = vmatprep.subr.mxu0 %v1860
  %1904 = vmatpush1.msra.mxu0 %v1859
  %1905 = vmatprep.subr.mxu0 %v1862
  %1906 = vmatpush1.msra.mxu0 %v1861
  %1907 = vmatprep.subr.mxu0 %v1864
  %1908 = vmatpush1.msra.mxu0 %v1863
  %1909 = vmatprep.subr.mxu0 %v1866
  %1910 = vmatpush1.msra.mxu0 %v1865
  %1911 = vmatprep.subr.mxu0 %v1868
  %1912 = vmatpush1.msra.mxu0 %v1867
  %1913 = vmatprep.subr.mxu0 %v1870
  %1914 = vmatpush1.msra.mxu0 %v1869
  %1915 = vmatprep.subr.mxu0 0.0
  %1916 = vmatpush1.msra.mxu0 0.0
  %1917 = vmatprep.subr.mxu0 0.0
  %1918 = vmatpush1.msra.mxu0 0.0
  %1919 = vmatprep.subr.mxu0 0.0
  %1920 = vmatpush1.msra.mxu0 0.0
  %1921 = vmatprep.subr.mxu0 0.0
  %1922 = vmatpush1.msra.mxu0 0.0
  %1923 = vmatprep.subr.mxu0 0.0
  %1924 = vmatpush1.msra.mxu0 0.0
  %1925 = vmatprep.subr.mxu0 0.0
  %1926 = vmatpush1.msra.mxu0 0.0
  %1927 = vmatprep.subr.mxu0 0.0
  %1928 = vmatpush1.msra.mxu0 0.0
  %1929 = vmatprep.subr.mxu0 0.0
  %1930 = vmatpush1.msra.mxu0 0.0
  %1931 = vmatprep.subr.mxu0 0.0
  %1932 = vmatpush1.msra.mxu0 0.0
  %1933 = vmatprep.subr.mxu0 0.0
  %1934 = vmatpush1.msra.mxu0 0.0
  %1935 = vmatprep.subr.mxu0 0.0
  %1936 = vmatpush1.msra.mxu0 0.0
  %1937 = vmatprep.subr.mxu0 0.0
  %1938 = vmatpush1.msra.mxu0 0.0
  %1939 = vmatprep.subr.mxu0 0.0
  %1940 = vmatpush1.msra.mxu0 0.0
  %1941 = vmatprep.subr.mxu0 0.0
  %1942 = vmatpush1.msra.mxu0 0.0
  %1943 = vmatprep.subr.mxu0 0.0
  %1944 = vmatpush1.msra.mxu0 0.0
  %1945 = vmatprep.subr.mxu0 0.0
  %1946 = vmatpush1.msra.mxu0 0.0
  %1947 = vmatprep.mubr.f32.mxu0 0.0
  %1948 = vmatmul.mubr.f32.gmra.mrb[0].mxu0 %v1838
  %v1949 = vpop.f32.mrb[0].mxu0
  %v1950 = vadd.f32 %v1876, %v1949
  %v1951 = vpop.f32.mrb[0].mxu0
  %v1952 = vadd.f32 %v1880, %v1951
  %1953 = vdwg.mxu0
  %vm1954 = vcmp.ge.f32.partialorder %v1950, 0.0
  %vm1955 = vcmp.ge.f32.partialorder %v1952, 0.0
  %v1956 = vmul.f32 %v1950, 0.01
  %v1957 = vmul.f32 %v1952, 0.01
  %v1958 = vsel %vm1954, %v1950, %v1956
  %v1959 = vsel %vm1955, %v1952, %v1957
  %v1960 = vld [vmem:[%s8] sm:$0xff]
  %v1961 = vld [vmem:[%s8 + $0x8] sm:$0xff]
  %v1962 = vld [vmem:[%s8 + $0x10] sm:$0xff]
  %v1963 = vld [vmem:[%s8 + $0x18] sm:$0xff]
  %v1964 = vld [vmem:[%s8 + $0x20] sm:$0xff]
  %v1965 = vld [vmem:[%s8 + $0x28] sm:$0xff]
  %v1966 = vld [vmem:[%s8 + $0x30] sm:$0xff]
  %v1967 = vld [vmem:[%s8 + $0x38] sm:$0xff]
  %v1968 = vld [vmem:[%s8 + $0x40] sm:$0xff]
  %v1969 = vld [vmem:[%s8 + $0x48] sm:$0xff]
  %v1970 = vld [vmem:[%s8 + $0x50] sm:$0xff]
  %v1971 = vld [vmem:[%s8 + $0x58] sm:$0xff]
  %v1972 = vld [vmem:[%s8 + $0x60] sm:$0xff]
  %v1973 = vld [vmem:[%s8 + $0x68] sm:$0xff]
  %v1974 = vld [vmem:[%s8 + $0x70] sm:$0xff]
  %v1975 = vld [vmem:[%s8 + $0x78] sm:$0xff]
  %v1976 = vld [vmem:[%s8 + $0x80] sm:$0xff]
  %v1977 = vld [vmem:[%s8 + $0x88] sm:$0xff]
  %v1978 = vld [vmem:[%s8 + $0x90] sm:$0xff]
  %v1979 = vld [vmem:[%s8 + $0x98] sm:$0xff]
  %v1980 = vld [vmem:[%s8 + $0xa0] sm:$0xff]
  %v1981 = vld [vmem:[%s8 + $0xa8] sm:$0xff]
  %v1982 = vld [vmem:[%s8 + $0xb0] sm:$0xff]
  %v1983 = vld [vmem:[%s8 + $0xb8] sm:$0xff]
  %v1984 = vld [vmem:[%s8 + $0xc0] sm:$0xff]
  %v1985 = vld [vmem:[%s8 + $0xc8] sm:$0xff]
  %v1986 = vld [vmem:[%s8 + $0xd0] sm:$0xff]
  %v1987 = vld [vmem:[%s8 + $0xd8] sm:$0xff]
  %v1988 = vld [vmem:[%s8 + $0xe0] sm:$0xff]
  %v1989 = vld [vmem:[%s8 + $0xe8] sm:$0xff]
  %v1990 = vld [vmem:[%s8 + $0xf0] sm:$0xff]
  %v1991 = vld [vmem:[%s8 + $0xf8] sm:$0xff]
  %v1992 = vld [vmem:[%s9] sm:$0x1]
  %v1994 = vlaneseq
  %v1995 = vshrl.u32 %v1994, 7
  %v1996 = vsub.s32 0, %v1995
  %v1997 = vrot.slane %v1992, %v1996
  %1999 = vmatprep.subr.mxu0 0.0
  %2000 = vmatpush1.msra.mxu0 %v1960
  %2001 = vmatprep.subr.mxu0 0.0
  %2002 = vmatpush1.msra.mxu0 %v1961
  %2003 = vmatprep.subr.mxu0 0.0
  %2004 = vmatpush1.msra.mxu0 %v1962
  %2005 = vmatprep.subr.mxu0 0.0
  %2006 = vmatpush1.msra.mxu0 %v1963
  %2007 = vmatprep.subr.mxu0 0.0
  %2008 = vmatpush1.msra.mxu0 %v1964
  %2009 = vmatprep.subr.mxu0 0.0
  %2010 = vmatpush1.msra.mxu0 %v1965
  %2011 = vmatprep.subr.mxu0 0.0
  %2012 = vmatpush1.msra.mxu0 %v1966
  %2013 = vmatprep.subr.mxu0 0.0
  %2014 = vmatpush1.msra.mxu0 %v1967
  %2015 = vmatprep.subr.mxu0 0.0
  %2016 = vmatpush1.msra.mxu0 %v1968
  %2017 = vmatprep.subr.mxu0 0.0
  %2018 = vmatpush1.msra.mxu0 %v1969
  %2019 = vmatprep.subr.mxu0 0.0
  %2020 = vmatpush1.msra.mxu0 %v1970
  %2021 = vmatprep.subr.mxu0 0.0
  %2022 = vmatpush1.msra.mxu0 %v1971
  %2023 = vmatprep.subr.mxu0 0.0
  %2024 = vmatpush1.msra.mxu0 %v1972
  %2025 = vmatprep.subr.mxu0 0.0
  %2026 = vmatpush1.msra.mxu0 %v1973
  %2027 = vmatprep.subr.mxu0 0.0
  %2028 = vmatpush1.msra.mxu0 %v1974
  %2029 = vmatprep.subr.mxu0 0.0
  %2030 = vmatpush1.msra.mxu0 %v1975
  %2031 = vmatprep.subr.mxu0 0.0
  %2032 = vmatpush1.msra.mxu0 %v1976
  %2033 = vmatprep.subr.mxu0 0.0
  %2034 = vmatpush1.msra.mxu0 %v1977
  %2035 = vmatprep.subr.mxu0 0.0
  %2036 = vmatpush1.msra.mxu0 %v1978
  %2037 = vmatprep.subr.mxu0 0.0
  %2038 = vmatpush1.msra.mxu0 %v1979
  %2039 = vmatprep.subr.mxu0 0.0
  %2040 = vmatpush1.msra.mxu0 %v1980
  %2041 = vmatprep.subr.mxu0 0.0
  %2042 = vmatpush1.msra.mxu0 %v1981
  %2043 = vmatprep.subr.mxu0 0.0
  %2044 = vmatpush1.msra.mxu0 %v1982
  %2045 = vmatprep.subr.mxu0 0.0
  %2046 = vmatpush1.msra.mxu0 %v1983
  %2047 = vmatprep.subr.mxu0 0.0
  %2048 = vmatpush1.msra.mxu0 %v1984
  %2049 = vmatprep.subr.mxu0 0.0
  %2050 = vmatpush1.msra.mxu0 %v1985
  %2051 = vmatprep.subr.mxu0 0.0
  %2052 = vmatpush1.msra.mxu0 %v1986
  %2053 = vmatprep.subr.mxu0 0.0
  %2054 = vmatpush1.msra.mxu0 %v1987
  %2055 = vmatprep.subr.mxu0 0.0
  %2056 = vmatpush1.msra.mxu0 %v1988
  %2057 = vmatprep.subr.mxu0 0.0
  %2058 = vmatpush1.msra.mxu0 %v1989
  %2059 = vmatprep.subr.mxu0 0.0
  %2060 = vmatpush1.msra.mxu0 %v1990
  %2061 = vmatprep.subr.mxu0 0.0
  %2062 = vmatpush1.msra.mxu0 %v1991
  %2063 = vmatprep.mubr.f32.mxu0 %v1959
  %2064 = vmatmul.mubr.f32.gmra.mrb[0].mxu0 %v1958
  %v2065 = vpop.f32.mrb[0].mxu0
  %v2066 = vadd.f32 %v1997, %v2065
  %v2067 = vpop.f32.mrb[0].mxu0
  %2068 = vdwg.mxu0
  %vm2069 = vcmp.ge.f32.partialorder %v2066, 0.0
  %v2070 = vmul.f32 %v2066, 0.01
  %v2071 = vsel %vm2069, %v2066, %v2070
  %v2072 = vld [vmem:[%s10] sm:$0xff]
  %v2073 = vld [vmem:[%s10 + $0x8] sm:$0xff]
  %v2074 = vld [vmem:[%s10 + $0x10] sm:$0xff]
  %v2075 = vld [vmem:[%s10 + $0x18] sm:$0xff]
  %v2076 = vld [vmem:[%s10 + $0x20] sm:$0xff]
  %v2077 = vld [vmem:[%s10 + $0x28] sm:$0xff]
  %v2078 = vld [vmem:[%s10 + $0x30] sm:$0xff]
  %v2079 = vld [vmem:[%s10 + $0x38] sm:$0xff]
  %v2080 = vld [vmem:[%s10 + $0x40] sm:$0xff]
  %v2081 = vld [vmem:[%s10 + $0x48] sm:$0xff]
  %v2082 = vld [vmem:[%s10 + $0x50] sm:$0xff]
  %v2083 = vld [vmem:[%s10 + $0x58] sm:$0xff]
  %v2084 = vld [vmem:[%s10 + $0x60] sm:$0xff]
  %v2085 = vld [vmem:[%s10 + $0x68] sm:$0xff]
  %v2086 = vld [vmem:[%s10 + $0x70] sm:$0xff]
  %v2087 = vld [vmem:[%s10 + $0x78] sm:$0xff]
  %v2088 = vld [vmem:[%s11] sm:$0x1]
  %v2090 = vlaneseq
  %v2091 = vshrl.u32 %v2090, 7
  %v2092 = vsub.s32 0, %v2091
  %v2093 = vrot.slane %v2088, %v2092
  %2095 = vmatprep.subr.mxu0 0.0
  %2096 = vmatpush1.msra.mxu0 %v2072
  %2097 = vmatprep.subr.mxu0 0.0
  %2098 = vmatpush1.msra.mxu0 %v2073
  %2099 = vmatprep.subr.mxu0 0.0
  %2100 = vmatpush1.msra.mxu0 %v2074
  %2101 = vmatprep.subr.mxu0 0.0
  %2102 = vmatpush1.msra.mxu0 %v2075
  %2103 = vmatprep.subr.mxu0 0.0
  %2104 = vmatpush1.msra.mxu0 %v2076
  %2105 = vmatprep.subr.mxu0 0.0
  %2106 = vmatpush1.msra.mxu0 %v2077
  %2107 = vmatprep.subr.mxu0 0.0
  %2108 = vmatpush1.msra.mxu0 %v2078
  %2109 = vmatprep.subr.mxu0 0.0
  %2110 = vmatpush1.msra.mxu0 %v2079
  %2111 = vmatprep.subr.mxu0 0.0
  %2112 = vmatpush1.msra.mxu0 %v2080
  %2113 = vmatprep.subr.mxu0 0.0
  %2114 = vmatpush1.msra.mxu0 %v2081
  %2115 = vmatprep.subr.mxu0 0.0
  %2116 = vmatpush1.msra.mxu0 %v2082
  %2117 = vmatprep.subr.mxu0 0.0
  %2118 = vmatpush1.msra.mxu0 %v2083
  %2119 = vmatprep.subr.mxu0 0.0
  %2120 = vmatpush1.msra.mxu0 %v2084
  %2121 = vmatprep.subr.mxu0 0.0
  %2122 = vmatpush1.msra.mxu0 %v2085
  %2123 = vmatprep.subr.mxu0 0.0
  %2124 = vmatpush1.msra.mxu0 %v2086
  %2125 = vmatprep.subr.mxu0 0.0
  %2126 = vmatpush1.msra.mxu0 %v2087
  %2127 = vmatprep.subr.mxu0 0.0
  %2128 = vmatpush1.msra.mxu0 0.0
  %2129 = vmatprep.subr.mxu0 0.0
  %2130 = vmatpush1.msra.mxu0 0.0
  %2131 = vmatprep.subr.mxu0 0.0
  %2132 = vmatpush1.msra.mxu0 0.0
  %2133 = vmatprep.subr.mxu0 0.0
  %2134 = vmatpush1.msra.mxu0 0.0
  %2135 = vmatprep.subr.mxu0 0.0
  %2136 = vmatpush1.msra.mxu0 0.0
  %2137 = vmatprep.subr.mxu0 0.0
  %2138 = vmatpush1.msra.mxu0 0.0
  %2139 = vmatprep.subr.mxu0 0.0
  %2140 = vmatpush1.msra.mxu0 0.0
  %2141 = vmatprep.subr.mxu0 0.0
  %2142 = vmatpush1.msra.mxu0 0.0
  %2143 = vmatprep.subr.mxu0 0.0
  %2144 = vmatpush1.msra.mxu0 0.0
  %2145 = vmatprep.subr.mxu0 0.0
  %2146 = vmatpush1.msra.mxu0 0.0
  %2147 = vmatprep.subr.mxu0 0.0
  %2148 = vmatpush1.msra.mxu0 0.0
  %2149 = vmatprep.subr.mxu0 0.0
  %2150 = vmatpush1.msra.mxu0 0.0
  %2151 = vmatprep.subr.mxu0 0.0
  %2152 = vmatpush1.msra.mxu0 0.0
  %2153 = vmatprep.subr.mxu0 0.0
  %2154 = vmatpush1.msra.mxu0 0.0
  %2155 = vmatprep.subr.mxu0 0.0
  %2156 = vmatpush1.msra.mxu0 0.0
  %2157 = vmatprep.subr.mxu0 0.0
  %2158 = vmatpush1.msra.mxu0 0.0
  %2159 = vmatprep.mubr.f32.mxu0 0.0
  %2160 = vmatmul.mubr.f32.gmra.mrb[0].mxu0 %v2071
  %v2161 = vpop.f32.mrb[0].mxu0
  %v2162 = vadd.f32 %v2093, %v2161
  %v2163 = vpop.f32.mrb[0].mxu0
  %2164 = vdwg.mxu0
  %vm2165 = vcmp.ge.f32.partialorder %v2162, 0.0
  %v2166 = vmul.f32 %v2162, 0.01
  %v2167 = vsel %vm2165, %v2162, %v2166
  %v2168 = vld [vmem:[%s12] sm:$0xff]
  %v2169 = vld [vmem:[%s12 + $0x8] sm:$0xff]
  %v2170 = vld [vmem:[%s12 + $0x10] sm:$0xff]
  %v2171 = vld [vmem:[%s12 + $0x18] sm:$0xff]
  %v2172 = vld [vmem:[%s12 + $0x20] sm:$0xff]
  %v2173 = vld [vmem:[%s12 + $0x28] sm:$0xff]
  %v2174 = vld [vmem:[%s12 + $0x30] sm:$0xff]
  %v2175 = vld [vmem:[%s12 + $0x38] sm:$0xff]
  %v2176 = vld [vmem:[%s13] sm:$0x1]
  %v2178 = vlaneseq
  %v2179 = vshrl.u32 %v2178, 7
  %v2180 = vsub.s32 0, %v2179
  %v2181 = vrot.slane %v2176, %v2180
  %v2184 = vsel %vm216, %v2167, 0
  %2186 = vmatprep.subr.mxu0 0.0
  %2187 = vmatpush1.msra.mxu0 %v2168
  %2188 = vmatprep.subr.mxu0 0.0
  %2189 = vmatpush1.msra.mxu0 %v2169
  %2190 = vmatprep.subr.mxu0 0.0
  %2191 = vmatpush1.msra.mxu0 %v2170
  %2192 = vmatprep.subr.mxu0 0.0
  %2193 = vmatpush1.msra.mxu0 %v2171
  %2194 = vmatprep.subr.mxu0 0.0
  %2195 = vmatpush1.msra.mxu0 %v2172
  %2196 = vmatprep.subr.mxu0 0.0
  %2197 = vmatpush1.msra.mxu0 %v2173
  %2198 = vmatprep.subr.mxu0 0.0
  %2199 = vmatpush1.msra.mxu0 %v2174
  %2200 = vmatprep.subr.mxu0 0.0
  %2201 = vmatpush1.msra.mxu0 %v2175
  %2202 = vmatprep.subr.mxu0 0.0
  %2203 = vmatpush1.msra.mxu0 0.0
  %2204 = vmatprep.subr.mxu0 0.0
  %2205 = vmatpush1.msra.mxu0 0.0
  %2206 = vmatprep.subr.mxu0 0.0
  %2207 = vmatpush1.msra.mxu0 0.0
  %2208 = vmatprep.subr.mxu0 0.0
  %2209 = vmatpush1.msra.mxu0 0.0
  %2210 = vmatprep.subr.mxu0 0.0
  %2211 = vmatpush1.msra.mxu0 0.0
  %2212 = vmatprep.subr.mxu0 0.0
  %2213 = vmatpush1.msra.mxu0 0.0
  %2214 = vmatprep.subr.mxu0 0.0
  %2215 = vmatpush1.msra.mxu0 0.0
  %2216 = vmatprep.subr.mxu0 0.0
  %2217 = vmatpush1.msra.mxu0 0.0
  %2218 = vmatprep.subr.mxu0 0.0
  %2219 = vmatpush1.msra.mxu0 0.0
  %2220 = vmatprep.subr.mxu0 0.0
  %2221 = vmatpush1.msra.mxu0 0.0
  %2222 = vmatprep.subr.mxu0 0.0
  %2223 = vmatpush1.msra.mxu0 0.0
  %2224 = vmatprep.subr.mxu0 0.0
  %2225 = vmatpush1.msra.mxu0 0.0
  %2226 = vmatprep.subr.mxu0 0.0
  %2227 = vmatpush1.msra.mxu0 0.0
  %2228 = vmatprep.subr.mxu0 0.0
  %2229 = vmatpush1.msra.mxu0 0.0
  %2230 = vmatprep.subr.mxu0 0.0
  %2231 = vmatpush1.msra.mxu0 0.0
  %2232 = vmatprep.subr.mxu0 0.0
  %2233 = vmatpush1.msra.mxu0 0.0
  %2234 = vmatprep.subr.mxu0 0.0
  %2235 = vmatpush1.msra.mxu0 0.0
  %2236 = vmatprep.subr.mxu0 0.0
  %2237 = vmatpush1.msra.mxu0 0.0
  %2238 = vmatprep.subr.mxu0 0.0
  %2239 = vmatpush1.msra.mxu0 0.0
  %2240 = vmatprep.subr.mxu0 0.0
  %2241 = vmatpush1.msra.mxu0 0.0
  %2242 = vmatprep.subr.mxu0 0.0
  %2243 = vmatpush1.msra.mxu0 0.0
  %2244 = vmatprep.subr.mxu0 0.0
  %2245 = vmatpush1.msra.mxu0 0.0
  %2246 = vmatprep.subr.mxu0 0.0
  %2247 = vmatpush1.msra.mxu0 0.0
  %2248 = vmatprep.subr.mxu0 0.0
  %2249 = vmatpush1.msra.mxu0 0.0
  %2250 = vmatprep.mubr.f32.mxu0 0.0
  %2251 = vmatmul.mubr.f32.gmra.mrb[0].mxu0 %v2184
  %v2252 = vpop.f32.mrb[0].mxu0
  %v2253 = vadd.f32 %v2181, %v2252
  %v2254 = vpop.f32.mrb[0].mxu0
  %2255 = vdwg.mxu0
  %vm2256 = vcmp.ge.f32.partialorder %v2253, 0.0
  %v2257 = vmul.f32 %v2253, 0.01
  %v2258 = vsel %vm2256, %v2253, %v2257
  %v2259 = vld [vmem:[%s14] sm:$0x1]
  %v2261 = vlaneseq
  %v2262 = vshrl.u32 %v2261, 7
  %v2263 = vsub.s32 0, %v2262
  %v2264 = vrot.slane %v2259, %v2263
  %v2266 = vmul.f32 %v2258, %v2264
  %v2267 = vsel %vm77, %v2266, 0.0
  %2268 = vadd.xlane.f32.xlu0 %v2267
  %v2269 = vpop.xlane.xlu0 %2268
  %2271 = vrot.lane.b32.xlu0 %v2266, 112
  %v2272 = vpop.permute.xlu0 %2271
  %v2274 = vsel %vm77, %v2272, 0.0
  %2275 = vadd.xlane.f32.xlu0 %v2274
  %v2276 = vpop.xlane.xlu0 %2275
  %vm2277 = vcmask 7168
  %v2278 = vsel %vm2277, %v2269, %v2276
  %v2279 = vld [vmem:[%s15] sm:$0x1]
  %v2281 = vlaneseq
  %v2282 = vshrl.u32 %v2281, 7
  %v2283 = vsub.s32 0, %v2282
  %v2284 = vrot.slane %v2279, %v2283
  %v2286 = vadd.f32 %v2278, %v2284
  %vm2287 = vcmask 15360
  %2288 = vst.msk [vmem:[%s16] sm:$0xff] %vm2287, %v2286
  // Predicated region
  $region66: #{double_gru_critic_forward.1} parent=0 // pred_check
    _
  $region67: #{double_gru_critic_forward.1} parent=0 // pred_check_branch
    %2290 = sbr.rel (0) target = $region69
  $region68: #{double_gru_critic_forward.1} parent=0 // pred_region
    _
  $region69: #{double_gru_critic_forward.1} parent=0 // pred_fallthru
    _
  // Predicated region
  $region70: #{double_gru_critic_forward.1} parent=0 // pred_check
    _
  $region71: #{double_gru_critic_forward.1} parent=0 // pred_check_branch
    %2292 = sbr.rel (0) target = $region73
  $region72: #{double_gru_critic_forward.1} parent=0 // pred_region
    _
  $region73: #{double_gru_critic_forward.1} parent=0 // pred_fallthru
    _

</llo_original>
